<compile_context>
chip_gen: v5e
topology: v5e:2x2
jax: 0.10.0
libtpu: 0.0.40
codegen_flags: <defaults>
</compile_context>

<pallas_src>
import functools

import jax
import jax.numpy as jnp
from jax import lax
from jax.experimental import pallas as pl
from jax.experimental.pallas import tpu as pltpu

# (kernel, stride, padding) for conv0..conv4 of CPCEncoder
CONV_CFG = ((10, 5, 3), (8, 4, 2), (4, 2, 1), (4, 2, 1), (4, 2, 1))
EPS = 1e-5  # ChannelNorm epsilon


def _out_len(L, k, s, p):
    return (L + 2 * p - k) // s + 1


def _channel_norm_relu(y, gamma, beta):
    """ChannelNorm (mean/unbiased-var over channels, per time step) + affine + ReLU.

    y: (T, H) with channels on the lane axis; gamma/beta: (1, H).
    """
    H = y.shape[-1]
    mean = jnp.mean(y, axis=-1, keepdims=True)
    d = y - mean
    var = jnp.sum(d * d, axis=-1, keepdims=True) * (1.0 / (H - 1))  # torch.var unbiased
    y = d * lax.rsqrt(var + EPS)
    return jnp.maximum(y * gamma + beta, 0.0)


def cpc_encoder_kernel(frames_ref, w0_ref, w1_ref, w2_ref, w3_ref, w4_ref,
                       cb_ref, gam_ref, bet_ref, o_ref,
                       a0_ref, a1_ref, a2_ref, a3_ref, *, lens):
    # frames_ref : (L0+1, 5)   padded waveform viewed as 5-sample frames
    # w0_ref     : (10, H)     conv0 weight (tap-major)
    # w1..w4_ref : (K, H, H)   conv weights, (tap, in, out)
    # cb_ref     : (5, H)      conv biases (one row per layer)
    # gam/bet    : (5, H)      ChannelNorm affine params (one row per layer)
    # o_ref      : (L4, H)
    # a0..a3_ref : VMEM scratch holding zero-padded activations of layers 0..3
    L0, L1, L2, L3, L4 = lens
    H = o_ref.shape[-1]

    def store_padded(a_ref, y, pad, L):
        # zero halo rows + activation body; scratch has L + 2*pad rows
        a_ref[0:pad, :] = jnp.zeros((pad, H), jnp.float32)
        a_ref[pad:pad + L, :] = y
        a_ref[pad + L:pad + L + pad, :] = jnp.zeros((pad, H), jnp.float32)

    def conv_norm_relu(a_ref, w_ref, layer, K, S, L_out):
        # stride-S conv as K shifted strided matmuls, accumulated in f32
        acc = jnp.zeros((L_out, H), jnp.float32)
        for k in range(K):                                  # static unroll
            xk = a_ref[pl.ds(k, L_out, stride=S), :]        # (L_out, H)
            acc = acc + jnp.dot(xk, w_ref[k],
                                preferred_element_type=jnp.float32)
        acc = acc + cb_ref[layer:layer + 1, :]
        return _channel_norm_relu(acc, gam_ref[layer:layer + 1, :],
                                  bet_ref[layer:layer + 1, :])

    # ---- conv0: Conv1d(1, H, 10, stride=5, pad=3) on 5-sample frames ---------
    # y0[t] = frames[t] @ w0[0:5] + frames[t+1] @ w0[5:10] + b0
    w0 = w0_ref[...]
    y = (jnp.dot(frames_ref[0:L0, :], w0[0:5, :],
                 preferred_element_type=jnp.float32)
         + jnp.dot(frames_ref[1:L0 + 1, :], w0[5:10, :],
                   preferred_element_type=jnp.float32)
         + cb_ref[0:1, :])
    y = _channel_norm_relu(y, gam_ref[0:1, :], bet_ref[0:1, :])

    # ---- conv1 .. conv4 -------------------------------------------------------
    store_padded(a0_ref, y, CONV_CFG[1][2], L0)
    y = conv_norm_relu(a0_ref, w1_ref, 1, CONV_CFG[1][0], CONV_CFG[1][1], L1)
    store_padded(a1_ref, y, CONV_CFG[2][2], L1)
    y = conv_norm_relu(a1_ref, w2_ref, 2, CONV_CFG[2][0], CONV_CFG[2][1], L2)
    store_padded(a2_ref, y, CONV_CFG[3][2], L2)
    y = conv_norm_relu(a2_ref, w3_ref, 3, CONV_CFG[3][0], CONV_CFG[3][1], L3)
    store_padded(a3_ref, y, CONV_CFG[4][2], L3)
    y = conv_norm_relu(a3_ref, w4_ref, 4, CONV_CFG[4][0], CONV_CFG[4][1], L4)

    o_ref[...] = y.astype(o_ref.dtype)


def cpc_encoder_forward(x, params):
    """x: (N, 1, L) -> (N, sizeHidden, L_out); matches CPCEncoder.forward
    with normMode='layerNorm' (ChannelNorm, affine)."""
    N, C, L = x.shape
    assert C == 1
    H = params["conv0"][0].shape[0]

    lens = []
    Lc = L
    for (k, s, p) in CONV_CFG:
        Lc = _out_len(Lc, k, s, p)
        lens.append(Lc)
    L0, L1, L2, L3, L4 = lens

    # conv0 input: pad by 3 each side and view as non-overlapping 5-sample
    # frames (pure reshape of the raw waveform -- no im2col duplication).
    F0 = L0 + 1
    xp = jnp.pad(x[:, 0, :].astype(jnp.float32), ((0, 0), (3, 3)))
    frames = xp[:, :5 * F0].reshape(N, F0, 5)

    # conv weights: PyTorch (out, in, K) -> tap-major (K, in, out)
    w0 = jnp.transpose(params["conv0"][0][:, 0, :]).astype(jnp.float32)  # (10, H)

    def kwt(w):
        return jnp.transpose(w, (2, 1, 0)).astype(jnp.float32)

    w1, w2, w3, w4 = [kwt(params[f"conv{i}"][0]) for i in range(1, 5)]
    cbias = jnp.stack([params[f"conv{i}"][1] for i in range(5)]).astype(jnp.float32)
    gammas = jnp.stack([params[f"norm{i}"][0] for i in range(5)]).astype(jnp.float32)
    betas = jnp.stack([params[f"norm{i}"][1] for i in range(5)]).astype(jnp.float32)

    kernel = functools.partial(cpc_encoder_kernel, lens=tuple(lens))

    pads = [CONV_CFG[i][2] for i in range(1, 5)]
    scratch = [pltpu.VMEM((lens[i] + 2 * pads[i], H), jnp.float32)
               for i in range(4)]

    out = pl.pallas_call(
        kernel,
        out_shape=jax.ShapeDtypeStruct((N, L4, H), jnp.float32),
        grid_spec=pltpu.PrefetchScalarGridSpec(
            num_scalar_prefetch=0,
            grid=(N,),
            in_specs=[
                pl.BlockSpec((None, F0, 5), lambda n: (n, 0, 0)),   # waveform frames
                pl.BlockSpec((10, H), lambda n: (0, 0)),            # conv0 weight
                pl.BlockSpec((8, H, H), lambda n: (0, 0, 0)),       # conv1 weight
                pl.BlockSpec((4, H, H), lambda n: (0, 0, 0)),       # conv2 weight
                pl.BlockSpec((4, H, H), lambda n: (0, 0, 0)),       # conv3 weight
                pl.BlockSpec((4, H, H), lambda n: (0, 0, 0)),       # conv4 weight
                pl.BlockSpec((5, H), lambda n: (0, 0)),             # conv biases
                pl.BlockSpec((5, H), lambda n: (0, 0)),             # norm gammas
                pl.BlockSpec((5, H), lambda n: (0, 0)),             # norm betas
            ],
            out_specs=pl.BlockSpec((None, L4, H), lambda n: (n, 0, 0)),
            scratch_shapes=scratch,
        ),
        compiler_params=pltpu.CompilerParams(
            dimension_semantics=("parallel",)),
    )(frames, w0, w1, w2, w3, w4, cbias, gammas, betas)

    # back to PyTorch layout (N, C, T)
    return jnp.transpose(out, (0, 2, 1))


def reference(x, params):
    """Pure-JAX reference mirroring the PyTorch CPCEncoder forward."""
    y = x.astype(jnp.float32)
    for i, (k, s, p) in enumerate(CONV_CFG):
        w, b = params[f"conv{i}"]
        y = lax.conv_general_dilated(
            y, w.astype(jnp.float32), window_strides=(s,), padding=[(p, p)],
            dimension_numbers=("NCH", "OIH", "NCH"))
        y = y + b.astype(jnp.float32)[None, :, None]
        g, bt = params[f"norm{i}"]
        mean = jnp.mean(y, axis=1, keepdims=True)
        var = jnp.sum((y - mean) ** 2, axis=1, keepdims=True) / (y.shape[1] - 1)
        y = (y - mean) / jnp.sqrt(var + EPS)
        y = y * g[None, :, None] + bt[None, :, None]
        y = jnp.maximum(y, 0.0)
    return y


if __name__ == "__main__":
    # Small but layout-friendly shapes: sizeHidden=128 (module default 512),
    # L=1600 raw samples -> 10 encoded frames (DOWNSAMPLING=160).
    N, L, H = 2, 1600, 128

    key = jax.random.PRNGKey(0)
    params = {}
    for i, (k, s, p) in enumerate(CONV_CFG):
        cin = 1 if i == 0 else H
        key, kw, kb, kg, kbt = jax.random.split(key, 5)
        bound = 1.0 / (cin * k) ** 0.5          # PyTorch Conv1d default init scale
        params[f"conv{i}"] = (
            jax.random.uniform(kw, (H, cin, k), jnp.float32, -bound, bound),
            jax.random.uniform(kb, (H,), jnp.float32, -bound, bound))
        params[f"norm{i}"] = (
            1.0 + 0.1 * jax.random.normal(kg, (H,), jnp.float32),
            0.1 * jax.random.normal(kbt, (H,), jnp.float32))

    key, kx = jax.random.split(key)
    x = jax.random.normal(kx, (N, 1, L), jnp.float32)

    out = jax.block_until_ready(cpc_encoder_forward(x, params))
    ref = reference(x, params)
    assert out.shape == ref.shape, (out.shape, ref.shape)

    err = float(jnp.max(jnp.abs(out - ref)))
    if err < 2e-3:
        print("KERNEL_OK")
    else:
        print(f"MISMATCH max_abs_err={err}")
</pallas_src>

<mosaic_0001>
module attributes {stable_mosaic.version = 11 : i64} {
  func.func @cpc_encoder_kernel(%arg0: i32, %arg1: memref<1x321x5xf32, #tpu.memory_space<vmem>>, %arg2: memref<10x128xf32, #tpu.memory_space<vmem>>, %arg3: memref<8x128x128xf32, #tpu.memory_space<vmem>>, %arg4: memref<4x128x128xf32, #tpu.memory_space<vmem>>, %arg5: memref<4x128x128xf32, #tpu.memory_space<vmem>>, %arg6: memref<4x128x128xf32, #tpu.memory_space<vmem>>, %arg7: memref<5x128xf32, #tpu.memory_space<vmem>>, %arg8: memref<5x128xf32, #tpu.memory_space<vmem>>, %arg9: memref<5x128xf32, #tpu.memory_space<vmem>>, %arg10: memref<1x10x128xf32, #tpu.memory_space<vmem>>, %arg11: memref<324x128xf32, #tpu.memory_space<vmem>>, %arg12: memref<82x128xf32, #tpu.memory_space<vmem>>, %arg13: memref<42x128xf32, #tpu.memory_space<vmem>>, %arg14: memref<22x128xf32, #tpu.memory_space<vmem>>) attributes {dimension_semantics = [#tpu.dimension_semantics<parallel>], iteration_bounds = array<i64: 2>, scalar_prefetch = 0 : i64, scratch_operands = 4 : i64, tpu.core_type = #tpu.core_type<tc>, window_params = [{transform_indices = @transform_0, window_bounds = array<i64: 1, 321, 5>}, {pipeline_mode = #tpu.pipeline_mode<synchronous>, transform_indices = @transform_1, window_bounds = array<i64: 10, 128>}, {pipeline_mode = #tpu.pipeline_mode<synchronous>, transform_indices = @transform_2, window_bounds = array<i64: 8, 128, 128>}, {pipeline_mode = #tpu.pipeline_mode<synchronous>, transform_indices = @transform_3, window_bounds = array<i64: 4, 128, 128>}, {pipeline_mode = #tpu.pipeline_mode<synchronous>, transform_indices = @transform_4, window_bounds = array<i64: 4, 128, 128>}, {pipeline_mode = #tpu.pipeline_mode<synchronous>, transform_indices = @transform_5, window_bounds = array<i64: 4, 128, 128>}, {pipeline_mode = #tpu.pipeline_mode<synchronous>, transform_indices = @transform_6, window_bounds = array<i64: 5, 128>}, {pipeline_mode = #tpu.pipeline_mode<synchronous>, transform_indices = @transform_7, window_bounds = array<i64: 5, 128>}, {pipeline_mode = #tpu.pipeline_mode<synchronous>, transform_indices = @transform_8, window_bounds = array<i64: 5, 128>}, {transform_indices = @transform_9, window_bounds = array<i64: 1, 10, 128>}]} {
    %c0 = arith.constant 0 : index
    %c0_0 = arith.constant 0 : index
    %0 = vector.load %arg2[%c0, %c0_0] : memref<10x128xf32, #tpu.memory_space<vmem>>, vector<10x128xf32>
    %c0_1 = arith.constant 0 : index
    %c0_2 = arith.constant 0 : index
    %c0_3 = arith.constant 0 : index
    %1 = vector.load %arg1[%c0_1, %c0_2, %c0_3] : memref<1x321x5xf32, #tpu.memory_space<vmem>>, vector<1x320x5xf32>
    %2 = vector.shape_cast %1 : vector<1x320x5xf32> to vector<320x5xf32>
    %3 = vector.extract_strided_slice %0 {offsets = [0, 0], sizes = [5, 128], strides = [1, 1]} : vector<10x128xf32> to vector<5x128xf32>
    %cst = arith.constant dense<0.000000e+00> : vector<320x128xf32>
    %4 = tpu.matmul %2, %3, %cst {dimension_numbers = #tpu.dot_dimension_numbers<[1], [0], [0], [1], [0, 0, 1, 1], [], []>} : vector<320x5xf32>, vector<5x128xf32>, vector<320x128xf32> -> vector<320x128xf32>
    %c0_4 = arith.constant 0 : index
    %c1 = arith.constant 1 : index
    %c0_5 = arith.constant 0 : index
    %5 = vector.load %arg1[%c0_4, %c1, %c0_5] : memref<1x321x5xf32, #tpu.memory_space<vmem>>, vector<1x320x5xf32>
    %6 = vector.shape_cast %5 : vector<1x320x5xf32> to vector<320x5xf32>
    %7 = vector.extract_strided_slice %0 {offsets = [5, 0], sizes = [5, 128], strides = [1, 1]} : vector<10x128xf32> to vector<5x128xf32>
    %cst_6 = arith.constant dense<0.000000e+00> : vector<320x128xf32>
    %8 = tpu.matmul %6, %7, %cst_6 {dimension_numbers = #tpu.dot_dimension_numbers<[1], [0], [0], [1], [0, 0, 1, 1], [], []>} : vector<320x5xf32>, vector<5x128xf32>, vector<320x128xf32> -> vector<320x128xf32>
    %9 = arith.addf %4, %8 : vector<320x128xf32>
    %c0_7 = arith.constant 0 : index
    %c0_8 = arith.constant 0 : index
    %10 = vector.load %arg7[%c0_7, %c0_8] : memref<5x128xf32, #tpu.memory_space<vmem>>, vector<1x128xf32>
    %11 = vector.broadcast %10 : vector<1x128xf32> to vector<320x128xf32>
    %12 = arith.addf %9, %11 : vector<320x128xf32>
    %c0_9 = arith.constant 0 : index
    %c0_10 = arith.constant 0 : index
    %13 = vector.load %arg8[%c0_9, %c0_10] : memref<5x128xf32, #tpu.memory_space<vmem>>, vector<1x128xf32>
    %c0_11 = arith.constant 0 : index
    %c0_12 = arith.constant 0 : index
    %14 = vector.load %arg9[%c0_11, %c0_12] : memref<5x128xf32, #tpu.memory_space<vmem>>, vector<1x128xf32>
    %cst_13 = arith.constant dense<0.000000e+00> : vector<320xf32>
    %15 = vector.multi_reduction <add>, %12, %cst_13 [1] : vector<320x128xf32> to vector<320xf32>
    %16 = vector.shape_cast %15 : vector<320xf32> to vector<320x1xf32>
    %cst_14 = arith.constant 1.280000e+02 : f32
    %17 = vector.broadcast %cst_14 : f32 to vector<320x1xf32>
    %18 = arith.divf %16, %17 : vector<320x1xf32>
    %19 = vector.broadcast %18 : vector<320x1xf32> to vector<320x128xf32>
    %20 = arith.subf %12, %19 : vector<320x128xf32>
    %21 = arith.mulf %20, %20 : vector<320x128xf32>
    %cst_15 = arith.constant dense<0.000000e+00> : vector<320xf32>
    %22 = vector.multi_reduction <add>, %21, %cst_15 [1] : vector<320x128xf32> to vector<320xf32>
    %23 = vector.shape_cast %22 : vector<320xf32> to vector<320x1xf32>
    %cst_16 = arith.constant 0.00787401571 : f32
    %24 = vector.broadcast %cst_16 : f32 to vector<320x1xf32>
    %25 = arith.mulf %23, %24 : vector<320x1xf32>
    %cst_17 = arith.constant 9.99999974E-6 : f32
    %26 = vector.broadcast %cst_17 : f32 to vector<320x1xf32>
    %27 = arith.addf %25, %26 : vector<320x1xf32>
    %28 = math.rsqrt %27 : vector<320x1xf32>
    %29 = vector.broadcast %28 : vector<320x1xf32> to vector<320x128xf32>
    %30 = arith.mulf %20, %29 : vector<320x128xf32>
    %31 = vector.broadcast %13 : vector<1x128xf32> to vector<320x128xf32>
    %32 = arith.mulf %30, %31 : vector<320x128xf32>
    %33 = vector.broadcast %14 : vector<1x128xf32> to vector<320x128xf32>
    %34 = arith.addf %32, %33 : vector<320x128xf32>
    %cst_18 = arith.constant 0.000000e+00 : f32
    %35 = vector.broadcast %cst_18 : f32 to vector<320x128xf32>
    %36 = arith.maximumf %34, %35 : vector<320x128xf32>
    %cst_19 = arith.constant 0.000000e+00 : f32
    %37 = vector.broadcast %cst_19 : f32 to vector<2x128xf32>
    %c0_20 = arith.constant 0 : index
    %c0_21 = arith.constant 0 : index
    %38 = vector.load %arg11[%c0_20, %c0_21] : memref<324x128xf32, #tpu.memory_space<vmem>>, vector<2x128xf32>
    tpu.vector_store %arg11[%c0_20, %c0_21], %37 {strides = array<i32>} : memref<324x128xf32, #tpu.memory_space<vmem>>, vector<2x128xf32>,
    %c2 = arith.constant 2 : index
    %c0_22 = arith.constant 0 : index
    %39 = vector.load %arg11[%c2, %c0_22] : memref<324x128xf32, #tpu.memory_space<vmem>>, vector<320x128xf32>
    tpu.vector_store %arg11[%c2, %c0_22], %36 {strides = array<i32>} : memref<324x128xf32, #tpu.memory_space<vmem>>, vector<320x128xf32>,
    %cst_23 = arith.constant 0.000000e+00 : f32
    %40 = vector.broadcast %cst_23 : f32 to vector<2x128xf32>
    %c322 = arith.constant 322 : index
    %c0_24 = arith.constant 0 : index
    %41 = vector.load %arg11[%c322, %c0_24] : memref<324x128xf32, #tpu.memory_space<vmem>>, vector<2x128xf32>
    tpu.vector_store %arg11[%c322, %c0_24], %40 {strides = array<i32>} : memref<324x128xf32, #tpu.memory_space<vmem>>, vector<2x128xf32>,
    %cst_25 = arith.constant 0.000000e+00 : f32
    %42 = vector.broadcast %cst_25 : f32 to vector<80x128xf32>
    %c0_26 = arith.constant 0 : index
    %c0_27 = arith.constant 0 : index
    %43 = tpu.strided_load %arg11[%c0_26, %c0_27] {strides = array<i32: 4, 1>} : memref<324x128xf32, #tpu.memory_space<vmem>>, vector<80x128xf32>
    %c0_28 = arith.constant 0 : index
    %c0_29 = arith.constant 0 : index
    %c0_30 = arith.constant 0 : index
    %44 = vector.load %arg3[%c0_28, %c0_29, %c0_30] : memref<8x128x128xf32, #tpu.memory_space<vmem>>, vector<1x128x128xf32>
    %45 = vector.shape_cast %44 : vector<1x128x128xf32> to vector<128x128xf32>
    %cst_31 = arith.constant dense<0.000000e+00> : vector<80x128xf32>
    %46 = tpu.matmul %43, %45, %cst_31 {dimension_numbers = #tpu.dot_dimension_numbers<[1], [0], [0], [1], [0, 0, 1, 1], [], []>} : vector<80x128xf32>, vector<128x128xf32>, vector<80x128xf32> -> vector<80x128xf32>
    %47 = arith.addf %42, %46 : vector<80x128xf32>
    %c1_32 = arith.constant 1 : index
    %c0_33 = arith.constant 0 : index
    %48 = tpu.strided_load %arg11[%c1_32, %c0_33] {strides = array<i32: 4, 1>} : memref<324x128xf32, #tpu.memory_space<vmem>>, vector<80x128xf32>
    %c1_34 = arith.constant 1 : index
    %c0_35 = arith.constant 0 : index
    %c0_36 = arith.constant 0 : index
    %49 = vector.load %arg3[%c1_34, %c0_35, %c0_36] : memref<8x128x128xf32, #tpu.memory_space<vmem>>, vector<1x128x128xf32>
    %50 = vector.shape_cast %49 : vector<1x128x128xf32> to vector<128x128xf32>
    %cst_37 = arith.constant dense<0.000000e+00> : vector<80x128xf32>
    %51 = tpu.matmul %48, %50, %cst_37 {dimension_numbers = #tpu.dot_dimension_numbers<[1], [0], [0], [1], [0, 0, 1, 1], [], []>} : vector<80x128xf32>, vector<128x128xf32>, vector<80x128xf32> -> vector<80x128xf32>
    %52 = arith.addf %47, %51 : vector<80x128xf32>
    %c2_38 = arith.constant 2 : index
    %c0_39 = arith.constant 0 : index
    %53 = tpu.strided_load %arg11[%c2_38, %c0_39] {strides = array<i32: 4, 1>} : memref<324x128xf32, #tpu.memory_space<vmem>>, vector<80x128xf32>
    %c2_40 = arith.constant 2 : index
    %c0_41 = arith.constant 0 : index
    %c0_42 = arith.constant 0 : index
    %54 = vector.load %arg3[%c2_40, %c0_41, %c0_42] : memref<8x128x128xf32, #tpu.memory_space<vmem>>, vector<1x128x128xf32>
    %55 = vector.shape_cast %54 : vector<1x128x128xf32> to vector<128x128xf32>
    %cst_43 = arith.constant dense<0.000000e+00> : vector<80x128xf32>
    %56 = tpu.matmul %53, %55, %cst_43 {dimension_numbers = #tpu.dot_dimension_numbers<[1], [0], [0], [1], [0, 0, 1, 1], [], []>} : vector<80x128xf32>, vector<128x128xf32>, vector<80x128xf32> -> vector<80x128xf32>
    %57 = arith.addf %52, %56 : vector<80x128xf32>
    %c3 = arith.constant 3 : index
    %c0_44 = arith.constant 0 : index
    %58 = tpu.strided_load %arg11[%c3, %c0_44] {strides = array<i32: 4, 1>} : memref<324x128xf32, #tpu.memory_space<vmem>>, vector<80x128xf32>
    %c3_45 = arith.constant 3 : index
    %c0_46 = arith.constant 0 : index
    %c0_47 = arith.constant 0 : index
    %59 = vector.load %arg3[%c3_45, %c0_46, %c0_47] : memref<8x128x128xf32, #tpu.memory_space<vmem>>, vector<1x128x128xf32>
    %60 = vector.shape_cast %59 : vector<1x128x128xf32> to vector<128x128xf32>
    %cst_48 = arith.constant dense<0.000000e+00> : vector<80x128xf32>
    %61 = tpu.matmul %58, %60, %cst_48 {dimension_numbers = #tpu.dot_dimension_numbers<[1], [0], [0], [1], [0, 0, 1, 1], [], []>} : vector<80x128xf32>, vector<128x128xf32>, vector<80x128xf32> -> vector<80x128xf32>
    %62 = arith.addf %57, %61 : vector<80x128xf32>
    %c4 = arith.constant 4 : index
    %c0_49 = arith.constant 0 : index
    %63 = tpu.strided_load %arg11[%c4, %c0_49] {strides = array<i32: 4, 1>} : memref<324x128xf32, #tpu.memory_space<vmem>>, vector<80x128xf32>
    %c4_50 = arith.constant 4 : index
    %c0_51 = arith.constant 0 : index
    %c0_52 = arith.constant 0 : index
    %64 = vector.load %arg3[%c4_50, %c0_51, %c0_52] : memref<8x128x128xf32, #tpu.memory_space<vmem>>, vector<1x128x128xf32>
    %65 = vector.shape_cast %64 : vector<1x128x128xf32> to vector<128x128xf32>
    %cst_53 = arith.constant dense<0.000000e+00> : vector<80x128xf32>
    %66 = tpu.matmul %63, %65, %cst_53 {dimension_numbers = #tpu.dot_dimension_numbers<[1], [0], [0], [1], [0, 0, 1, 1], [], []>} : vector<80x128xf32>, vector<128x128xf32>, vector<80x128xf32> -> vector<80x128xf32>
    %67 = arith.addf %62, %66 : vector<80x128xf32>
    %c5 = arith.constant 5 : index
    %c0_54 = arith.constant 0 : index
    %68 = tpu.strided_load %arg11[%c5, %c0_54] {strides = array<i32: 4, 1>} : memref<324x128xf32, #tpu.memory_space<vmem>>, vector<80x128xf32>
    %c5_55 = arith.constant 5 : index
    %c0_56 = arith.constant 0 : index
    %c0_57 = arith.constant 0 : index
    %69 = vector.load %arg3[%c5_55, %c0_56, %c0_57] : memref<8x128x128xf32, #tpu.memory_space<vmem>>, vector<1x128x128xf32>
    %70 = vector.shape_cast %69 : vector<1x128x128xf32> to vector<128x128xf32>
    %cst_58 = arith.constant dense<0.000000e+00> : vector<80x128xf32>
    %71 = tpu.matmul %68, %70, %cst_58 {dimension_numbers = #tpu.dot_dimension_numbers<[1], [0], [0], [1], [0, 0, 1, 1], [], []>} : vector<80x128xf32>, vector<128x128xf32>, vector<80x128xf32> -> vector<80x128xf32>
    %72 = arith.addf %67, %71 : vector<80x128xf32>
    %c6 = arith.constant 6 : index
    %c0_59 = arith.constant 0 : index
    %73 = tpu.strided_load %arg11[%c6, %c0_59] {strides = array<i32: 4, 1>} : memref<324x128xf32, #tpu.memory_space<vmem>>, vector<80x128xf32>
    %c6_60 = arith.constant 6 : index
    %c0_61 = arith.constant 0 : index
    %c0_62 = arith.constant 0 : index
    %74 = vector.load %arg3[%c6_60, %c0_61, %c0_62] : memref<8x128x128xf32, #tpu.memory_space<vmem>>, vector<1x128x128xf32>
    %75 = vector.shape_cast %74 : vector<1x128x128xf32> to vector<128x128xf32>
    %cst_63 = arith.constant dense<0.000000e+00> : vector<80x128xf32>
    %76 = tpu.matmul %73, %75, %cst_63 {dimension_numbers = #tpu.dot_dimension_numbers<[1], [0], [0], [1], [0, 0, 1, 1], [], []>} : vector<80x128xf32>, vector<128x128xf32>, vector<80x128xf32> -> vector<80x128xf32>
    %77 = arith.addf %72, %76 : vector<80x128xf32>
    %c7 = arith.constant 7 : index
    %c0_64 = arith.constant 0 : index
    %78 = tpu.strided_load %arg11[%c7, %c0_64] {strides = array<i32: 4, 1>} : memref<324x128xf32, #tpu.memory_space<vmem>>, vector<80x128xf32>
    %c7_65 = arith.constant 7 : index
    %c0_66 = arith.constant 0 : index
    %c0_67 = arith.constant 0 : index
    %79 = vector.load %arg3[%c7_65, %c0_66, %c0_67] : memref<8x128x128xf32, #tpu.memory_space<vmem>>, vector<1x128x128xf32>
    %80 = vector.shape_cast %79 : vector<1x128x128xf32> to vector<128x128xf32>
    %cst_68 = arith.constant dense<0.000000e+00> : vector<80x128xf32>
    %81 = tpu.matmul %78, %80, %cst_68 {dimension_numbers = #tpu.dot_dimension_numbers<[1], [0], [0], [1], [0, 0, 1, 1], [], []>} : vector<80x128xf32>, vector<128x128xf32>, vector<80x128xf32> -> vector<80x128xf32>
    %82 = arith.addf %77, %81 : vector<80x128xf32>
    %c1_69 = arith.constant 1 : index
    %c0_70 = arith.constant 0 : index
    %83 = vector.load %arg7[%c1_69, %c0_70] : memref<5x128xf32, #tpu.memory_space<vmem>>, vector<1x128xf32>
    %84 = vector.broadcast %83 : vector<1x128xf32> to vector<80x128xf32>
    %85 = arith.addf %82, %84 : vector<80x128xf32>
    %c1_71 = arith.constant 1 : index
    %c0_72 = arith.constant 0 : index
    %86 = vector.load %arg8[%c1_71, %c0_72] : memref<5x128xf32, #tpu.memory_space<vmem>>, vector<1x128xf32>
    %c1_73 = arith.constant 1 : index
    %c0_74 = arith.constant 0 : index
    %87 = vector.load %arg9[%c1_73, %c0_74] : memref<5x128xf32, #tpu.memory_space<vmem>>, vector<1x128xf32>
    %cst_75 = arith.constant dense<0.000000e+00> : vector<80xf32>
    %88 = vector.multi_reduction <add>, %85, %cst_75 [1] : vector<80x128xf32> to vector<80xf32>
    %89 = vector.shape_cast %88 : vector<80xf32> to vector<80x1xf32>
    %cst_76 = arith.constant 1.280000e+02 : f32
    %90 = vector.broadcast %cst_76 : f32 to vector<80x1xf32>
    %91 = arith.divf %89, %90 : vector<80x1xf32>
    %92 = vector.broadcast %91 : vector<80x1xf32> to vector<80x128xf32>
    %93 = arith.subf %85, %92 : vector<80x128xf32>
    %94 = arith.mulf %93, %93 : vector<80x128xf32>
    %cst_77 = arith.constant dense<0.000000e+00> : vector<80xf32>
    %95 = vector.multi_reduction <add>, %94, %cst_77 [1] : vector<80x128xf32> to vector<80xf32>
    %96 = vector.shape_cast %95 : vector<80xf32> to vector<80x1xf32>
    %cst_78 = arith.constant 0.00787401571 : f32
    %97 = vector.broadcast %cst_78 : f32 to vector<80x1xf32>
    %98 = arith.mulf %96, %97 : vector<80x1xf32>
    %cst_79 = arith.constant 9.99999974E-6 : f32
    %99 = vector.broadcast %cst_79 : f32 to vector<80x1xf32>
    %100 = arith.addf %98, %99 : vector<80x1xf32>
    %101 = math.rsqrt %100 : vector<80x1xf32>
    %102 = vector.broadcast %101 : vector<80x1xf32> to vector<80x128xf32>
    %103 = arith.mulf %93, %102 : vector<80x128xf32>
    %104 = vector.broadcast %86 : vector<1x128xf32> to vector<80x128xf32>
    %105 = arith.mulf %103, %104 : vector<80x128xf32>
    %106 = vector.broadcast %87 : vector<1x128xf32> to vector<80x128xf32>
    %107 = arith.addf %105, %106 : vector<80x128xf32>
    %cst_80 = arith.constant 0.000000e+00 : f32
    %108 = vector.broadcast %cst_80 : f32 to vector<80x128xf32>
    %109 = arith.maximumf %107, %108 : vector<80x128xf32>
    %cst_81 = arith.constant 0.000000e+00 : f32
    %110 = vector.broadcast %cst_81 : f32 to vector<1x128xf32>
    %c0_82 = arith.constant 0 : index
    %c0_83 = arith.constant 0 : index
    %111 = vector.load %arg12[%c0_82, %c0_83] : memref<82x128xf32, #tpu.memory_space<vmem>>, vector<1x128xf32>
    tpu.vector_store %arg12[%c0_82, %c0_83], %110 {strides = array<i32>} : memref<82x128xf32, #tpu.memory_space<vmem>>, vector<1x128xf32>,
    %c1_84 = arith.constant 1 : index
    %c0_85 = arith.constant 0 : index
    %112 = vector.load %arg12[%c1_84, %c0_85] : memref<82x128xf32, #tpu.memory_space<vmem>>, vector<80x128xf32>
    tpu.vector_store %arg12[%c1_84, %c0_85], %109 {strides = array<i32>} : memref<82x128xf32, #tpu.memory_space<vmem>>, vector<80x128xf32>,
    %cst_86 = arith.constant 0.000000e+00 : f32
    %113 = vector.broadcast %cst_86 : f32 to vector<1x128xf32>
    %c81 = arith.constant 81 : index
    %c0_87 = arith.constant 0 : index
    %114 = vector.load %arg12[%c81, %c0_87] : memref<82x128xf32, #tpu.memory_space<vmem>>, vector<1x128xf32>
    tpu.vector_store %arg12[%c81, %c0_87], %113 {strides = array<i32>} : memref<82x128xf32, #tpu.memory_space<vmem>>, vector<1x128xf32>,
    %cst_88 = arith.constant 0.000000e+00 : f32
    %115 = vector.broadcast %cst_88 : f32 to vector<40x128xf32>
    %c0_89 = arith.constant 0 : index
    %c0_90 = arith.constant 0 : index
    %116 = tpu.strided_load %arg12[%c0_89, %c0_90] {strides = array<i32: 2, 1>} : memref<82x128xf32, #tpu.memory_space<vmem>>, vector<40x128xf32>
    %c0_91 = arith.constant 0 : index
    %c0_92 = arith.constant 0 : index
    %c0_93 = arith.constant 0 : index
    %117 = vector.load %arg4[%c0_91, %c0_92, %c0_93] : memref<4x128x128xf32, #tpu.memory_space<vmem>>, vector<1x128x128xf32>
    %118 = vector.shape_cast %117 : vector<1x128x128xf32> to vector<128x128xf32>
    %cst_94 = arith.constant dense<0.000000e+00> : vector<40x128xf32>
    %119 = tpu.matmul %116, %118, %cst_94 {dimension_numbers = #tpu.dot_dimension_numbers<[1], [0], [0], [1], [0, 0, 1, 1], [], []>} : vector<40x128xf32>, vector<128x128xf32>, vector<40x128xf32> -> vector<40x128xf32>
    %120 = arith.addf %115, %119 : vector<40x128xf32>
    %c1_95 = arith.constant 1 : index
    %c0_96 = arith.constant 0 : index
    %121 = tpu.strided_load %arg12[%c1_95, %c0_96] {strides = array<i32: 2, 1>} : memref<82x128xf32, #tpu.memory_space<vmem>>, vector<40x128xf32>
    %c1_97 = arith.constant 1 : index
    %c0_98 = arith.constant 0 : index
    %c0_99 = arith.constant 0 : index
    %122 = vector.load %arg4[%c1_97, %c0_98, %c0_99] : memref<4x128x128xf32, #tpu.memory_space<vmem>>, vector<1x128x128xf32>
    %123 = vector.shape_cast %122 : vector<1x128x128xf32> to vector<128x128xf32>
    %cst_100 = arith.constant dense<0.000000e+00> : vector<40x128xf32>
    %124 = tpu.matmul %121, %123, %cst_100 {dimension_numbers = #tpu.dot_dimension_numbers<[1], [0], [0], [1], [0, 0, 1, 1], [], []>} : vector<40x128xf32>, vector<128x128xf32>, vector<40x128xf32> -> vector<40x128xf32>
    %125 = arith.addf %120, %124 : vector<40x128xf32>
    %c2_101 = arith.constant 2 : index
    %c0_102 = arith.constant 0 : index
    %126 = tpu.strided_load %arg12[%c2_101, %c0_102] {strides = array<i32: 2, 1>} : memref<82x128xf32, #tpu.memory_space<vmem>>, vector<40x128xf32>
    %c2_103 = arith.constant 2 : index
    %c0_104 = arith.constant 0 : index
    %c0_105 = arith.constant 0 : index
    %127 = vector.load %arg4[%c2_103, %c0_104, %c0_105] : memref<4x128x128xf32, #tpu.memory_space<vmem>>, vector<1x128x128xf32>
    %128 = vector.shape_cast %127 : vector<1x128x128xf32> to vector<128x128xf32>
    %cst_106 = arith.constant dense<0.000000e+00> : vector<40x128xf32>
    %129 = tpu.matmul %126, %128, %cst_106 {dimension_numbers = #tpu.dot_dimension_numbers<[1], [0], [0], [1], [0, 0, 1, 1], [], []>} : vector<40x128xf32>, vector<128x128xf32>, vector<40x128xf32> -> vector<40x128xf32>
    %130 = arith.addf %125, %129 : vector<40x128xf32>
    %c3_107 = arith.constant 3 : index
    %c0_108 = arith.constant 0 : index
    %131 = tpu.strided_load %arg12[%c3_107, %c0_108] {strides = array<i32: 2, 1>} : memref<82x128xf32, #tpu.memory_space<vmem>>, vector<40x128xf32>
    %c3_109 = arith.constant 3 : index
    %c0_110 = arith.constant 0 : index
    %c0_111 = arith.constant 0 : index
    %132 = vector.load %arg4[%c3_109, %c0_110, %c0_111] : memref<4x128x128xf32, #tpu.memory_space<vmem>>, vector<1x128x128xf32>
    %133 = vector.shape_cast %132 : vector<1x128x128xf32> to vector<128x128xf32>
    %cst_112 = arith.constant dense<0.000000e+00> : vector<40x128xf32>
    %134 = tpu.matmul %131, %133, %cst_112 {dimension_numbers = #tpu.dot_dimension_numbers<[1], [0], [0], [1], [0, 0, 1, 1], [], []>} : vector<40x128xf32>, vector<128x128xf32>, vector<40x128xf32> -> vector<40x128xf32>
    %135 = arith.addf %130, %134 : vector<40x128xf32>
    %c2_113 = arith.constant 2 : index
    %c0_114 = arith.constant 0 : index
    %136 = vector.load %arg7[%c2_113, %c0_114] : memref<5x128xf32, #tpu.memory_space<vmem>>, vector<1x128xf32>
    %137 = vector.broadcast %136 : vector<1x128xf32> to vector<40x128xf32>
    %138 = arith.addf %135, %137 : vector<40x128xf32>
    %c2_115 = arith.constant 2 : index
    %c0_116 = arith.constant 0 : index
    %139 = vector.load %arg8[%c2_115, %c0_116] : memref<5x128xf32, #tpu.memory_space<vmem>>, vector<1x128xf32>
    %c2_117 = arith.constant 2 : index
    %c0_118 = arith.constant 0 : index
    %140 = vector.load %arg9[%c2_117, %c0_118] : memref<5x128xf32, #tpu.memory_space<vmem>>, vector<1x128xf32>
    %cst_119 = arith.constant dense<0.000000e+00> : vector<40xf32>
    %141 = vector.multi_reduction <add>, %138, %cst_119 [1] : vector<40x128xf32> to vector<40xf32>
    %142 = vector.shape_cast %141 : vector<40xf32> to vector<40x1xf32>
    %cst_120 = arith.constant 1.280000e+02 : f32
    %143 = vector.broadcast %cst_120 : f32 to vector<40x1xf32>
    %144 = arith.divf %142, %143 : vector<40x1xf32>
    %145 = vector.broadcast %144 : vector<40x1xf32> to vector<40x128xf32>
    %146 = arith.subf %138, %145 : vector<40x128xf32>
    %147 = arith.mulf %146, %146 : vector<40x128xf32>
    %cst_121 = arith.constant dense<0.000000e+00> : vector<40xf32>
    %148 = vector.multi_reduction <add>, %147, %cst_121 [1] : vector<40x128xf32> to vector<40xf32>
    %149 = vector.shape_cast %148 : vector<40xf32> to vector<40x1xf32>
    %cst_122 = arith.constant 0.00787401571 : f32
    %150 = vector.broadcast %cst_122 : f32 to vector<40x1xf32>
    %151 = arith.mulf %149, %150 : vector<40x1xf32>
    %cst_123 = arith.constant 9.99999974E-6 : f32
    %152 = vector.broadcast %cst_123 : f32 to vector<40x1xf32>
    %153 = arith.addf %151, %152 : vector<40x1xf32>
    %154 = math.rsqrt %153 : vector<40x1xf32>
    %155 = vector.broadcast %154 : vector<40x1xf32> to vector<40x128xf32>
    %156 = arith.mulf %146, %155 : vector<40x128xf32>
    %157 = vector.broadcast %139 : vector<1x128xf32> to vector<40x128xf32>
    %158 = arith.mulf %156, %157 : vector<40x128xf32>
    %159 = vector.broadcast %140 : vector<1x128xf32> to vector<40x128xf32>
    %160 = arith.addf %158, %159 : vector<40x128xf32>
    %cst_124 = arith.constant 0.000000e+00 : f32
    %161 = vector.broadcast %cst_124 : f32 to vector<40x128xf32>
    %162 = arith.maximumf %160, %161 : vector<40x128xf32>
    %cst_125 = arith.constant 0.000000e+00 : f32
    %163 = vector.broadcast %cst_125 : f32 to vector<1x128xf32>
    %c0_126 = arith.constant 0 : index
    %c0_127 = arith.constant 0 : index
    %164 = vector.load %arg13[%c0_126, %c0_127] : memref<42x128xf32, #tpu.memory_space<vmem>>, vector<1x128xf32>
    tpu.vector_store %arg13[%c0_126, %c0_127], %163 {strides = array<i32>} : memref<42x128xf32, #tpu.memory_space<vmem>>, vector<1x128xf32>,
    %c1_128 = arith.constant 1 : index
    %c0_129 = arith.constant 0 : index
    %165 = vector.load %arg13[%c1_128, %c0_129] : memref<42x128xf32, #tpu.memory_space<vmem>>, vector<40x128xf32>
    tpu.vector_store %arg13[%c1_128, %c0_129], %162 {strides = array<i32>} : memref<42x128xf32, #tpu.memory_space<vmem>>, vector<40x128xf32>,
    %cst_130 = arith.constant 0.000000e+00 : f32
    %166 = vector.broadcast %cst_130 : f32 to vector<1x128xf32>
    %c41 = arith.constant 41 : index
    %c0_131 = arith.constant 0 : index
    %167 = vector.load %arg13[%c41, %c0_131] : memref<42x128xf32, #tpu.memory_space<vmem>>, vector<1x128xf32>
    tpu.vector_store %arg13[%c41, %c0_131], %166 {strides = array<i32>} : memref<42x128xf32, #tpu.memory_space<vmem>>, vector<1x128xf32>,
    %cst_132 = arith.constant 0.000000e+00 : f32
    %168 = vector.broadcast %cst_132 : f32 to vector<20x128xf32>
    %c0_133 = arith.constant 0 : index
    %c0_134 = arith.constant 0 : index
    %169 = tpu.strided_load %arg13[%c0_133, %c0_134] {strides = array<i32: 2, 1>} : memref<42x128xf32, #tpu.memory_space<vmem>>, vector<20x128xf32>
    %c0_135 = arith.constant 0 : index
    %c0_136 = arith.constant 0 : index
    %c0_137 = arith.constant 0 : index
    %170 = vector.load %arg5[%c0_135, %c0_136, %c0_137] : memref<4x128x128xf32, #tpu.memory_space<vmem>>, vector<1x128x128xf32>
    %171 = vector.shape_cast %170 : vector<1x128x128xf32> to vector<128x128xf32>
    %cst_138 = arith.constant dense<0.000000e+00> : vector<20x128xf32>
    %172 = tpu.matmul %169, %171, %cst_138 {dimension_numbers = #tpu.dot_dimension_numbers<[1], [0], [0], [1], [0, 0, 1, 1], [], []>} : vector<20x128xf32>, vector<128x128xf32>, vector<20x128xf32> -> vector<20x128xf32>
    %173 = arith.addf %168, %172 : vector<20x128xf32>
    %c1_139 = arith.constant 1 : index
    %c0_140 = arith.constant 0 : index
    %174 = tpu.strided_load %arg13[%c1_139, %c0_140] {strides = array<i32: 2, 1>} : memref<42x128xf32, #tpu.memory_space<vmem>>, vector<20x128xf32>
    %c1_141 = arith.constant 1 : index
    %c0_142 = arith.constant 0 : index
    %c0_143 = arith.constant 0 : index
    %175 = vector.load %arg5[%c1_141, %c0_142, %c0_143] : memref<4x128x128xf32, #tpu.memory_space<vmem>>, vector<1x128x128xf32>
    %176 = vector.shape_cast %175 : vector<1x128x128xf32> to vector<128x128xf32>
    %cst_144 = arith.constant dense<0.000000e+00> : vector<20x128xf32>
    %177 = tpu.matmul %174, %176, %cst_144 {dimension_numbers = #tpu.dot_dimension_numbers<[1], [0], [0], [1], [0, 0, 1, 1], [], []>} : vector<20x128xf32>, vector<128x128xf32>, vector<20x128xf32> -> vector<20x128xf32>
    %178 = arith.addf %173, %177 : vector<20x128xf32>
    %c2_145 = arith.constant 2 : index
    %c0_146 = arith.constant 0 : index
    %179 = tpu.strided_load %arg13[%c2_145, %c0_146] {strides = array<i32: 2, 1>} : memref<42x128xf32, #tpu.memory_space<vmem>>, vector<20x128xf32>
    %c2_147 = arith.constant 2 : index
    %c0_148 = arith.constant 0 : index
    %c0_149 = arith.constant 0 : index
    %180 = vector.load %arg5[%c2_147, %c0_148, %c0_149] : memref<4x128x128xf32, #tpu.memory_space<vmem>>, vector<1x128x128xf32>
    %181 = vector.shape_cast %180 : vector<1x128x128xf32> to vector<128x128xf32>
    %cst_150 = arith.constant dense<0.000000e+00> : vector<20x128xf32>
    %182 = tpu.matmul %179, %181, %cst_150 {dimension_numbers = #tpu.dot_dimension_numbers<[1], [0], [0], [1], [0, 0, 1, 1], [], []>} : vector<20x128xf32>, vector<128x128xf32>, vector<20x128xf32> -> vector<20x128xf32>
    %183 = arith.addf %178, %182 : vector<20x128xf32>
    %c3_151 = arith.constant 3 : index
    %c0_152 = arith.constant 0 : index
    %184 = tpu.strided_load %arg13[%c3_151, %c0_152] {strides = array<i32: 2, 1>} : memref<42x128xf32, #tpu.memory_space<vmem>>, vector<20x128xf32>
    %c3_153 = arith.constant 3 : index
    %c0_154 = arith.constant 0 : index
    %c0_155 = arith.constant 0 : index
    %185 = vector.load %arg5[%c3_153, %c0_154, %c0_155] : memref<4x128x128xf32, #tpu.memory_space<vmem>>, vector<1x128x128xf32>
    %186 = vector.shape_cast %185 : vector<1x128x128xf32> to vector<128x128xf32>
    %cst_156 = arith.constant dense<0.000000e+00> : vector<20x128xf32>
    %187 = tpu.matmul %184, %186, %cst_156 {dimension_numbers = #tpu.dot_dimension_numbers<[1], [0], [0], [1], [0, 0, 1, 1], [], []>} : vector<20x128xf32>, vector<128x128xf32>, vector<20x128xf32> -> vector<20x128xf32>
    %188 = arith.addf %183, %187 : vector<20x128xf32>
    %c3_157 = arith.constant 3 : index
    %c0_158 = arith.constant 0 : index
    %189 = vector.load %arg7[%c3_157, %c0_158] : memref<5x128xf32, #tpu.memory_space<vmem>>, vector<1x128xf32>
    %190 = vector.broadcast %189 : vector<1x128xf32> to vector<20x128xf32>
    %191 = arith.addf %188, %190 : vector<20x128xf32>
    %c3_159 = arith.constant 3 : index
    %c0_160 = arith.constant 0 : index
    %192 = vector.load %arg8[%c3_159, %c0_160] : memref<5x128xf32, #tpu.memory_space<vmem>>, vector<1x128xf32>
    %c3_161 = arith.constant 3 : index
    %c0_162 = arith.constant 0 : index
    %193 = vector.load %arg9[%c3_161, %c0_162] : memref<5x128xf32, #tpu.memory_space<vmem>>, vector<1x128xf32>
    %cst_163 = arith.constant dense<0.000000e+00> : vector<20xf32>
    %194 = vector.multi_reduction <add>, %191, %cst_163 [1] : vector<20x128xf32> to vector<20xf32>
    %195 = vector.shape_cast %194 : vector<20xf32> to vector<20x1xf32>
    %cst_164 = arith.constant 1.280000e+02 : f32
    %196 = vector.broadcast %cst_164 : f32 to vector<20x1xf32>
    %197 = arith.divf %195, %196 : vector<20x1xf32>
    %198 = vector.broadcast %197 : vector<20x1xf32> to vector<20x128xf32>
    %199 = arith.subf %191, %198 : vector<20x128xf32>
    %200 = arith.mulf %199, %199 : vector<20x128xf32>
    %cst_165 = arith.constant dense<0.000000e+00> : vector<20xf32>
    %201 = vector.multi_reduction <add>, %200, %cst_165 [1] : vector<20x128xf32> to vector<20xf32>
    %202 = vector.shape_cast %201 : vector<20xf32> to vector<20x1xf32>
    %cst_166 = arith.constant 0.00787401571 : f32
    %203 = vector.broadcast %cst_166 : f32 to vector<20x1xf32>
    %204 = arith.mulf %202, %203 : vector<20x1xf32>
    %cst_167 = arith.constant 9.99999974E-6 : f32
    %205 = vector.broadcast %cst_167 : f32 to vector<20x1xf32>
    %206 = arith.addf %204, %205 : vector<20x1xf32>
    %207 = math.rsqrt %206 : vector<20x1xf32>
    %208 = vector.broadcast %207 : vector<20x1xf32> to vector<20x128xf32>
    %209 = arith.mulf %199, %208 : vector<20x128xf32>
    %210 = vector.broadcast %192 : vector<1x128xf32> to vector<20x128xf32>
    %211 = arith.mulf %209, %210 : vector<20x128xf32>
    %212 = vector.broadcast %193 : vector<1x128xf32> to vector<20x128xf32>
    %213 = arith.addf %211, %212 : vector<20x128xf32>
    %cst_168 = arith.constant 0.000000e+00 : f32
    %214 = vector.broadcast %cst_168 : f32 to vector<20x128xf32>
    %215 = arith.maximumf %213, %214 : vector<20x128xf32>
    %cst_169 = arith.constant 0.000000e+00 : f32
    %216 = vector.broadcast %cst_169 : f32 to vector<1x128xf32>
    %c0_170 = arith.constant 0 : index
    %c0_171 = arith.constant 0 : index
    %217 = vector.load %arg14[%c0_170, %c0_171] : memref<22x128xf32, #tpu.memory_space<vmem>>, vector<1x128xf32>
    tpu.vector_store %arg14[%c0_170, %c0_171], %216 {strides = array<i32>} : memref<22x128xf32, #tpu.memory_space<vmem>>, vector<1x128xf32>,
    %c1_172 = arith.constant 1 : index
    %c0_173 = arith.constant 0 : index
    %218 = vector.load %arg14[%c1_172, %c0_173] : memref<22x128xf32, #tpu.memory_space<vmem>>, vector<20x128xf32>
    tpu.vector_store %arg14[%c1_172, %c0_173], %215 {strides = array<i32>} : memref<22x128xf32, #tpu.memory_space<vmem>>, vector<20x128xf32>,
    %cst_174 = arith.constant 0.000000e+00 : f32
    %219 = vector.broadcast %cst_174 : f32 to vector<1x128xf32>
    %c21 = arith.constant 21 : index
    %c0_175 = arith.constant 0 : index
    %220 = vector.load %arg14[%c21, %c0_175] : memref<22x128xf32, #tpu.memory_space<vmem>>, vector<1x128xf32>
    tpu.vector_store %arg14[%c21, %c0_175], %219 {strides = array<i32>} : memref<22x128xf32, #tpu.memory_space<vmem>>, vector<1x128xf32>,
    %cst_176 = arith.constant 0.000000e+00 : f32
    %221 = vector.broadcast %cst_176 : f32 to vector<10x128xf32>
    %c0_177 = arith.constant 0 : index
    %c0_178 = arith.constant 0 : index
    %222 = tpu.strided_load %arg14[%c0_177, %c0_178] {strides = array<i32: 2, 1>} : memref<22x128xf32, #tpu.memory_space<vmem>>, vector<10x128xf32>
    %c0_179 = arith.constant 0 : index
    %c0_180 = arith.constant 0 : index
    %c0_181 = arith.constant 0 : index
    %223 = vector.load %arg6[%c0_179, %c0_180, %c0_181] : memref<4x128x128xf32, #tpu.memory_space<vmem>>, vector<1x128x128xf32>
    %224 = vector.shape_cast %223 : vector<1x128x128xf32> to vector<128x128xf32>
    %cst_182 = arith.constant dense<0.000000e+00> : vector<10x128xf32>
    %225 = tpu.matmul %222, %224, %cst_182 {dimension_numbers = #tpu.dot_dimension_numbers<[1], [0], [0], [1], [0, 0, 1, 1], [], []>} : vector<10x128xf32>, vector<128x128xf32>, vector<10x128xf32> -> vector<10x128xf32>
    %226 = arith.addf %221, %225 : vector<10x128xf32>
    %c1_183 = arith.constant 1 : index
    %c0_184 = arith.constant 0 : index
    %227 = tpu.strided_load %arg14[%c1_183, %c0_184] {strides = array<i32: 2, 1>} : memref<22x128xf32, #tpu.memory_space<vmem>>, vector<10x128xf32>
    %c1_185 = arith.constant 1 : index
    %c0_186 = arith.constant 0 : index
    %c0_187 = arith.constant 0 : index
    %228 = vector.load %arg6[%c1_185, %c0_186, %c0_187] : memref<4x128x128xf32, #tpu.memory_space<vmem>>, vector<1x128x128xf32>
    %229 = vector.shape_cast %228 : vector<1x128x128xf32> to vector<128x128xf32>
    %cst_188 = arith.constant dense<0.000000e+00> : vector<10x128xf32>
    %230 = tpu.matmul %227, %229, %cst_188 {dimension_numbers = #tpu.dot_dimension_numbers<[1], [0], [0], [1], [0, 0, 1, 1], [], []>} : vector<10x128xf32>, vector<128x128xf32>, vector<10x128xf32> -> vector<10x128xf32>
    %231 = arith.addf %226, %230 : vector<10x128xf32>
    %c2_189 = arith.constant 2 : index
    %c0_190 = arith.constant 0 : index
    %232 = tpu.strided_load %arg14[%c2_189, %c0_190] {strides = array<i32: 2, 1>} : memref<22x128xf32, #tpu.memory_space<vmem>>, vector<10x128xf32>
    %c2_191 = arith.constant 2 : index
    %c0_192 = arith.constant 0 : index
    %c0_193 = arith.constant 0 : index
    %233 = vector.load %arg6[%c2_191, %c0_192, %c0_193] : memref<4x128x128xf32, #tpu.memory_space<vmem>>, vector<1x128x128xf32>
    %234 = vector.shape_cast %233 : vector<1x128x128xf32> to vector<128x128xf32>
    %cst_194 = arith.constant dense<0.000000e+00> : vector<10x128xf32>
    %235 = tpu.matmul %232, %234, %cst_194 {dimension_numbers = #tpu.dot_dimension_numbers<[1], [0], [0], [1], [0, 0, 1, 1], [], []>} : vector<10x128xf32>, vector<128x128xf32>, vector<10x128xf32> -> vector<10x128xf32>
    %236 = arith.addf %231, %235 : vector<10x128xf32>
    %c3_195 = arith.constant 3 : index
    %c0_196 = arith.constant 0 : index
    %237 = tpu.strided_load %arg14[%c3_195, %c0_196] {strides = array<i32: 2, 1>} : memref<22x128xf32, #tpu.memory_space<vmem>>, vector<10x128xf32>
    %c3_197 = arith.constant 3 : index
    %c0_198 = arith.constant 0 : index
    %c0_199 = arith.constant 0 : index
    %238 = vector.load %arg6[%c3_197, %c0_198, %c0_199] : memref<4x128x128xf32, #tpu.memory_space<vmem>>, vector<1x128x128xf32>
    %239 = vector.shape_cast %238 : vector<1x128x128xf32> to vector<128x128xf32>
    %cst_200 = arith.constant dense<0.000000e+00> : vector<10x128xf32>
    %240 = tpu.matmul %237, %239, %cst_200 {dimension_numbers = #tpu.dot_dimension_numbers<[1], [0], [0], [1], [0, 0, 1, 1], [], []>} : vector<10x128xf32>, vector<128x128xf32>, vector<10x128xf32> -> vector<10x128xf32>
    %241 = arith.addf %236, %240 : vector<10x128xf32>
    %c4_201 = arith.constant 4 : index
    %c0_202 = arith.constant 0 : index
    %242 = vector.load %arg7[%c4_201, %c0_202] : memref<5x128xf32, #tpu.memory_space<vmem>>, vector<1x128xf32>
    %243 = vector.broadcast %242 : vector<1x128xf32> to vector<10x128xf32>
    %244 = arith.addf %241, %243 : vector<10x128xf32>
    %c4_203 = arith.constant 4 : index
    %c0_204 = arith.constant 0 : index
    %245 = vector.load %arg8[%c4_203, %c0_204] : memref<5x128xf32, #tpu.memory_space<vmem>>, vector<1x128xf32>
    %c4_205 = arith.constant 4 : index
    %c0_206 = arith.constant 0 : index
    %246 = vector.load %arg9[%c4_205, %c0_206] : memref<5x128xf32, #tpu.memory_space<vmem>>, vector<1x128xf32>
    %cst_207 = arith.constant dense<0.000000e+00> : vector<10xf32>
    %247 = vector.multi_reduction <add>, %244, %cst_207 [1] : vector<10x128xf32> to vector<10xf32>
    %248 = vector.shape_cast %247 : vector<10xf32> to vector<10x1xf32>
    %cst_208 = arith.constant 1.280000e+02 : f32
    %249 = vector.broadcast %cst_208 : f32 to vector<10x1xf32>
    %250 = arith.divf %248, %249 : vector<10x1xf32>
    %251 = vector.broadcast %250 : vector<10x1xf32> to vector<10x128xf32>
    %252 = arith.subf %244, %251 : vector<10x128xf32>
    %253 = arith.mulf %252, %252 : vector<10x128xf32>
    %cst_209 = arith.constant dense<0.000000e+00> : vector<10xf32>
    %254 = vector.multi_reduction <add>, %253, %cst_209 [1] : vector<10x128xf32> to vector<10xf32>
    %255 = vector.shape_cast %254 : vector<10xf32> to vector<10x1xf32>
    %cst_210 = arith.constant 0.00787401571 : f32
    %256 = vector.broadcast %cst_210 : f32 to vector<10x1xf32>
    %257 = arith.mulf %255, %256 : vector<10x1xf32>
    %cst_211 = arith.constant 9.99999974E-6 : f32
    %258 = vector.broadcast %cst_211 : f32 to vector<10x1xf32>
    %259 = arith.addf %257, %258 : vector<10x1xf32>
    %260 = math.rsqrt %259 : vector<10x1xf32>
    %261 = vector.broadcast %260 : vector<10x1xf32> to vector<10x128xf32>
    %262 = arith.mulf %252, %261 : vector<10x128xf32>
    %263 = vector.broadcast %245 : vector<1x128xf32> to vector<10x128xf32>
    %264 = arith.mulf %262, %263 : vector<10x128xf32>
    %265 = vector.broadcast %246 : vector<1x128xf32> to vector<10x128xf32>
    %266 = arith.addf %264, %265 : vector<10x128xf32>
    %cst_212 = arith.constant 0.000000e+00 : f32
    %267 = vector.broadcast %cst_212 : f32 to vector<10x128xf32>
    %268 = arith.maximumf %266, %267 : vector<10x128xf32>
    %c0_213 = arith.constant 0 : index
    %c0_214 = arith.constant 0 : index
    %c0_215 = arith.constant 0 : index
    %269 = vector.load %arg10[%c0_213, %c0_214, %c0_215] : memref<1x10x128xf32, #tpu.memory_space<vmem>>, vector<1x10x128xf32>
    %270 = vector.shape_cast %269 : vector<1x10x128xf32> to vector<10x128xf32>
    %271 = vector.shape_cast %268 : vector<10x128xf32> to vector<1x10x128xf32>
    tpu.vector_store %arg10[%c0_213, %c0_214, %c0_215], %271 {strides = array<i32>} : memref<1x10x128xf32, #tpu.memory_space<vmem>>, vector<1x10x128xf32>,
    return
  }
  func.func @transform_0(%arg0: i32) -> (i32, i32, i32) {
    %c0_i32 = arith.constant 0 : i32
    %c0_i32_0 = arith.constant 0 : i32
    %c0_i32_1 = arith.constant 0 : i32
    return %arg0, %c0_i32, %c0_i32_0 : i32, i32, i32
  }
  func.func @transform_1(%arg0: i32) -> (i32, i32) {
    %c0_i32 = arith.constant 0 : i32
    %c0_i32_0 = arith.constant 0 : i32
    %c0_i32_1 = arith.constant 0 : i32
    return %c0_i32, %c0_i32_0 : i32, i32
  }
  func.func @transform_2(%arg0: i32) -> (i32, i32, i32) {
    %c0_i32 = arith.constant 0 : i32
    %c0_i32_0 = arith.constant 0 : i32
    %c0_i32_1 = arith.constant 0 : i32
    %c0_i32_2 = arith.constant 0 : i32
    return %c0_i32, %c0_i32_0, %c0_i32_1 : i32, i32, i32
  }
  func.func @transform_3(%arg0: i32) -> (i32, i32, i32) {
    %c0_i32 = arith.constant 0 : i32
    %c0_i32_0 = arith.constant 0 : i32
    %c0_i32_1 = arith.constant 0 : i32
    %c0_i32_2 = arith.constant 0 : i32
    return %c0_i32, %c0_i32_0, %c0_i32_1 : i32, i32, i32
  }
  func.func @transform_4(%arg0: i32) -> (i32, i32, i32) {
    %c0_i32 = arith.constant 0 : i32
    %c0_i32_0 = arith.constant 0 : i32
    %c0_i32_1 = arith.constant 0 : i32
    %c0_i32_2 = arith.constant 0 : i32
    return %c0_i32, %c0_i32_0, %c0_i32_1 : i32, i32, i32
  }
  func.func @transform_5(%arg0: i32) -> (i32, i32, i32) {
    %c0_i32 = arith.constant 0 : i32
    %c0_i32_0 = arith.constant 0 : i32
    %c0_i32_1 = arith.constant 0 : i32
    %c0_i32_2 = arith.constant 0 : i32
    return %c0_i32, %c0_i32_0, %c0_i32_1 : i32, i32, i32
  }
  func.func @transform_6(%arg0: i32) -> (i32, i32) {
    %c0_i32 = arith.constant 0 : i32
    %c0_i32_0 = arith.constant 0 : i32
    %c0_i32_1 = arith.constant 0 : i32
    return %c0_i32, %c0_i32_0 : i32, i32
  }
  func.func @transform_7(%arg0: i32) -> (i32, i32) {
    %c0_i32 = arith.constant 0 : i32
    %c0_i32_0 = arith.constant 0 : i32
    %c0_i32_1 = arith.constant 0 : i32
    return %c0_i32, %c0_i32_0 : i32, i32
  }
  func.func @transform_8(%arg0: i32) -> (i32, i32) {
    %c0_i32 = arith.constant 0 : i32
    %c0_i32_0 = arith.constant 0 : i32
    %c0_i32_1 = arith.constant 0 : i32
    return %c0_i32, %c0_i32_0 : i32, i32
  }
  func.func @transform_9(%arg0: i32) -> (i32, i32, i32) {
    %c0_i32 = arith.constant 0 : i32
    %c0_i32_0 = arith.constant 0 : i32
    %c0_i32_1 = arith.constant 0 : i32
    return %arg0, %c0_i32, %c0_i32_0 : i32, i32, i32
  }
}

</mosaic_0001>

<llo_original>
// kernel: tpu_custom_call.1
$region0: #{tpu_custom_call.1}
  #allocation0 [shape = 'u32[]', space=smem, size = 0x4, offset = 0x4, fixed_abs, tag = 'smem constant byte address 0x4 - core index']
  #allocation1 [shape = 'u32[72,128]{1,0:T(1,128)}', space=vmem, size = 0x9000, scoped, tag = 'internal scratch']
  #allocation2 [shape = 'f32[324,128]{1,0:T(8,128)}', space=vmem, size = 0x29000, scoped, tag = 'scratch operand']
  #allocation3 [shape = 'f32[82,128]{1,0:T(8,128)}', space=vmem, size = 0xb000, scoped, tag = 'scratch operand']
  #allocation4 [shape = 'f32[42,128]{1,0:T(8,128)}', space=vmem, size = 0x6000, scoped, tag = 'scratch operand']
  #allocation5 [shape = 'f32[22,128]{1,0:T(8,128)}', space=vmem, size = 0x3000, scoped, tag = 'scratch operand']
  %s0 = inlined_call_operand.vmem [shape: f32[2,321,5], index: 0, kind: input, shape index: {}]
  %s1 = inlined_call_operand.vmem [shape: f32[10,128], index: 1, kind: input, shape index: {}]
  %s2 = inlined_call_operand.hbm [shape: f32[8,128,128], index: 2, kind: input, shape index: {}]
  %s3 = inlined_call_operand.vmem [shape: f32[4,128,128], index: 3, kind: input, shape index: {}]
  %s4 = inlined_call_operand.hbm [shape: f32[4,128,128], index: 4, kind: input, shape index: {}]
  %s5 = inlined_call_operand.hbm [shape: f32[4,128,128], index: 5, kind: input, shape index: {}]
  %s6 = inlined_call_operand.vmem [shape: f32[5,128], index: 6, kind: input, shape index: {}]
  %s7 = inlined_call_operand.vmem [shape: f32[5,128], index: 7, kind: input, shape index: {}]
  %s8 = inlined_call_operand.vmem [shape: f32[5,128], index: 8, kind: input, shape index: {}]
  %s9 = inlined_call_operand.vmem [shape: f32[2,10,128], index: 9, kind: output, shape index: {}]
  %s10 = sld [smem:[#allocation0]]
  $region81: #{tpu_custom_call.1} parent=0
    _
  %s12 = ssub.s32 1, %s10
  %s13 = scalar_select 0, %s12, %s10
  $region1: #{tpu_custom_call.1} parent=0
    #allocation6 [shape = 'u8[524288]{0}', space=vmem, size = 0x80000, scoped, tag = 'input window, operand 2, single buffered']
    #allocation7 [shape = 's32[2]{0}', space=sflag, size = 0x8, scoped, tag = 'scoped memory for tpu_custom_call.1']
    #allocation8 [shape = 'u8[262144]{0}', space=vmem, size = 0x40000, scoped, tag = 'input window, operand 4, single buffered']
    #allocation9 [shape = 's32[1]{0}', space=sflag, size = 0x4, scoped, tag = 'scoped memory for tpu_custom_call.1']
    #allocation10 [shape = 'u8[262144]{0}', space=vmem, size = 0x40000, scoped, tag = 'input window, operand 5, single buffered']
    %14 = vsyncpa [#allocation7], 0
    %15 = vsyncpa [#allocation9], 0
    loop: start=0, step=1, limit=4
    $region2: #{tpu_custom_call.1} parent=1 // loop_pre_header
      _
    $region3: #{tpu_custom_call.1} parent=1 // loop_header
      %s17 = sphi 0, %s21
      %p18 = scmp.ge.s32.totalorder %s17, 4
      %s27 = sphi 0, %s29
      %s30 = sphi 0, %s27
      %s31 = sphi 0, %s30
      %s47 = sphi 0, %s31
      %s51 = sphi 0, %s51
      %s53 = sphi 0, %s51
      %s54 = sphi 0, %s53
      %s68 = sphi 0, %s54
      %s72 = sphi 0, %s72
      %s74 = sphi 0, %s72
      %s75 = sphi 0, %s74
      %s89 = sphi 0, %s75
      %s93 = sphi 0, %s93
      %s95 = sphi 0, %s93
      %s96 = sphi 0, %s95
      %s110 = sphi 0, %s96
      %s114 = sphi 0, %s114
      %s116 = sphi 0, %s114
      %s117 = sphi 0, %s116
      %s131 = sphi 0, %s117
      %s135 = sphi 0, %s135
      %s137 = sphi 0, %s135
      %s138 = sphi 0, %s137
      %s152 = sphi 0, %s138
      %s156 = sphi 0, %s156
      %s158 = sphi 0, %s156
      %s159 = sphi 0, %s158
      %s173 = sphi 0, %s159
      %s177 = sphi 0, %s177
      %s179 = sphi 0, %s177
      %s180 = sphi 0, %s179
      %s194 = sphi 0, %s180
      %s198 = sphi 0, %s198
      %s200 = sphi 0, %s198
      %s201 = sphi 0, %s200
      %s215 = sphi 0, %s201
      %s221 = sphi 0, %s223
      %s224 = sphi 0, %s221
      %s225 = sphi 0, %s224
      %s241 = sphi 0, %s225
    $region4: #{tpu_custom_call.1} parent=1 // loop_header_branch
      %20 = sbr.rel (%p18) target = $region8
    $region5: #{tpu_custom_call.1} parent=1 // loop_body
      %s22 = ssub.s32 %s17, 1
      %s23 = ssub.s32 %s17, 2
      %s24 = sadd.s32 %s17, 1
      %s25 = ssub.s32 %s17, %s24
      %p26 = scmp.eq.s32.totalorder %s25, 0
      %s28 = sadd.s32 %s27, 1
      %s29 = scalar_select %p26, %s27, %s28
      %p32 = pneg %p26
      %p33 = scmp.eq.s32.totalorder %s17, 1
      %p34 = por %p32, %p33
      %p35 = scmp.ne.s32.totalorder %s27, %s30
      %p36 = scmp.eq.s32.totalorder %s17, 0
      %p37 = por %p35, %p36
      %p38 = scmp.ne.s32.totalorder %s27, %s30
      %p39 = scmp.eq.s32.totalorder %s22, 1
      %p40 = por %p38, %p39
      %p41 = scmp.ne.s32.totalorder %s30, %s31
      %p42 = scmp.eq.s32.totalorder %s22, 0
      %p43 = por %p41, %p42
      %p44 = scmp.ne.s32.totalorder %s30, %s31
      %p45 = scmp.eq.s32.totalorder %s23, 1
      %p46 = por %p44, %p45
      %p48 = scmp.ne.s32.totalorder %s31, %s47
      %p49 = scmp.eq.s32.totalorder %s23, 0
      %p50 = por %p48, %p49
      %s52 = sadd.s32 %s51, 1
      %p55 = scmp.eq.s32.totalorder %s17, 1
      %p56 = scmp.ne.s32.totalorder %s51, %s53
      %p57 = scmp.eq.s32.totalorder %s17, 0
      %p58 = por %p56, %p57
      %p59 = scmp.ne.s32.totalorder %s51, %s53
      %p60 = scmp.eq.s32.totalorder %s22, 1
      %p61 = por %p59, %p60
      %p62 = scmp.ne.s32.totalorder %s53, %s54
      %p63 = scmp.eq.s32.totalorder %s22, 0
      %p64 = por %p62, %p63
      %p65 = scmp.ne.s32.totalorder %s53, %s54
      %p66 = scmp.eq.s32.totalorder %s23, 1
      %p67 = por %p65, %p66
      %p69 = scmp.ne.s32.totalorder %s54, %s68
      %p70 = scmp.eq.s32.totalorder %s23, 0
      %p71 = por %p69, %p70
      %s73 = sadd.s32 %s72, 1
      %p76 = scmp.eq.s32.totalorder %s17, 1
      %p77 = scmp.ne.s32.totalorder %s72, %s74
      %p78 = scmp.eq.s32.totalorder %s17, 0
      %p79 = por %p77, %p78
      %p80 = scmp.ne.s32.totalorder %s72, %s74
      %p81 = scmp.eq.s32.totalorder %s22, 1
      %p82 = por %p80, %p81
      %p83 = scmp.ne.s32.totalorder %s74, %s75
      %p84 = scmp.eq.s32.totalorder %s22, 0
      %p85 = por %p83, %p84
      %p86 = scmp.ne.s32.totalorder %s74, %s75
      %p87 = scmp.eq.s32.totalorder %s23, 1
      %p88 = por %p86, %p87
      %p90 = scmp.ne.s32.totalorder %s75, %s89
      %p91 = scmp.eq.s32.totalorder %s23, 0
      %p92 = por %p90, %p91
      %s94 = sadd.s32 %s93, 1
      %p97 = scmp.eq.s32.totalorder %s17, 1
      %p98 = scmp.ne.s32.totalorder %s93, %s95
      %p99 = scmp.eq.s32.totalorder %s17, 0
      %p100 = por %p98, %p99
      %p101 = scmp.ne.s32.totalorder %s93, %s95
      %p102 = scmp.eq.s32.totalorder %s22, 1
      %p103 = por %p101, %p102
      %p104 = scmp.ne.s32.totalorder %s95, %s96
      %p105 = scmp.eq.s32.totalorder %s22, 0
      %p106 = por %p104, %p105
      %p107 = scmp.ne.s32.totalorder %s95, %s96
      %p108 = scmp.eq.s32.totalorder %s23, 1
      %p109 = por %p107, %p108
      %p111 = scmp.ne.s32.totalorder %s96, %s110
      %p112 = scmp.eq.s32.totalorder %s23, 0
      %p113 = por %p111, %p112
      %s115 = sadd.s32 %s114, 1
      %p118 = scmp.eq.s32.totalorder %s17, 1
      %p119 = scmp.ne.s32.totalorder %s114, %s116
      %p120 = scmp.eq.s32.totalorder %s17, 0
      %p121 = por %p119, %p120
      %p122 = scmp.ne.s32.totalorder %s114, %s116
      %p123 = scmp.eq.s32.totalorder %s22, 1
      %p124 = por %p122, %p123
      %p125 = scmp.ne.s32.totalorder %s116, %s117
      %p126 = scmp.eq.s32.totalorder %s22, 0
      %p127 = por %p125, %p126
      %p128 = scmp.ne.s32.totalorder %s116, %s117
      %p129 = scmp.eq.s32.totalorder %s23, 1
      %p130 = por %p128, %p129
      %p132 = scmp.ne.s32.totalorder %s117, %s131
      %p133 = scmp.eq.s32.totalorder %s23, 0
      %p134 = por %p132, %p133
      %s136 = sadd.s32 %s135, 1
      %p139 = scmp.eq.s32.totalorder %s17, 1
      %p140 = scmp.ne.s32.totalorder %s135, %s137
      %p141 = scmp.eq.s32.totalorder %s17, 0
      %p142 = por %p140, %p141
      %p143 = scmp.ne.s32.totalorder %s135, %s137
      %p144 = scmp.eq.s32.totalorder %s22, 1
      %p145 = por %p143, %p144
      %p146 = scmp.ne.s32.totalorder %s137, %s138
      %p147 = scmp.eq.s32.totalorder %s22, 0
      %p148 = por %p146, %p147
      %p149 = scmp.ne.s32.totalorder %s137, %s138
      %p150 = scmp.eq.s32.totalorder %s23, 1
      %p151 = por %p149, %p150
      %p153 = scmp.ne.s32.totalorder %s138, %s152
      %p154 = scmp.eq.s32.totalorder %s23, 0
      %p155 = por %p153, %p154
      %s157 = sadd.s32 %s156, 1
      %p160 = scmp.eq.s32.totalorder %s17, 1
      %p161 = scmp.ne.s32.totalorder %s156, %s158
      %p162 = scmp.eq.s32.totalorder %s17, 0
      %p163 = por %p161, %p162
      %p164 = scmp.ne.s32.totalorder %s156, %s158
      %p165 = scmp.eq.s32.totalorder %s22, 1
      %p166 = por %p164, %p165
      %p167 = scmp.ne.s32.totalorder %s158, %s159
      %p168 = scmp.eq.s32.totalorder %s22, 0
      %p169 = por %p167, %p168
      %p170 = scmp.ne.s32.totalorder %s158, %s159
      %p171 = scmp.eq.s32.totalorder %s23, 1
      %p172 = por %p170, %p171
      %p174 = scmp.ne.s32.totalorder %s159, %s173
      %p175 = scmp.eq.s32.totalorder %s23, 0
      %p176 = por %p174, %p175
      %s178 = sadd.s32 %s177, 1
      %p181 = scmp.eq.s32.totalorder %s17, 1
      %p182 = scmp.ne.s32.totalorder %s177, %s179
      %p183 = scmp.eq.s32.totalorder %s17, 0
      %p184 = por %p182, %p183
      %p185 = scmp.ne.s32.totalorder %s177, %s179
      %p186 = scmp.eq.s32.totalorder %s22, 1
      %p187 = por %p185, %p186
      %p188 = scmp.ne.s32.totalorder %s179, %s180
      %p189 = scmp.eq.s32.totalorder %s22, 0
      %p190 = por %p188, %p189
      %p191 = scmp.ne.s32.totalorder %s179, %s180
      %p192 = scmp.eq.s32.totalorder %s23, 1
      %p193 = por %p191, %p192
      %p195 = scmp.ne.s32.totalorder %s180, %s194
      %p196 = scmp.eq.s32.totalorder %s23, 0
      %p197 = por %p195, %p196
      %s199 = sadd.s32 %s198, 1
      %p202 = scmp.eq.s32.totalorder %s17, 1
      %p203 = scmp.ne.s32.totalorder %s198, %s200
      %p204 = scmp.eq.s32.totalorder %s17, 0
      %p205 = por %p203, %p204
      %p206 = scmp.ne.s32.totalorder %s198, %s200
      %p207 = scmp.eq.s32.totalorder %s22, 1
      %p208 = por %p206, %p207
      %p209 = scmp.ne.s32.totalorder %s200, %s201
      %p210 = scmp.eq.s32.totalorder %s22, 0
      %p211 = por %p209, %p210
      %p212 = scmp.ne.s32.totalorder %s200, %s201
      %p213 = scmp.eq.s32.totalorder %s23, 1
      %p214 = por %p212, %p213
      %p216 = scmp.ne.s32.totalorder %s201, %s215
      %p217 = scmp.eq.s32.totalorder %s23, 0
      %p218 = por %p216, %p217
      %s219 = ssub.s32 %s17, %s24
      %p220 = scmp.eq.s32.totalorder %s219, 0
      %s222 = sadd.s32 %s221, 1
      %s223 = scalar_select %p220, %s221, %s222
      %p226 = pneg %p220
      %p227 = scmp.eq.s32.totalorder %s17, 1
      %p228 = por %p226, %p227
      %p229 = scmp.ne.s32.totalorder %s221, %s224
      %p230 = scmp.eq.s32.totalorder %s17, 0
      %p231 = por %p229, %p230
      %p232 = scmp.ne.s32.totalorder %s221, %s224
      %p233 = scmp.eq.s32.totalorder %s22, 1
      %p234 = por %p232, %p233
      %p235 = scmp.ne.s32.totalorder %s224, %s225
      %p236 = scmp.eq.s32.totalorder %s22, 0
      %p237 = por %p235, %p236
      %p238 = scmp.ne.s32.totalorder %s224, %s225
      %p239 = scmp.eq.s32.totalorder %s23, 1
      %p240 = por %p238, %p239
      %p242 = scmp.ne.s32.totalorder %s225, %s241
      %p243 = scmp.eq.s32.totalorder %s23, 0
      %p244 = por %p242, %p243
      %p245 = scmp.le.s32.totalorder 1, %s17
      %p246 = scmp.lt.s32.totalorder %s17, 3
      %p247 = pnand %p245, %p246
      %p248 = pneg %p247
      // Predicated region
      $region9: #{tpu_custom_call.1} parent=5 // pred_check
        _
      $region10: #{tpu_custom_call.1} parent=5 // pred_check_branch
        %250 = sbr.rel (%p247) target = $region12
      $region11: #{tpu_custom_call.1} parent=5 // pred_region
        %s251 = ssub.s32 %s17, 1
        // Predicated region
        $region13: #{tpu_custom_call.1} parent=11 // pred_check
          %p252 = pneg %p64
        $region14: #{tpu_custom_call.1} parent=11 // pred_check_branch
          %254 = sbr.rel (%p252) target = $region16
        $region15: #{tpu_custom_call.1} parent=11 // pred_region
          _
        $region16: #{tpu_custom_call.1} parent=11 // pred_fallthru
          _
        // Predicated region
        $region17: #{tpu_custom_call.1} parent=11 // pred_check
          %p255 = pneg %p85
        $region18: #{tpu_custom_call.1} parent=11 // pred_check_branch
          %257 = sbr.rel (%p255) target = $region20
        $region19: #{tpu_custom_call.1} parent=11 // pred_region
          %259 = vsyncadd [#allocation7], 0
          %s260 = sshll.u32 %s2, 4
          %s261 = int_to_ptr.hbm [resolvable:$true] %s260
          %s262 = sshll.u32 [#allocation6], 4
          %s263 = int_to_ptr.vmem [resolvable:$true] %s262
          %268 = dma.hbm_to_vmem [thread:$0]  %s261, 16384, %s263, [#allocation7], 128, 128, 8
        $region20: #{tpu_custom_call.1} parent=11 // pred_fallthru
          _
        // Predicated region
        $region21: #{tpu_custom_call.1} parent=11 // pred_check
          %p269 = pneg %p106
        $region22: #{tpu_custom_call.1} parent=11 // pred_check_branch
          %271 = sbr.rel (%p269) target = $region24
        $region23: #{tpu_custom_call.1} parent=11 // pred_region
          _
        $region24: #{tpu_custom_call.1} parent=11 // pred_fallthru
          _
        // Predicated region
        $region25: #{tpu_custom_call.1} parent=11 // pred_check
          %p272 = pneg %p127
        $region26: #{tpu_custom_call.1} parent=11 // pred_check_branch
          %274 = sbr.rel (%p272) target = $region28
        $region27: #{tpu_custom_call.1} parent=11 // pred_region
          %276 = vsyncadd [#allocation9], 0
          %s277 = sshll.u32 %s4, 4
          %s278 = int_to_ptr.hbm [resolvable:$true] %s277
          %s279 = sshll.u32 [#allocation8], 4
          %s280 = int_to_ptr.vmem [resolvable:$true] %s279
          %285 = dma.hbm_to_vmem [thread:$0]  %s278, 8192, %s280, [#allocation9], 128, 128, 8
        $region28: #{tpu_custom_call.1} parent=11 // pred_fallthru
          _
        // Predicated region
        $region29: #{tpu_custom_call.1} parent=11 // pred_check
          %p286 = pneg %p148
        $region30: #{tpu_custom_call.1} parent=11 // pred_check_branch
          %288 = sbr.rel (%p286) target = $region32
        $region31: #{tpu_custom_call.1} parent=11 // pred_region
          %290 = vsyncadd [#allocation9], 0
          %s291 = sshll.u32 %s5, 4
          %s292 = int_to_ptr.hbm [resolvable:$true] %s291
          %s293 = sshll.u32 [#allocation10], 4
          %s294 = int_to_ptr.vmem [resolvable:$true] %s293
          %299 = dma.hbm_to_vmem [thread:$0]  %s292, 8192, %s294, [#allocation9], 128, 128, 8
        $region32: #{tpu_custom_call.1} parent=11 // pred_fallthru
          _
        // Predicated region
        $region33: #{tpu_custom_call.1} parent=11 // pred_check
          %p300 = pneg %p169
        $region34: #{tpu_custom_call.1} parent=11 // pred_check_branch
          %302 = sbr.rel (%p300) target = $region36
        $region35: #{tpu_custom_call.1} parent=11 // pred_region
          _
        $region36: #{tpu_custom_call.1} parent=11 // pred_fallthru
          _
        // Predicated region
        $region37: #{tpu_custom_call.1} parent=11 // pred_check
          %p303 = pneg %p190
        $region38: #{tpu_custom_call.1} parent=11 // pred_check_branch
          %305 = sbr.rel (%p303) target = $region40
        $region39: #{tpu_custom_call.1} parent=11 // pred_region
          _
        $region40: #{tpu_custom_call.1} parent=11 // pred_fallthru
          _
        // Predicated region
        $region41: #{tpu_custom_call.1} parent=11 // pred_check
          %p306 = pneg %p211
        $region42: #{tpu_custom_call.1} parent=11 // pred_check_branch
          %308 = sbr.rel (%p306) target = $region44
        $region43: #{tpu_custom_call.1} parent=11 // pred_region
          _
        $region44: #{tpu_custom_call.1} parent=11 // pred_fallthru
          _
      $region12: #{tpu_custom_call.1} parent=5 // pred_fallthru
        _
      %p309 = scmp.lt.s32.totalorder %s17, 2
      // Predicated region
      $region45: #{tpu_custom_call.1} parent=5 // pred_check
        %p310 = pneg %p309
      $region46: #{tpu_custom_call.1} parent=5 // pred_check_branch
        %312 = sbr.rel (%p310) target = $region48
      $region47: #{tpu_custom_call.1} parent=5 // pred_region
        // Predicated region
        $region49: #{tpu_custom_call.1} parent=47 // pred_check
          %p313 = pneg %p37
        $region50: #{tpu_custom_call.1} parent=47 // pred_check_branch
          %315 = sbr.rel (%p313) target = $region52
        $region51: #{tpu_custom_call.1} parent=47 // pred_region
          %p316 = scmp.lt.s32.totalorder %s17, 1
          %s317 = scalar_select %p316, %s17, 1
          %s318 = smul.addr %s317, 41
          %s319 = smul.addr %s318, 8
          %s320 = scalar_lea.vmem %s0, %s319
        $region52: #{tpu_custom_call.1} parent=47 // pred_fallthru
          _
      $region48: #{tpu_custom_call.1} parent=5 // pred_fallthru
        _
      %p321 = scmp.le.s32.totalorder 1, %s17
      %p322 = scmp.lt.s32.totalorder %s17, 3
      %p323 = pnand %p321, %p322
      %p324 = pneg %p323
      // Predicated region
      $region53: #{tpu_custom_call.1} parent=5 // pred_check
        _
      $region54: #{tpu_custom_call.1} parent=5 // pred_check_branch
        %326 = sbr.rel (%p323) target = $region56
      $region55: #{tpu_custom_call.1} parent=5 // pred_region
        %s327 = ssub.s32 %s17, 1
        // Predicated region
        $region57: #{tpu_custom_call.1} parent=55 // pred_check
          %p328 = pneg %p85
        $region58: #{tpu_custom_call.1} parent=55 // pred_check_branch
          %330 = sbr.rel (%p328) target = $region60
        $region59: #{tpu_custom_call.1} parent=55 // pred_region
          %332 = dma.done [#allocation7], 16384
        $region60: #{tpu_custom_call.1} parent=55 // pred_fallthru
          _
        // Predicated region
        $region61: #{tpu_custom_call.1} parent=55 // pred_check
          %p333 = pneg %p127
        $region62: #{tpu_custom_call.1} parent=55 // pred_check_branch
          %335 = sbr.rel (%p333) target = $region64
        $region63: #{tpu_custom_call.1} parent=55 // pred_region
          %337 = dma.done [#allocation9], 8192
        $region64: #{tpu_custom_call.1} parent=55 // pred_fallthru
          _
        // Predicated region
        $region65: #{tpu_custom_call.1} parent=55 // pred_check
          %p338 = pneg %p148
        $region66: #{tpu_custom_call.1} parent=55 // pred_check_branch
          %340 = sbr.rel (%p338) target = $region68
        $region67: #{tpu_custom_call.1} parent=55 // pred_region
          %342 = dma.done [#allocation9], 8192
        $region68: #{tpu_custom_call.1} parent=55 // pred_fallthru
          _
        %p343 = scmp.lt.s32.totalorder %s22, 1
        %s344 = scalar_select %p343, %s22, 1
        %s345 = smul.addr %s344, 41
        %s346 = smul.addr %s345, 8
        %s347 = scalar_lea.vmem %s0, %s346
        %p348 = pneg %p43
        %p349 = pneg %p40
        %p350 = pneg %p64
        %p351 = pneg %p61
        %p352 = pneg %p85
        %p353 = pneg %p82
        %p354 = pneg %p106
        %p355 = pneg %p103
        %p356 = pneg %p127
        %p357 = pneg %p124
        %p358 = pneg %p148
        %p359 = pneg %p145
        %p360 = pneg %p169
        %p361 = pneg %p166
        %p362 = pneg %p190
        %p363 = pneg %p187
        %p364 = pneg %p211
        %p365 = pneg %p208
        %p366 = pneg %p237
        %p367 = pneg %p234
        %p368 = scmp.lt.s32.totalorder %s22, 1
        %s369 = scalar_select %p368, %s22, 1
        %s370 = smul.addr %s369, 2
        %s371 = smul.addr %s370, 8
        %s372 = scalar_lea.vmem %s9, %s371
        %p373 = scmp.lt.s32.totalorder %s22, 1
        %s374 = scalar_select %p373, %s22, 1
        %s375 = smul.addr %s374, 41
        %s376 = smul.addr %s375, 8
        %s377 = scalar_lea.vmem %s0, %s376
        %p378 = scmp.lt.s32.totalorder %s22, 1
        %s379 = scalar_select %p378, %s22, 1
        %s380 = smul.addr %s379, 2
        %s381 = smul.addr %s380, 8
        %s382 = scalar_lea.vmem %s9, %s381
        %v383 = vld [vmem:[%s1] sm:$0xff]
        %v384 = vld [vmem:[%s1 + $0x8] sm:$0x3]
        %v385 = vld [vmem:[%s377] sm:$0xff]
        %v386 = vld [vmem:[%s377 + $0x8] sm:$0xff]
        %v387 = vld [vmem:[%s377 + $0x10] sm:$0xff]
        %v388 = vld [vmem:[%s377 + $0x18] sm:$0xff]
        %v389 = vld [vmem:[%s377 + $0x20] sm:$0xff]
        %v390 = vld [vmem:[%s377 + $0x28] sm:$0xff]
        %v391 = vld [vmem:[%s377 + $0x30] sm:$0xff]
        %v392 = vld [vmem:[%s377 + $0x38] sm:$0xff]
        %v393 = vld [vmem:[%s377 + $0x40] sm:$0xff]
        %v394 = vld [vmem:[%s377 + $0x48] sm:$0xff]
        %v395 = vld [vmem:[%s377 + $0x50] sm:$0xff]
        %v396 = vld [vmem:[%s377 + $0x58] sm:$0xff]
        %v397 = vld [vmem:[%s377 + $0x60] sm:$0xff]
        %v398 = vld [vmem:[%s377 + $0x68] sm:$0xff]
        %v399 = vld [vmem:[%s377 + $0x70] sm:$0xff]
        %v400 = vld [vmem:[%s377 + $0x78] sm:$0xff]
        %v401 = vld [vmem:[%s377 + $0x80] sm:$0xff]
        %v402 = vld [vmem:[%s377 + $0x88] sm:$0xff]
        %v403 = vld [vmem:[%s377 + $0x90] sm:$0xff]
        %v404 = vld [vmem:[%s377 + $0x98] sm:$0xff]
        %v405 = vld [vmem:[%s377 + $0xa0] sm:$0xff]
        %v406 = vld [vmem:[%s377 + $0xa8] sm:$0xff]
        %v407 = vld [vmem:[%s377 + $0xb0] sm:$0xff]
        %v408 = vld [vmem:[%s377 + $0xb8] sm:$0xff]
        %v409 = vld [vmem:[%s377 + $0xc0] sm:$0xff]
        %v410 = vld [vmem:[%s377 + $0xc8] sm:$0xff]
        %v411 = vld [vmem:[%s377 + $0xd0] sm:$0xff]
        %v412 = vld [vmem:[%s377 + $0xd8] sm:$0xff]
        %v413 = vld [vmem:[%s377 + $0xe0] sm:$0xff]
        %v414 = vld [vmem:[%s377 + $0xe8] sm:$0xff]
        %v415 = vld [vmem:[%s377 + $0xf0] sm:$0xff]
        %v416 = vld [vmem:[%s377 + $0xf8] sm:$0xff]
        %v417 = vld [vmem:[%s377 + $0x100] sm:$0xff]
        %v418 = vld [vmem:[%s377 + $0x108] sm:$0xff]
        %v419 = vld [vmem:[%s377 + $0x110] sm:$0xff]
        %v420 = vld [vmem:[%s377 + $0x118] sm:$0xff]
        %v421 = vld [vmem:[%s377 + $0x120] sm:$0xff]
        %v422 = vld [vmem:[%s377 + $0x128] sm:$0xff]
        %v423 = vld [vmem:[%s377 + $0x130] sm:$0xff]
        %v424 = vld [vmem:[%s377 + $0x138] sm:$0xff]
        %v425 = vld [vmem:[%s377 + $0x1] sm:$0xff]
        %v426 = vld [vmem:[%s377 + $0x9] sm:$0xff]
        %v427 = vld [vmem:[%s377 + $0x11] sm:$0xff]
        %v428 = vld [vmem:[%s377 + $0x19] sm:$0xff]
        %v429 = vld [vmem:[%s377 + $0x21] sm:$0xff]
        %v430 = vld [vmem:[%s377 + $0x29] sm:$0xff]
        %v431 = vld [vmem:[%s377 + $0x31] sm:$0xff]
        %v432 = vld [vmem:[%s377 + $0x39] sm:$0xff]
        %v433 = vld [vmem:[%s377 + $0x41] sm:$0xff]
        %v434 = vld [vmem:[%s377 + $0x49] sm:$0xff]
        %v435 = vld [vmem:[%s377 + $0x51] sm:$0xff]
        %v436 = vld [vmem:[%s377 + $0x59] sm:$0xff]
        %v437 = vld [vmem:[%s377 + $0x61] sm:$0xff]
        %v438 = vld [vmem:[%s377 + $0x69] sm:$0xff]
        %v439 = vld [vmem:[%s377 + $0x71] sm:$0xff]
        %v440 = vld [vmem:[%s377 + $0x79] sm:$0xff]
        %v441 = vld [vmem:[%s377 + $0x81] sm:$0xff]
        %v442 = vld [vmem:[%s377 + $0x89] sm:$0xff]
        %v443 = vld [vmem:[%s377 + $0x91] sm:$0xff]
        %v444 = vld [vmem:[%s377 + $0x99] sm:$0xff]
        %v445 = vld [vmem:[%s377 + $0xa1] sm:$0xff]
        %v446 = vld [vmem:[%s377 + $0xa9] sm:$0xff]
        %v447 = vld [vmem:[%s377 + $0xb1] sm:$0xff]
        %v448 = vld [vmem:[%s377 + $0xb9] sm:$0xff]
        %v449 = vld [vmem:[%s377 + $0xc1] sm:$0xff]
        %v450 = vld [vmem:[%s377 + $0xc9] sm:$0xff]
        %v451 = vld [vmem:[%s377 + $0xd1] sm:$0xff]
        %v452 = vld [vmem:[%s377 + $0xd9] sm:$0xff]
        %v453 = vld [vmem:[%s377 + $0xe1] sm:$0xff]
        %v454 = vld [vmem:[%s377 + $0xe9] sm:$0xff]
        %v455 = vld [vmem:[%s377 + $0xf1] sm:$0xff]
        %v456 = vld [vmem:[%s377 + $0xf9] sm:$0xff]
        %v457 = vld [vmem:[%s377 + $0x101] sm:$0xff]
        %v458 = vld [vmem:[%s377 + $0x109] sm:$0xff]
        %v459 = vld [vmem:[%s377 + $0x111] sm:$0xff]
        %v460 = vld [vmem:[%s377 + $0x119] sm:$0xff]
        %v461 = vld [vmem:[%s377 + $0x121] sm:$0xff]
        %v462 = vld [vmem:[%s377 + $0x129] sm:$0xff]
        %v463 = vld [vmem:[%s377 + $0x131] sm:$0xff]
        %v464 = vld [vmem:[%s377 + $0x139] sm:$0xff]
        %vm467 = vcmask 1042432
        %v468 = vrot.slane %v383, 5
        %v469 = vrot.slane %v384, 5
        %v470 = vsel %vm467, %v468, %v469
        %vm471 = vcmask 39936
        %v473 = vsel %vm471, %v425, 0
        %v476 = vsel %vm471, %v426, 0
        %v479 = vsel %vm471, %v427, 0
        %v482 = vsel %vm471, %v428, 0
        %v485 = vsel %vm471, %v429, 0
        %v488 = vsel %vm471, %v430, 0
        %v491 = vsel %vm471, %v431, 0
        %v494 = vsel %vm471, %v432, 0
        %v497 = vsel %vm471, %v433, 0
        %v500 = vsel %vm471, %v434, 0
        %v503 = vsel %vm471, %v435, 0
        %v506 = vsel %vm471, %v436, 0
        %v509 = vsel %vm471, %v437, 0
        %v512 = vsel %vm471, %v438, 0
        %v515 = vsel %vm471, %v439, 0
        %v518 = vsel %vm471, %v440, 0
        %v521 = vsel %vm471, %v441, 0
        %v524 = vsel %vm471, %v442, 0
        %v527 = vsel %vm471, %v443, 0
        %v530 = vsel %vm471, %v444, 0
        %v533 = vsel %vm471, %v445, 0
        %v536 = vsel %vm471, %v446, 0
        %v539 = vsel %vm471, %v447, 0
        %v542 = vsel %vm471, %v448, 0
        %v545 = vsel %vm471, %v449, 0
        %v548 = vsel %vm471, %v450, 0
        %v551 = vsel %vm471, %v451, 0
        %v554 = vsel %vm471, %v452, 0
        %v557 = vsel %vm471, %v453, 0
        %v560 = vsel %vm471, %v454, 0
        %v563 = vsel %vm471, %v455, 0
        %v566 = vsel %vm471, %v456, 0
        %v569 = vsel %vm471, %v457, 0
        %v572 = vsel %vm471, %v458, 0
        %v575 = vsel %vm471, %v459, 0
        %v578 = vsel %vm471, %v460, 0
        %v581 = vsel %vm471, %v461, 0
        %v584 = vsel %vm471, %v462, 0
        %v587 = vsel %vm471, %v463, 0
        %v590 = vsel %vm471, %v464, 0
        %vm592 = vcmask 1044480
        %v593 = vsel %vm592, %v470, 0
        %595 = vmatpush.msra.mxu0 0.0
        %596 = vmatpush.msra.mxu0 0.0
        %597 = vmatpush.msra.mxu0 0.0
        %598 = vmatpush.msra.mxu0 0.0
        %599 = vmatpush.msra.mxu0 0.0
        %600 = vmatpush.msra.mxu0 0.0
        %601 = vmatpush.msra.mxu0 0.0
        %602 = vmatpush.msra.mxu0 0.0
        %603 = vmatpush.msra.mxu0 0.0
        %604 = vmatpush.msra.mxu0 0.0
        %605 = vmatpush.msra.mxu0 0.0
        %606 = vmatpush.msra.mxu0 0.0
        %607 = vmatpush.msra.mxu0 0.0
        %608 = vmatpush.msra.mxu0 0.0
        %609 = vmatpush.msra.mxu0 0.0
        %610 = vmatpush.msra.mxu0 %v593
        %611 = vmatmul.f32.gmra.mxu0 %v473
        %v612 = vpop.f32.mrf.mxu0
        %v613 = vadd.f32 0.0, %v612
        %614 = vmatmul.f32.gmra.mxu0 %v476
        %v615 = vpop.f32.mrf.mxu0
        %v616 = vadd.f32 0.0, %v615
        %617 = vmatmul.f32.gmra.mxu0 %v479
        %v618 = vpop.f32.mrf.mxu0
        %v619 = vadd.f32 0.0, %v618
        %620 = vmatmul.f32.gmra.mxu0 %v482
        %v621 = vpop.f32.mrf.mxu0
        %v622 = vadd.f32 0.0, %v621
        %623 = vmatmul.f32.gmra.mxu0 %v485
        %v624 = vpop.f32.mrf.mxu0
        %v625 = vadd.f32 0.0, %v624
        %626 = vmatmul.f32.gmra.mxu0 %v488
        %v627 = vpop.f32.mrf.mxu0
        %v628 = vadd.f32 0.0, %v627
        %629 = vmatmul.f32.gmra.mxu0 %v491
        %v630 = vpop.f32.mrf.mxu0
        %v631 = vadd.f32 0.0, %v630
        %632 = vmatmul.f32.gmra.mxu0 %v494
        %v633 = vpop.f32.mrf.mxu0
        %v634 = vadd.f32 0.0, %v633
        %635 = vmatmul.f32.gmra.mxu0 %v497
        %v636 = vpop.f32.mrf.mxu0
        %v637 = vadd.f32 0.0, %v636
        %638 = vmatmul.f32.gmra.mxu0 %v500
        %v639 = vpop.f32.mrf.mxu0
        %v640 = vadd.f32 0.0, %v639
        %641 = vmatmul.f32.gmra.mxu0 %v503
        %v642 = vpop.f32.mrf.mxu0
        %v643 = vadd.f32 0.0, %v642
        %644 = vmatmul.f32.gmra.mxu0 %v506
        %v645 = vpop.f32.mrf.mxu0
        %v646 = vadd.f32 0.0, %v645
        %647 = vmatmul.f32.gmra.mxu0 %v509
        %v648 = vpop.f32.mrf.mxu0
        %v649 = vadd.f32 0.0, %v648
        %650 = vmatmul.f32.gmra.mxu0 %v512
        %v651 = vpop.f32.mrf.mxu0
        %v652 = vadd.f32 0.0, %v651
        %653 = vmatmul.f32.gmra.mxu0 %v515
        %v654 = vpop.f32.mrf.mxu0
        %v655 = vadd.f32 0.0, %v654
        %656 = vmatmul.f32.gmra.mxu0 %v518
        %v657 = vpop.f32.mrf.mxu0
        %v658 = vadd.f32 0.0, %v657
        %659 = vmatmul.f32.gmra.mxu0 %v521
        %v660 = vpop.f32.mrf.mxu0
        %v661 = vadd.f32 0.0, %v660
        %662 = vmatmul.f32.gmra.mxu0 %v524
        %v663 = vpop.f32.mrf.mxu0
        %v664 = vadd.f32 0.0, %v663
        %665 = vmatmul.f32.gmra.mxu0 %v527
        %v666 = vpop.f32.mrf.mxu0
        %v667 = vadd.f32 0.0, %v666
        %668 = vmatmul.f32.gmra.mxu0 %v530
        %v669 = vpop.f32.mrf.mxu0
        %v670 = vadd.f32 0.0, %v669
        %671 = vmatmul.f32.gmra.mxu0 %v533
        %v672 = vpop.f32.mrf.mxu0
        %v673 = vadd.f32 0.0, %v672
        %674 = vmatmul.f32.gmra.mxu0 %v536
        %v675 = vpop.f32.mrf.mxu0
        %v676 = vadd.f32 0.0, %v675
        %677 = vmatmul.f32.gmra.mxu0 %v539
        %v678 = vpop.f32.mrf.mxu0
        %v679 = vadd.f32 0.0, %v678
        %680 = vmatmul.f32.gmra.mxu0 %v542
        %v681 = vpop.f32.mrf.mxu0
        %v682 = vadd.f32 0.0, %v681
        %683 = vmatmul.f32.gmra.mxu0 %v545
        %v684 = vpop.f32.mrf.mxu0
        %v685 = vadd.f32 0.0, %v684
        %686 = vmatmul.f32.gmra.mxu0 %v548
        %v687 = vpop.f32.mrf.mxu0
        %v688 = vadd.f32 0.0, %v687
        %689 = vmatmul.f32.gmra.mxu0 %v551
        %v690 = vpop.f32.mrf.mxu0
        %v691 = vadd.f32 0.0, %v690
        %692 = vmatmul.f32.gmra.mxu0 %v554
        %v693 = vpop.f32.mrf.mxu0
        %v694 = vadd.f32 0.0, %v693
        %695 = vmatmul.f32.gmra.mxu0 %v557
        %v696 = vpop.f32.mrf.mxu0
        %v697 = vadd.f32 0.0, %v696
        %698 = vmatmul.f32.gmra.mxu0 %v560
        %v699 = vpop.f32.mrf.mxu0
        %v700 = vadd.f32 0.0, %v699
        %701 = vmatmul.f32.gmra.mxu0 %v563
        %v702 = vpop.f32.mrf.mxu0
        %v703 = vadd.f32 0.0, %v702
        %704 = vmatmul.f32.gmra.mxu0 %v566
        %v705 = vpop.f32.mrf.mxu0
        %v706 = vadd.f32 0.0, %v705
        %707 = vmatmul.f32.gmra.mxu0 %v569
        %v708 = vpop.f32.mrf.mxu0
        %v709 = vadd.f32 0.0, %v708
        %710 = vmatmul.f32.gmra.mxu0 %v572
        %v711 = vpop.f32.mrf.mxu0
        %v712 = vadd.f32 0.0, %v711
        %713 = vmatmul.f32.gmra.mxu0 %v575
        %v714 = vpop.f32.mrf.mxu0
        %v715 = vadd.f32 0.0, %v714
        %716 = vmatmul.f32.gmra.mxu0 %v578
        %v717 = vpop.f32.mrf.mxu0
        %v718 = vadd.f32 0.0, %v717
        %719 = vmatmul.f32.gmra.mxu0 %v581
        %v720 = vpop.f32.mrf.mxu0
        %v721 = vadd.f32 0.0, %v720
        %722 = vmatmul.f32.gmra.mxu0 %v584
        %v723 = vpop.f32.mrf.mxu0
        %v724 = vadd.f32 0.0, %v723
        %725 = vmatmul.f32.gmra.mxu0 %v587
        %v726 = vpop.f32.mrf.mxu0
        %v727 = vadd.f32 0.0, %v726
        %728 = vmatmul.f32.gmra.mxu0 %v590
        %v729 = vpop.f32.mrf.mxu0
        %v730 = vadd.f32 0.0, %v729
        %731 = vdwg.mxu0
        %v733 = vsel %vm471, %v385, 0
        %v736 = vsel %vm471, %v386, 0
        %v739 = vsel %vm471, %v387, 0
        %v742 = vsel %vm471, %v388, 0
        %v745 = vsel %vm471, %v389, 0
        %v748 = vsel %vm471, %v390, 0
        %v751 = vsel %vm471, %v391, 0
        %v754 = vsel %vm471, %v392, 0
        %v757 = vsel %vm471, %v393, 0
        %v760 = vsel %vm471, %v394, 0
        %v763 = vsel %vm471, %v395, 0
        %v766 = vsel %vm471, %v396, 0
        %v769 = vsel %vm471, %v397, 0
        %v772 = vsel %vm471, %v398, 0
        %v775 = vsel %vm471, %v399, 0
        %v778 = vsel %vm471, %v400, 0
        %v781 = vsel %vm471, %v401, 0
        %v784 = vsel %vm471, %v402, 0
        %v787 = vsel %vm471, %v403, 0
        %v790 = vsel %vm471, %v404, 0
        %v793 = vsel %vm471, %v405, 0
        %v796 = vsel %vm471, %v406, 0
        %v799 = vsel %vm471, %v407, 0
        %v802 = vsel %vm471, %v408, 0
        %v805 = vsel %vm471, %v409, 0
        %v808 = vsel %vm471, %v410, 0
        %v811 = vsel %vm471, %v411, 0
        %v814 = vsel %vm471, %v412, 0
        %v817 = vsel %vm471, %v413, 0
        %v820 = vsel %vm471, %v414, 0
        %v823 = vsel %vm471, %v415, 0
        %v826 = vsel %vm471, %v416, 0
        %v829 = vsel %vm471, %v417, 0
        %v832 = vsel %vm471, %v418, 0
        %v835 = vsel %vm471, %v419, 0
        %v838 = vsel %vm471, %v420, 0
        %v841 = vsel %vm471, %v421, 0
        %v844 = vsel %vm471, %v422, 0
        %v847 = vsel %vm471, %v423, 0
        %v850 = vsel %vm471, %v424, 0
        %v852 = vsel %vm592, %v383, 0
        %854 = vmatpush.msra.mxu0 0.0
        %855 = vmatpush.msra.mxu0 0.0
        %856 = vmatpush.msra.mxu0 0.0
        %857 = vmatpush.msra.mxu0 0.0
        %858 = vmatpush.msra.mxu0 0.0
        %859 = vmatpush.msra.mxu0 0.0
        %860 = vmatpush.msra.mxu0 0.0
        %861 = vmatpush.msra.mxu0 0.0
        %862 = vmatpush.msra.mxu0 0.0
        %863 = vmatpush.msra.mxu0 0.0
        %864 = vmatpush.msra.mxu0 0.0
        %865 = vmatpush.msra.mxu0 0.0
        %866 = vmatpush.msra.mxu0 0.0
        %867 = vmatpush.msra.mxu0 0.0
        %868 = vmatpush.msra.mxu0 0.0
        %869 = vmatpush.msra.mxu0 %v852
        %870 = vmatmul.f32.gmra.mxu0 %v733
        %v871 = vpop.f32.mrf.mxu0
        %v872 = vadd.f32 %v613, %v871
        %873 = vmatmul.f32.gmra.mxu0 %v736
        %v874 = vpop.f32.mrf.mxu0
        %v875 = vadd.f32 %v616, %v874
        %876 = vmatmul.f32.gmra.mxu0 %v739
        %v877 = vpop.f32.mrf.mxu0
        %v878 = vadd.f32 %v619, %v877
        %879 = vmatmul.f32.gmra.mxu0 %v742
        %v880 = vpop.f32.mrf.mxu0
        %v881 = vadd.f32 %v622, %v880
        %882 = vmatmul.f32.gmra.mxu0 %v745
        %v883 = vpop.f32.mrf.mxu0
        %v884 = vadd.f32 %v625, %v883
        %885 = vmatmul.f32.gmra.mxu0 %v748
        %v886 = vpop.f32.mrf.mxu0
        %v887 = vadd.f32 %v628, %v886
        %888 = vmatmul.f32.gmra.mxu0 %v751
        %v889 = vpop.f32.mrf.mxu0
        %v890 = vadd.f32 %v631, %v889
        %891 = vmatmul.f32.gmra.mxu0 %v754
        %v892 = vpop.f32.mrf.mxu0
        %v893 = vadd.f32 %v634, %v892
        %894 = vmatmul.f32.gmra.mxu0 %v757
        %v895 = vpop.f32.mrf.mxu0
        %v896 = vadd.f32 %v637, %v895
        %897 = vmatmul.f32.gmra.mxu0 %v760
        %v898 = vpop.f32.mrf.mxu0
        %v899 = vadd.f32 %v640, %v898
        %900 = vmatmul.f32.gmra.mxu0 %v763
        %v901 = vpop.f32.mrf.mxu0
        %v902 = vadd.f32 %v643, %v901
        %903 = vmatmul.f32.gmra.mxu0 %v766
        %v904 = vpop.f32.mrf.mxu0
        %v905 = vadd.f32 %v646, %v904
        %906 = vmatmul.f32.gmra.mxu0 %v769
        %v907 = vpop.f32.mrf.mxu0
        %v908 = vadd.f32 %v649, %v907
        %909 = vmatmul.f32.gmra.mxu0 %v772
        %v910 = vpop.f32.mrf.mxu0
        %v911 = vadd.f32 %v652, %v910
        %912 = vmatmul.f32.gmra.mxu0 %v775
        %v913 = vpop.f32.mrf.mxu0
        %v914 = vadd.f32 %v655, %v913
        %915 = vmatmul.f32.gmra.mxu0 %v778
        %v916 = vpop.f32.mrf.mxu0
        %v917 = vadd.f32 %v658, %v916
        %918 = vmatmul.f32.gmra.mxu0 %v781
        %v919 = vpop.f32.mrf.mxu0
        %v920 = vadd.f32 %v661, %v919
        %921 = vmatmul.f32.gmra.mxu0 %v784
        %v922 = vpop.f32.mrf.mxu0
        %v923 = vadd.f32 %v664, %v922
        %924 = vmatmul.f32.gmra.mxu0 %v787
        %v925 = vpop.f32.mrf.mxu0
        %v926 = vadd.f32 %v667, %v925
        %927 = vmatmul.f32.gmra.mxu0 %v790
        %v928 = vpop.f32.mrf.mxu0
        %v929 = vadd.f32 %v670, %v928
        %930 = vmatmul.f32.gmra.mxu0 %v793
        %v931 = vpop.f32.mrf.mxu0
        %v932 = vadd.f32 %v673, %v931
        %933 = vmatmul.f32.gmra.mxu0 %v796
        %v934 = vpop.f32.mrf.mxu0
        %v935 = vadd.f32 %v676, %v934
        %936 = vmatmul.f32.gmra.mxu0 %v799
        %v937 = vpop.f32.mrf.mxu0
        %v938 = vadd.f32 %v679, %v937
        %939 = vmatmul.f32.gmra.mxu0 %v802
        %v940 = vpop.f32.mrf.mxu0
        %v941 = vadd.f32 %v682, %v940
        %942 = vmatmul.f32.gmra.mxu0 %v805
        %v943 = vpop.f32.mrf.mxu0
        %v944 = vadd.f32 %v685, %v943
        %945 = vmatmul.f32.gmra.mxu0 %v808
        %v946 = vpop.f32.mrf.mxu0
        %v947 = vadd.f32 %v688, %v946
        %948 = vmatmul.f32.gmra.mxu0 %v811
        %v949 = vpop.f32.mrf.mxu0
        %v950 = vadd.f32 %v691, %v949
        %951 = vmatmul.f32.gmra.mxu0 %v814
        %v952 = vpop.f32.mrf.mxu0
        %v953 = vadd.f32 %v694, %v952
        %954 = vmatmul.f32.gmra.mxu0 %v817
        %v955 = vpop.f32.mrf.mxu0
        %v956 = vadd.f32 %v697, %v955
        %957 = vmatmul.f32.gmra.mxu0 %v820
        %v958 = vpop.f32.mrf.mxu0
        %v959 = vadd.f32 %v700, %v958
        %960 = vmatmul.f32.gmra.mxu0 %v823
        %v961 = vpop.f32.mrf.mxu0
        %v962 = vadd.f32 %v703, %v961
        %963 = vmatmul.f32.gmra.mxu0 %v826
        %v964 = vpop.f32.mrf.mxu0
        %v965 = vadd.f32 %v706, %v964
        %966 = vmatmul.f32.gmra.mxu0 %v829
        %v967 = vpop.f32.mrf.mxu0
        %v968 = vadd.f32 %v709, %v967
        %969 = vmatmul.f32.gmra.mxu0 %v832
        %v970 = vpop.f32.mrf.mxu0
        %v971 = vadd.f32 %v712, %v970
        %972 = vmatmul.f32.gmra.mxu0 %v835
        %v973 = vpop.f32.mrf.mxu0
        %v974 = vadd.f32 %v715, %v973
        %975 = vmatmul.f32.gmra.mxu0 %v838
        %v976 = vpop.f32.mrf.mxu0
        %v977 = vadd.f32 %v718, %v976
        %978 = vmatmul.f32.gmra.mxu0 %v841
        %v979 = vpop.f32.mrf.mxu0
        %v980 = vadd.f32 %v721, %v979
        %981 = vmatmul.f32.gmra.mxu0 %v844
        %v982 = vpop.f32.mrf.mxu0
        %v983 = vadd.f32 %v724, %v982
        %984 = vmatmul.f32.gmra.mxu0 %v847
        %v985 = vpop.f32.mrf.mxu0
        %v986 = vadd.f32 %v727, %v985
        %987 = vmatmul.f32.gmra.mxu0 %v850
        %v988 = vpop.f32.mrf.mxu0
        %v989 = vadd.f32 %v730, %v988
        %990 = vdwg.mxu0
        %v991 = vld [vmem:[%s6] sm:$0x1]
        %v992 = vperm.slane %v991, 0
        %v993 = vadd.f32 %v872, %v992
        %v994 = vadd.f32 %v875, %v992
        %v995 = vadd.f32 %v878, %v992
        %v996 = vadd.f32 %v881, %v992
        %v997 = vadd.f32 %v884, %v992
        %v998 = vadd.f32 %v887, %v992
        %v999 = vadd.f32 %v890, %v992
        %v1000 = vadd.f32 %v893, %v992
        %v1001 = vadd.f32 %v896, %v992
        %v1002 = vadd.f32 %v899, %v992
        %v1003 = vadd.f32 %v902, %v992
        %v1004 = vadd.f32 %v905, %v992
        %v1005 = vadd.f32 %v908, %v992
        %v1006 = vadd.f32 %v911, %v992
        %v1007 = vadd.f32 %v914, %v992
        %v1008 = vadd.f32 %v917, %v992
        %v1009 = vadd.f32 %v920, %v992
        %v1010 = vadd.f32 %v923, %v992
        %v1011 = vadd.f32 %v926, %v992
        %v1012 = vadd.f32 %v929, %v992
        %v1013 = vadd.f32 %v932, %v992
        %v1014 = vadd.f32 %v935, %v992
        %v1015 = vadd.f32 %v938, %v992
        %v1016 = vadd.f32 %v941, %v992
        %v1017 = vadd.f32 %v944, %v992
        %v1018 = vadd.f32 %v947, %v992
        %v1019 = vadd.f32 %v950, %v992
        %v1020 = vadd.f32 %v953, %v992
        %v1021 = vadd.f32 %v956, %v992
        %v1022 = vadd.f32 %v959, %v992
        %v1023 = vadd.f32 %v962, %v992
        %v1024 = vadd.f32 %v965, %v992
        %v1025 = vadd.f32 %v968, %v992
        %v1026 = vadd.f32 %v971, %v992
        %v1027 = vadd.f32 %v974, %v992
        %v1028 = vadd.f32 %v977, %v992
        %v1029 = vadd.f32 %v980, %v992
        %v1030 = vadd.f32 %v983, %v992
        %v1031 = vadd.f32 %v986, %v992
        %v1032 = vadd.f32 %v989, %v992
        %v1033 = vld [vmem:[%s7] sm:$0x1]
        %v1034 = vld [vmem:[%s8] sm:$0x1]
        %1035 = vadd.xlane.f32.xlu0 %v993
        %v1036 = vpop.xlane.xlu0 %1035
        %1037 = vadd.xlane.f32.xlu0 %v994
        %v1038 = vpop.xlane.xlu0 %1037
        %1039 = vadd.xlane.f32.xlu0 %v995
        %v1040 = vpop.xlane.xlu0 %1039
        %1041 = vadd.xlane.f32.xlu0 %v996
        %v1042 = vpop.xlane.xlu0 %1041
        %1043 = vadd.xlane.f32.xlu0 %v997
        %v1044 = vpop.xlane.xlu0 %1043
        %1045 = vadd.xlane.f32.xlu0 %v998
        %v1046 = vpop.xlane.xlu0 %1045
        %1047 = vadd.xlane.f32.xlu0 %v999
        %v1048 = vpop.xlane.xlu0 %1047
        %1049 = vadd.xlane.f32.xlu0 %v1000
        %v1050 = vpop.xlane.xlu0 %1049
        %1051 = vadd.xlane.f32.xlu0 %v1001
        %v1052 = vpop.xlane.xlu0 %1051
        %1053 = vadd.xlane.f32.xlu0 %v1002
        %v1054 = vpop.xlane.xlu0 %1053
        %1055 = vadd.xlane.f32.xlu0 %v1003
        %v1056 = vpop.xlane.xlu0 %1055
        %1057 = vadd.xlane.f32.xlu0 %v1004
        %v1058 = vpop.xlane.xlu0 %1057
        %1059 = vadd.xlane.f32.xlu0 %v1005
        %v1060 = vpop.xlane.xlu0 %1059
        %1061 = vadd.xlane.f32.xlu0 %v1006
        %v1062 = vpop.xlane.xlu0 %1061
        %1063 = vadd.xlane.f32.xlu0 %v1007
        %v1064 = vpop.xlane.xlu0 %1063
        %1065 = vadd.xlane.f32.xlu0 %v1008
        %v1066 = vpop.xlane.xlu0 %1065
        %1067 = vadd.xlane.f32.xlu0 %v1009
        %v1068 = vpop.xlane.xlu0 %1067
        %1069 = vadd.xlane.f32.xlu0 %v1010
        %v1070 = vpop.xlane.xlu0 %1069
        %1071 = vadd.xlane.f32.xlu0 %v1011
        %v1072 = vpop.xlane.xlu0 %1071
        %1073 = vadd.xlane.f32.xlu0 %v1012
        %v1074 = vpop.xlane.xlu0 %1073
        %1075 = vadd.xlane.f32.xlu0 %v1013
        %v1076 = vpop.xlane.xlu0 %1075
        %1077 = vadd.xlane.f32.xlu0 %v1014
        %v1078 = vpop.xlane.xlu0 %1077
        %1079 = vadd.xlane.f32.xlu0 %v1015
        %v1080 = vpop.xlane.xlu0 %1079
        %1081 = vadd.xlane.f32.xlu0 %v1016
        %v1082 = vpop.xlane.xlu0 %1081
        %1083 = vadd.xlane.f32.xlu0 %v1017
        %v1084 = vpop.xlane.xlu0 %1083
        %1085 = vadd.xlane.f32.xlu0 %v1018
        %v1086 = vpop.xlane.xlu0 %1085
        %1087 = vadd.xlane.f32.xlu0 %v1019
        %v1088 = vpop.xlane.xlu0 %1087
        %1089 = vadd.xlane.f32.xlu0 %v1020
        %v1090 = vpop.xlane.xlu0 %1089
        %1091 = vadd.xlane.f32.xlu0 %v1021
        %v1092 = vpop.xlane.xlu0 %1091
        %1093 = vadd.xlane.f32.xlu0 %v1022
        %v1094 = vpop.xlane.xlu0 %1093
        %1095 = vadd.xlane.f32.xlu0 %v1023
        %v1096 = vpop.xlane.xlu0 %1095
        %1097 = vadd.xlane.f32.xlu0 %v1024
        %v1098 = vpop.xlane.xlu0 %1097
        %1099 = vadd.xlane.f32.xlu0 %v1025
        %v1100 = vpop.xlane.xlu0 %1099
        %1101 = vadd.xlane.f32.xlu0 %v1026
        %v1102 = vpop.xlane.xlu0 %1101
        %1103 = vadd.xlane.f32.xlu0 %v1027
        %v1104 = vpop.xlane.xlu0 %1103
        %1105 = vadd.xlane.f32.xlu0 %v1028
        %v1106 = vpop.xlane.xlu0 %1105
        %1107 = vadd.xlane.f32.xlu0 %v1029
        %v1108 = vpop.xlane.xlu0 %1107
        %1109 = vadd.xlane.f32.xlu0 %v1030
        %v1110 = vpop.xlane.xlu0 %1109
        %1111 = vadd.xlane.f32.xlu0 %v1031
        %v1112 = vpop.xlane.xlu0 %1111
        %1113 = vadd.xlane.f32.xlu0 %v1032
        %v1114 = vpop.xlane.xlu0 %1113
        %v1115 = vrcp.pop 128.0
        %v1116 = vmul.f32 128.0, %v1115
        %v1117 = vsub.f32 1.0, %v1116
        %v1118 = vmul.f32 %v1115, %v1117
        %v1119 = vadd.f32 %v1115, %v1118
        %vm1120 = vweird.f32 %v1115
        %v1121 = vsel %vm1120, %v1115, %v1119
        %v1122 = vmul.f32 %v1036, %v1121
        %v1123 = vmul.f32 %v1038, %v1121
        %v1124 = vmul.f32 %v1040, %v1121
        %v1125 = vmul.f32 %v1042, %v1121
        %v1126 = vmul.f32 %v1044, %v1121
        %v1127 = vmul.f32 %v1046, %v1121
        %v1128 = vmul.f32 %v1048, %v1121
        %v1129 = vmul.f32 %v1050, %v1121
        %v1130 = vmul.f32 %v1052, %v1121
        %v1131 = vmul.f32 %v1054, %v1121
        %v1132 = vmul.f32 %v1056, %v1121
        %v1133 = vmul.f32 %v1058, %v1121
        %v1134 = vmul.f32 %v1060, %v1121
        %v1135 = vmul.f32 %v1062, %v1121
        %v1136 = vmul.f32 %v1064, %v1121
        %v1137 = vmul.f32 %v1066, %v1121
        %v1138 = vmul.f32 %v1068, %v1121
        %v1139 = vmul.f32 %v1070, %v1121
        %v1140 = vmul.f32 %v1072, %v1121
        %v1141 = vmul.f32 %v1074, %v1121
        %v1142 = vmul.f32 %v1076, %v1121
        %v1143 = vmul.f32 %v1078, %v1121
        %v1144 = vmul.f32 %v1080, %v1121
        %v1145 = vmul.f32 %v1082, %v1121
        %v1146 = vmul.f32 %v1084, %v1121
        %v1147 = vmul.f32 %v1086, %v1121
        %v1148 = vmul.f32 %v1088, %v1121
        %v1149 = vmul.f32 %v1090, %v1121
        %v1150 = vmul.f32 %v1092, %v1121
        %v1151 = vmul.f32 %v1094, %v1121
        %v1152 = vmul.f32 %v1096, %v1121
        %v1153 = vmul.f32 %v1098, %v1121
        %v1154 = vmul.f32 %v1100, %v1121
        %v1155 = vmul.f32 %v1102, %v1121
        %v1156 = vmul.f32 %v1104, %v1121
        %v1157 = vmul.f32 %v1106, %v1121
        %v1158 = vmul.f32 %v1108, %v1121
        %v1159 = vmul.f32 %v1110, %v1121
        %v1160 = vmul.f32 %v1112, %v1121
        %v1161 = vmul.f32 %v1114, %v1121
        %v1162 = vsub.f32 %v993, %v1122
        %v1163 = vsub.f32 %v994, %v1123
        %v1164 = vsub.f32 %v995, %v1124
        %v1165 = vsub.f32 %v996, %v1125
        %v1166 = vsub.f32 %v997, %v1126
        %v1167 = vsub.f32 %v998, %v1127
        %v1168 = vsub.f32 %v999, %v1128
        %v1169 = vsub.f32 %v1000, %v1129
        %v1170 = vsub.f32 %v1001, %v1130
        %v1171 = vsub.f32 %v1002, %v1131
        %v1172 = vsub.f32 %v1003, %v1132
        %v1173 = vsub.f32 %v1004, %v1133
        %v1174 = vsub.f32 %v1005, %v1134
        %v1175 = vsub.f32 %v1006, %v1135
        %v1176 = vsub.f32 %v1007, %v1136
        %v1177 = vsub.f32 %v1008, %v1137
        %v1178 = vsub.f32 %v1009, %v1138
        %v1179 = vsub.f32 %v1010, %v1139
        %v1180 = vsub.f32 %v1011, %v1140
        %v1181 = vsub.f32 %v1012, %v1141
        %v1182 = vsub.f32 %v1013, %v1142
        %v1183 = vsub.f32 %v1014, %v1143
        %v1184 = vsub.f32 %v1015, %v1144
        %v1185 = vsub.f32 %v1016, %v1145
        %v1186 = vsub.f32 %v1017, %v1146
        %v1187 = vsub.f32 %v1018, %v1147
        %v1188 = vsub.f32 %v1019, %v1148
        %v1189 = vsub.f32 %v1020, %v1149
        %v1190 = vsub.f32 %v1021, %v1150
        %v1191 = vsub.f32 %v1022, %v1151
        %v1192 = vsub.f32 %v1023, %v1152
        %v1193 = vsub.f32 %v1024, %v1153
        %v1194 = vsub.f32 %v1025, %v1154
        %v1195 = vsub.f32 %v1026, %v1155
        %v1196 = vsub.f32 %v1027, %v1156
        %v1197 = vsub.f32 %v1028, %v1157
        %v1198 = vsub.f32 %v1029, %v1158
        %v1199 = vsub.f32 %v1030, %v1159
        %v1200 = vsub.f32 %v1031, %v1160
        %v1201 = vsub.f32 %v1032, %v1161
        %v1202 = vmul.f32 %v1162, %v1162
        %v1203 = vmul.f32 %v1163, %v1163
        %v1204 = vmul.f32 %v1164, %v1164
        %v1205 = vmul.f32 %v1165, %v1165
        %v1206 = vmul.f32 %v1166, %v1166
        %v1207 = vmul.f32 %v1167, %v1167
        %v1208 = vmul.f32 %v1168, %v1168
        %v1209 = vmul.f32 %v1169, %v1169
        %v1210 = vmul.f32 %v1170, %v1170
        %v1211 = vmul.f32 %v1171, %v1171
        %v1212 = vmul.f32 %v1172, %v1172
        %v1213 = vmul.f32 %v1173, %v1173
        %v1214 = vmul.f32 %v1174, %v1174
        %v1215 = vmul.f32 %v1175, %v1175
        %v1216 = vmul.f32 %v1176, %v1176
        %v1217 = vmul.f32 %v1177, %v1177
        %v1218 = vmul.f32 %v1178, %v1178
        %v1219 = vmul.f32 %v1179, %v1179
        %v1220 = vmul.f32 %v1180, %v1180
        %v1221 = vmul.f32 %v1181, %v1181
        %v1222 = vmul.f32 %v1182, %v1182
        %v1223 = vmul.f32 %v1183, %v1183
        %v1224 = vmul.f32 %v1184, %v1184
        %v1225 = vmul.f32 %v1185, %v1185
        %v1226 = vmul.f32 %v1186, %v1186
        %v1227 = vmul.f32 %v1187, %v1187
        %v1228 = vmul.f32 %v1188, %v1188
        %v1229 = vmul.f32 %v1189, %v1189
        %v1230 = vmul.f32 %v1190, %v1190
        %v1231 = vmul.f32 %v1191, %v1191
        %v1232 = vmul.f32 %v1192, %v1192
        %v1233 = vmul.f32 %v1193, %v1193
        %v1234 = vmul.f32 %v1194, %v1194
        %v1235 = vmul.f32 %v1195, %v1195
        %v1236 = vmul.f32 %v1196, %v1196
        %v1237 = vmul.f32 %v1197, %v1197
        %v1238 = vmul.f32 %v1198, %v1198
        %v1239 = vmul.f32 %v1199, %v1199
        %v1240 = vmul.f32 %v1200, %v1200
        %v1241 = vmul.f32 %v1201, %v1201
        %1242 = vadd.xlane.f32.xlu0 %v1202
        %v1243 = vpop.xlane.xlu0 %1242
        %1244 = vadd.xlane.f32.xlu0 %v1203
        %v1245 = vpop.xlane.xlu0 %1244
        %1246 = vadd.xlane.f32.xlu0 %v1204
        %v1247 = vpop.xlane.xlu0 %1246
        %1248 = vadd.xlane.f32.xlu0 %v1205
        %v1249 = vpop.xlane.xlu0 %1248
        %1250 = vadd.xlane.f32.xlu0 %v1206
        %v1251 = vpop.xlane.xlu0 %1250
        %1252 = vadd.xlane.f32.xlu0 %v1207
        %v1253 = vpop.xlane.xlu0 %1252
        %1254 = vadd.xlane.f32.xlu0 %v1208
        %v1255 = vpop.xlane.xlu0 %1254
        %1256 = vadd.xlane.f32.xlu0 %v1209
        %v1257 = vpop.xlane.xlu0 %1256
        %1258 = vadd.xlane.f32.xlu0 %v1210
        %v1259 = vpop.xlane.xlu0 %1258
        %1260 = vadd.xlane.f32.xlu0 %v1211
        %v1261 = vpop.xlane.xlu0 %1260
        %1262 = vadd.xlane.f32.xlu0 %v1212
        %v1263 = vpop.xlane.xlu0 %1262
        %1264 = vadd.xlane.f32.xlu0 %v1213
        %v1265 = vpop.xlane.xlu0 %1264
        %1266 = vadd.xlane.f32.xlu0 %v1214
        %v1267 = vpop.xlane.xlu0 %1266
        %1268 = vadd.xlane.f32.xlu0 %v1215
        %v1269 = vpop.xlane.xlu0 %1268
        %1270 = vadd.xlane.f32.xlu0 %v1216
        %v1271 = vpop.xlane.xlu0 %1270
        %1272 = vadd.xlane.f32.xlu0 %v1217
        %v1273 = vpop.xlane.xlu0 %1272
        %1274 = vadd.xlane.f32.xlu0 %v1218
        %v1275 = vpop.xlane.xlu0 %1274
        %1276 = vadd.xlane.f32.xlu0 %v1219
        %v1277 = vpop.xlane.xlu0 %1276
        %1278 = vadd.xlane.f32.xlu0 %v1220
        %v1279 = vpop.xlane.xlu0 %1278
        %1280 = vadd.xlane.f32.xlu0 %v1221
        %v1281 = vpop.xlane.xlu0 %1280
        %1282 = vadd.xlane.f32.xlu0 %v1222
        %v1283 = vpop.xlane.xlu0 %1282
        %1284 = vadd.xlane.f32.xlu0 %v1223
        %v1285 = vpop.xlane.xlu0 %1284
        %1286 = vadd.xlane.f32.xlu0 %v1224
        %v1287 = vpop.xlane.xlu0 %1286
        %1288 = vadd.xlane.f32.xlu0 %v1225
        %v1289 = vpop.xlane.xlu0 %1288
        %1290 = vadd.xlane.f32.xlu0 %v1226
        %v1291 = vpop.xlane.xlu0 %1290
        %1292 = vadd.xlane.f32.xlu0 %v1227
        %v1293 = vpop.xlane.xlu0 %1292
        %1294 = vadd.xlane.f32.xlu0 %v1228
        %v1295 = vpop.xlane.xlu0 %1294
        %1296 = vadd.xlane.f32.xlu0 %v1229
        %v1297 = vpop.xlane.xlu0 %1296
        %1298 = vadd.xlane.f32.xlu0 %v1230
        %v1299 = vpop.xlane.xlu0 %1298
        %1300 = vadd.xlane.f32.xlu0 %v1231
        %v1301 = vpop.xlane.xlu0 %1300
        %1302 = vadd.xlane.f32.xlu0 %v1232
        %v1303 = vpop.xlane.xlu0 %1302
        %1304 = vadd.xlane.f32.xlu0 %v1233
        %v1305 = vpop.xlane.xlu0 %1304
        %1306 = vadd.xlane.f32.xlu0 %v1234
        %v1307 = vpop.xlane.xlu0 %1306
        %1308 = vadd.xlane.f32.xlu0 %v1235
        %v1309 = vpop.xlane.xlu0 %1308
        %1310 = vadd.xlane.f32.xlu0 %v1236
        %v1311 = vpop.xlane.xlu0 %1310
        %1312 = vadd.xlane.f32.xlu0 %v1237
        %v1313 = vpop.xlane.xlu0 %1312
        %1314 = vadd.xlane.f32.xlu0 %v1238
        %v1315 = vpop.xlane.xlu0 %1314
        %1316 = vadd.xlane.f32.xlu0 %v1239
        %v1317 = vpop.xlane.xlu0 %1316
        %1318 = vadd.xlane.f32.xlu0 %v1240
        %v1319 = vpop.xlane.xlu0 %1318
        %1320 = vadd.xlane.f32.xlu0 %v1241
        %v1321 = vpop.xlane.xlu0 %1320
        %v1322 = vmul.f32 %v1243, 0.007874016
        %v1323 = vmul.f32 %v1245, 0.007874016
        %v1324 = vmul.f32 %v1247, 0.007874016
        %v1325 = vmul.f32 %v1249, 0.007874016
        %v1326 = vmul.f32 %v1251, 0.007874016
        %v1327 = vmul.f32 %v1253, 0.007874016
        %v1328 = vmul.f32 %v1255, 0.007874016
        %v1329 = vmul.f32 %v1257, 0.007874016
        %v1330 = vmul.f32 %v1259, 0.007874016
        %v1331 = vmul.f32 %v1261, 0.007874016
        %v1332 = vmul.f32 %v1263, 0.007874016
        %v1333 = vmul.f32 %v1265, 0.007874016
        %v1334 = vmul.f32 %v1267, 0.007874016
        %v1335 = vmul.f32 %v1269, 0.007874016
        %v1336 = vmul.f32 %v1271, 0.007874016
        %v1337 = vmul.f32 %v1273, 0.007874016
        %v1338 = vmul.f32 %v1275, 0.007874016
        %v1339 = vmul.f32 %v1277, 0.007874016
        %v1340 = vmul.f32 %v1279, 0.007874016
        %v1341 = vmul.f32 %v1281, 0.007874016
        %v1342 = vmul.f32 %v1283, 0.007874016
        %v1343 = vmul.f32 %v1285, 0.007874016
        %v1344 = vmul.f32 %v1287, 0.007874016
        %v1345 = vmul.f32 %v1289, 0.007874016
        %v1346 = vmul.f32 %v1291, 0.007874016
        %v1347 = vmul.f32 %v1293, 0.007874016
        %v1348 = vmul.f32 %v1295, 0.007874016
        %v1349 = vmul.f32 %v1297, 0.007874016
        %v1350 = vmul.f32 %v1299, 0.007874016
        %v1351 = vmul.f32 %v1301, 0.007874016
        %v1352 = vmul.f32 %v1303, 0.007874016
        %v1353 = vmul.f32 %v1305, 0.007874016
        %v1354 = vmul.f32 %v1307, 0.007874016
        %v1355 = vmul.f32 %v1309, 0.007874016
        %v1356 = vmul.f32 %v1311, 0.007874016
        %v1357 = vmul.f32 %v1313, 0.007874016
        %v1358 = vmul.f32 %v1315, 0.007874016
        %v1359 = vmul.f32 %v1317, 0.007874016
        %v1360 = vmul.f32 %v1319, 0.007874016
        %v1361 = vmul.f32 %v1321, 0.007874016
        %v1362 = vadd.f32 %v1322, 1e-05
        %v1363 = vadd.f32 %v1323, 1e-05
        %v1364 = vadd.f32 %v1324, 1e-05
        %v1365 = vadd.f32 %v1325, 1e-05
        %v1366 = vadd.f32 %v1326, 1e-05
        %v1367 = vadd.f32 %v1327, 1e-05
        %v1368 = vadd.f32 %v1328, 1e-05
        %v1369 = vadd.f32 %v1329, 1e-05
        %v1370 = vadd.f32 %v1330, 1e-05
        %v1371 = vadd.f32 %v1331, 1e-05
        %v1372 = vadd.f32 %v1332, 1e-05
        %v1373 = vadd.f32 %v1333, 1e-05
        %v1374 = vadd.f32 %v1334, 1e-05
        %v1375 = vadd.f32 %v1335, 1e-05
        %v1376 = vadd.f32 %v1336, 1e-05
        %v1377 = vadd.f32 %v1337, 1e-05
        %v1378 = vadd.f32 %v1338, 1e-05
        %v1379 = vadd.f32 %v1339, 1e-05
        %v1380 = vadd.f32 %v1340, 1e-05
        %v1381 = vadd.f32 %v1341, 1e-05
        %v1382 = vadd.f32 %v1342, 1e-05
        %v1383 = vadd.f32 %v1343, 1e-05
        %v1384 = vadd.f32 %v1344, 1e-05
        %v1385 = vadd.f32 %v1345, 1e-05
        %v1386 = vadd.f32 %v1346, 1e-05
        %v1387 = vadd.f32 %v1347, 1e-05
        %v1388 = vadd.f32 %v1348, 1e-05
        %v1389 = vadd.f32 %v1349, 1e-05
        %v1390 = vadd.f32 %v1350, 1e-05
        %v1391 = vadd.f32 %v1351, 1e-05
        %v1392 = vadd.f32 %v1352, 1e-05
        %v1393 = vadd.f32 %v1353, 1e-05
        %v1394 = vadd.f32 %v1354, 1e-05
        %v1395 = vadd.f32 %v1355, 1e-05
        %v1396 = vadd.f32 %v1356, 1e-05
        %v1397 = vadd.f32 %v1357, 1e-05
        %v1398 = vadd.f32 %v1358, 1e-05
        %v1399 = vadd.f32 %v1359, 1e-05
        %v1400 = vadd.f32 %v1360, 1e-05
        %v1401 = vadd.f32 %v1361, 1e-05
        %v1402 = vrsqrt.pop %v1362
        %v1403 = vmul.f32 %v1402, %v1362
        %v1404 = vmul.f32 %v1403, %v1402
        %v1405 = vmul.f32 0.5, %v1404
        %v1406 = vsub.f32 1.5, %v1405
        %v1407 = vmul.f32 %v1402, %v1406
        %vm1408 = vweird.f32 %v1362
        %vm1409 = vweird.f32 %v1402
        %vm1410 = vmor %vm1408, %vm1409
        %v1411 = vsel %vm1410, %v1402, %v1407
        %v1412 = vrsqrt.pop %v1363
        %v1413 = vmul.f32 %v1412, %v1363
        %v1414 = vmul.f32 %v1413, %v1412
        %v1415 = vmul.f32 0.5, %v1414
        %v1416 = vsub.f32 1.5, %v1415
        %v1417 = vmul.f32 %v1412, %v1416
        %vm1418 = vweird.f32 %v1363
        %vm1419 = vweird.f32 %v1412
        %vm1420 = vmor %vm1418, %vm1419
        %v1421 = vsel %vm1420, %v1412, %v1417
        %v1422 = vrsqrt.pop %v1364
        %v1423 = vmul.f32 %v1422, %v1364
        %v1424 = vmul.f32 %v1423, %v1422
        %v1425 = vmul.f32 0.5, %v1424
        %v1426 = vsub.f32 1.5, %v1425
        %v1427 = vmul.f32 %v1422, %v1426
        %vm1428 = vweird.f32 %v1364
        %vm1429 = vweird.f32 %v1422
        %vm1430 = vmor %vm1428, %vm1429
        %v1431 = vsel %vm1430, %v1422, %v1427
        %v1432 = vrsqrt.pop %v1365
        %v1433 = vmul.f32 %v1432, %v1365
        %v1434 = vmul.f32 %v1433, %v1432
        %v1435 = vmul.f32 0.5, %v1434
        %v1436 = vsub.f32 1.5, %v1435
        %v1437 = vmul.f32 %v1432, %v1436
        %vm1438 = vweird.f32 %v1365
        %vm1439 = vweird.f32 %v1432
        %vm1440 = vmor %vm1438, %vm1439
        %v1441 = vsel %vm1440, %v1432, %v1437
        %v1442 = vrsqrt.pop %v1366
        %v1443 = vmul.f32 %v1442, %v1366
        %v1444 = vmul.f32 %v1443, %v1442
        %v1445 = vmul.f32 0.5, %v1444
        %v1446 = vsub.f32 1.5, %v1445
        %v1447 = vmul.f32 %v1442, %v1446
        %vm1448 = vweird.f32 %v1366
        %vm1449 = vweird.f32 %v1442
        %vm1450 = vmor %vm1448, %vm1449
        %v1451 = vsel %vm1450, %v1442, %v1447
        %v1452 = vrsqrt.pop %v1367
        %v1453 = vmul.f32 %v1452, %v1367
        %v1454 = vmul.f32 %v1453, %v1452
        %v1455 = vmul.f32 0.5, %v1454
        %v1456 = vsub.f32 1.5, %v1455
        %v1457 = vmul.f32 %v1452, %v1456
        %vm1458 = vweird.f32 %v1367
        %vm1459 = vweird.f32 %v1452
        %vm1460 = vmor %vm1458, %vm1459
        %v1461 = vsel %vm1460, %v1452, %v1457
        %v1462 = vrsqrt.pop %v1368
        %v1463 = vmul.f32 %v1462, %v1368
        %v1464 = vmul.f32 %v1463, %v1462
        %v1465 = vmul.f32 0.5, %v1464
        %v1466 = vsub.f32 1.5, %v1465
        %v1467 = vmul.f32 %v1462, %v1466
        %vm1468 = vweird.f32 %v1368
        %vm1469 = vweird.f32 %v1462
        %vm1470 = vmor %vm1468, %vm1469
        %v1471 = vsel %vm1470, %v1462, %v1467
        %v1472 = vrsqrt.pop %v1369
        %v1473 = vmul.f32 %v1472, %v1369
        %v1474 = vmul.f32 %v1473, %v1472
        %v1475 = vmul.f32 0.5, %v1474
        %v1476 = vsub.f32 1.5, %v1475
        %v1477 = vmul.f32 %v1472, %v1476
        %vm1478 = vweird.f32 %v1369
        %vm1479 = vweird.f32 %v1472
        %vm1480 = vmor %vm1478, %vm1479
        %v1481 = vsel %vm1480, %v1472, %v1477
        %v1482 = vrsqrt.pop %v1370
        %v1483 = vmul.f32 %v1482, %v1370
        %v1484 = vmul.f32 %v1483, %v1482
        %v1485 = vmul.f32 0.5, %v1484
        %v1486 = vsub.f32 1.5, %v1485
        %v1487 = vmul.f32 %v1482, %v1486
        %vm1488 = vweird.f32 %v1370
        %vm1489 = vweird.f32 %v1482
        %vm1490 = vmor %vm1488, %vm1489
        %v1491 = vsel %vm1490, %v1482, %v1487
        %v1492 = vrsqrt.pop %v1371
        %v1493 = vmul.f32 %v1492, %v1371
        %v1494 = vmul.f32 %v1493, %v1492
        %v1495 = vmul.f32 0.5, %v1494
        %v1496 = vsub.f32 1.5, %v1495
        %v1497 = vmul.f32 %v1492, %v1496
        %vm1498 = vweird.f32 %v1371
        %vm1499 = vweird.f32 %v1492
        %vm1500 = vmor %vm1498, %vm1499
        %v1501 = vsel %vm1500, %v1492, %v1497
        %v1502 = vrsqrt.pop %v1372
        %v1503 = vmul.f32 %v1502, %v1372
        %v1504 = vmul.f32 %v1503, %v1502
        %v1505 = vmul.f32 0.5, %v1504
        %v1506 = vsub.f32 1.5, %v1505
        %v1507 = vmul.f32 %v1502, %v1506
        %vm1508 = vweird.f32 %v1372
        %vm1509 = vweird.f32 %v1502
        %vm1510 = vmor %vm1508, %vm1509
        %v1511 = vsel %vm1510, %v1502, %v1507
        %v1512 = vrsqrt.pop %v1373
        %v1513 = vmul.f32 %v1512, %v1373
        %v1514 = vmul.f32 %v1513, %v1512
        %v1515 = vmul.f32 0.5, %v1514
        %v1516 = vsub.f32 1.5, %v1515
        %v1517 = vmul.f32 %v1512, %v1516
        %vm1518 = vweird.f32 %v1373
        %vm1519 = vweird.f32 %v1512
        %vm1520 = vmor %vm1518, %vm1519
        %v1521 = vsel %vm1520, %v1512, %v1517
        %v1522 = vrsqrt.pop %v1374
        %v1523 = vmul.f32 %v1522, %v1374
        %v1524 = vmul.f32 %v1523, %v1522
        %v1525 = vmul.f32 0.5, %v1524
        %v1526 = vsub.f32 1.5, %v1525
        %v1527 = vmul.f32 %v1522, %v1526
        %vm1528 = vweird.f32 %v1374
        %vm1529 = vweird.f32 %v1522
        %vm1530 = vmor %vm1528, %vm1529
        %v1531 = vsel %vm1530, %v1522, %v1527
        %v1532 = vrsqrt.pop %v1375
        %v1533 = vmul.f32 %v1532, %v1375
        %v1534 = vmul.f32 %v1533, %v1532
        %v1535 = vmul.f32 0.5, %v1534
        %v1536 = vsub.f32 1.5, %v1535
        %v1537 = vmul.f32 %v1532, %v1536
        %vm1538 = vweird.f32 %v1375
        %vm1539 = vweird.f32 %v1532
        %vm1540 = vmor %vm1538, %vm1539
        %v1541 = vsel %vm1540, %v1532, %v1537
        %v1542 = vrsqrt.pop %v1376
        %v1543 = vmul.f32 %v1542, %v1376
        %v1544 = vmul.f32 %v1543, %v1542
        %v1545 = vmul.f32 0.5, %v1544
        %v1546 = vsub.f32 1.5, %v1545
        %v1547 = vmul.f32 %v1542, %v1546
        %vm1548 = vweird.f32 %v1376
        %vm1549 = vweird.f32 %v1542
        %vm1550 = vmor %vm1548, %vm1549
        %v1551 = vsel %vm1550, %v1542, %v1547
        %v1552 = vrsqrt.pop %v1377
        %v1553 = vmul.f32 %v1552, %v1377
        %v1554 = vmul.f32 %v1553, %v1552
        %v1555 = vmul.f32 0.5, %v1554
        %v1556 = vsub.f32 1.5, %v1555
        %v1557 = vmul.f32 %v1552, %v1556
        %vm1558 = vweird.f32 %v1377
        %vm1559 = vweird.f32 %v1552
        %vm1560 = vmor %vm1558, %vm1559
        %v1561 = vsel %vm1560, %v1552, %v1557
        %v1562 = vrsqrt.pop %v1378
        %v1563 = vmul.f32 %v1562, %v1378
        %v1564 = vmul.f32 %v1563, %v1562
        %v1565 = vmul.f32 0.5, %v1564
        %v1566 = vsub.f32 1.5, %v1565
        %v1567 = vmul.f32 %v1562, %v1566
        %vm1568 = vweird.f32 %v1378
        %vm1569 = vweird.f32 %v1562
        %vm1570 = vmor %vm1568, %vm1569
        %v1571 = vsel %vm1570, %v1562, %v1567
        %v1572 = vrsqrt.pop %v1379
        %v1573 = vmul.f32 %v1572, %v1379
        %v1574 = vmul.f32 %v1573, %v1572
        %v1575 = vmul.f32 0.5, %v1574
        %v1576 = vsub.f32 1.5, %v1575
        %v1577 = vmul.f32 %v1572, %v1576
        %vm1578 = vweird.f32 %v1379
        %vm1579 = vweird.f32 %v1572
        %vm1580 = vmor %vm1578, %vm1579
        %v1581 = vsel %vm1580, %v1572, %v1577
        %v1582 = vrsqrt.pop %v1380
        %v1583 = vmul.f32 %v1582, %v1380
        %v1584 = vmul.f32 %v1583, %v1582
        %v1585 = vmul.f32 0.5, %v1584
        %v1586 = vsub.f32 1.5, %v1585
        %v1587 = vmul.f32 %v1582, %v1586
        %vm1588 = vweird.f32 %v1380
        %vm1589 = vweird.f32 %v1582
        %vm1590 = vmor %vm1588, %vm1589
        %v1591 = vsel %vm1590, %v1582, %v1587
        %v1592 = vrsqrt.pop %v1381
        %v1593 = vmul.f32 %v1592, %v1381
        %v1594 = vmul.f32 %v1593, %v1592
        %v1595 = vmul.f32 0.5, %v1594
        %v1596 = vsub.f32 1.5, %v1595
        %v1597 = vmul.f32 %v1592, %v1596
        %vm1598 = vweird.f32 %v1381
        %vm1599 = vweird.f32 %v1592
        %vm1600 = vmor %vm1598, %vm1599
        %v1601 = vsel %vm1600, %v1592, %v1597
        %v1602 = vrsqrt.pop %v1382
        %v1603 = vmul.f32 %v1602, %v1382
        %v1604 = vmul.f32 %v1603, %v1602
        %v1605 = vmul.f32 0.5, %v1604
        %v1606 = vsub.f32 1.5, %v1605
        %v1607 = vmul.f32 %v1602, %v1606
        %vm1608 = vweird.f32 %v1382
        %vm1609 = vweird.f32 %v1602
        %vm1610 = vmor %vm1608, %vm1609
        %v1611 = vsel %vm1610, %v1602, %v1607
        %v1612 = vrsqrt.pop %v1383
        %v1613 = vmul.f32 %v1612, %v1383
        %v1614 = vmul.f32 %v1613, %v1612
        %v1615 = vmul.f32 0.5, %v1614
        %v1616 = vsub.f32 1.5, %v1615
        %v1617 = vmul.f32 %v1612, %v1616
        %vm1618 = vweird.f32 %v1383
        %vm1619 = vweird.f32 %v1612
        %vm1620 = vmor %vm1618, %vm1619
        %v1621 = vsel %vm1620, %v1612, %v1617
        %v1622 = vrsqrt.pop %v1384
        %v1623 = vmul.f32 %v1622, %v1384
        %v1624 = vmul.f32 %v1623, %v1622
        %v1625 = vmul.f32 0.5, %v1624
        %v1626 = vsub.f32 1.5, %v1625
        %v1627 = vmul.f32 %v1622, %v1626
        %vm1628 = vweird.f32 %v1384
        %vm1629 = vweird.f32 %v1622
        %vm1630 = vmor %vm1628, %vm1629
        %v1631 = vsel %vm1630, %v1622, %v1627
        %v1632 = vrsqrt.pop %v1385
        %v1633 = vmul.f32 %v1632, %v1385
        %v1634 = vmul.f32 %v1633, %v1632
        %v1635 = vmul.f32 0.5, %v1634
        %v1636 = vsub.f32 1.5, %v1635
        %v1637 = vmul.f32 %v1632, %v1636
        %vm1638 = vweird.f32 %v1385
        %vm1639 = vweird.f32 %v1632
        %vm1640 = vmor %vm1638, %vm1639
        %v1641 = vsel %vm1640, %v1632, %v1637
        %v1642 = vrsqrt.pop %v1386
        %v1643 = vmul.f32 %v1642, %v1386
        %v1644 = vmul.f32 %v1643, %v1642
        %v1645 = vmul.f32 0.5, %v1644
        %v1646 = vsub.f32 1.5, %v1645
        %v1647 = vmul.f32 %v1642, %v1646
        %vm1648 = vweird.f32 %v1386
        %vm1649 = vweird.f32 %v1642
        %vm1650 = vmor %vm1648, %vm1649
        %v1651 = vsel %vm1650, %v1642, %v1647
        %v1652 = vrsqrt.pop %v1387
        %v1653 = vmul.f32 %v1652, %v1387
        %v1654 = vmul.f32 %v1653, %v1652
        %v1655 = vmul.f32 0.5, %v1654
        %v1656 = vsub.f32 1.5, %v1655
        %v1657 = vmul.f32 %v1652, %v1656
        %vm1658 = vweird.f32 %v1387
        %vm1659 = vweird.f32 %v1652
        %vm1660 = vmor %vm1658, %vm1659
        %v1661 = vsel %vm1660, %v1652, %v1657
        %v1662 = vrsqrt.pop %v1388
        %v1663 = vmul.f32 %v1662, %v1388
        %v1664 = vmul.f32 %v1663, %v1662
        %v1665 = vmul.f32 0.5, %v1664
        %v1666 = vsub.f32 1.5, %v1665
        %v1667 = vmul.f32 %v1662, %v1666
        %vm1668 = vweird.f32 %v1388
        %vm1669 = vweird.f32 %v1662
        %vm1670 = vmor %vm1668, %vm1669
        %v1671 = vsel %vm1670, %v1662, %v1667
        %v1672 = vrsqrt.pop %v1389
        %v1673 = vmul.f32 %v1672, %v1389
        %v1674 = vmul.f32 %v1673, %v1672
        %v1675 = vmul.f32 0.5, %v1674
        %v1676 = vsub.f32 1.5, %v1675
        %v1677 = vmul.f32 %v1672, %v1676
        %vm1678 = vweird.f32 %v1389
        %vm1679 = vweird.f32 %v1672
        %vm1680 = vmor %vm1678, %vm1679
        %v1681 = vsel %vm1680, %v1672, %v1677
        %v1682 = vrsqrt.pop %v1390
        %v1683 = vmul.f32 %v1682, %v1390
        %v1684 = vmul.f32 %v1683, %v1682
        %v1685 = vmul.f32 0.5, %v1684
        %v1686 = vsub.f32 1.5, %v1685
        %v1687 = vmul.f32 %v1682, %v1686
        %vm1688 = vweird.f32 %v1390
        %vm1689 = vweird.f32 %v1682
        %vm1690 = vmor %vm1688, %vm1689
        %v1691 = vsel %vm1690, %v1682, %v1687
        %v1692 = vrsqrt.pop %v1391
        %v1693 = vmul.f32 %v1692, %v1391
        %v1694 = vmul.f32 %v1693, %v1692
        %v1695 = vmul.f32 0.5, %v1694
        %v1696 = vsub.f32 1.5, %v1695
        %v1697 = vmul.f32 %v1692, %v1696
        %vm1698 = vweird.f32 %v1391
        %vm1699 = vweird.f32 %v1692
        %vm1700 = vmor %vm1698, %vm1699
        %v1701 = vsel %vm1700, %v1692, %v1697
        %v1702 = vrsqrt.pop %v1392
        %v1703 = vmul.f32 %v1702, %v1392
        %v1704 = vmul.f32 %v1703, %v1702
        %v1705 = vmul.f32 0.5, %v1704
        %v1706 = vsub.f32 1.5, %v1705
        %v1707 = vmul.f32 %v1702, %v1706
        %vm1708 = vweird.f32 %v1392
        %vm1709 = vweird.f32 %v1702
        %vm1710 = vmor %vm1708, %vm1709
        %v1711 = vsel %vm1710, %v1702, %v1707
        %v1712 = vrsqrt.pop %v1393
        %v1713 = vmul.f32 %v1712, %v1393
        %v1714 = vmul.f32 %v1713, %v1712
        %v1715 = vmul.f32 0.5, %v1714
        %v1716 = vsub.f32 1.5, %v1715
        %v1717 = vmul.f32 %v1712, %v1716
        %vm1718 = vweird.f32 %v1393
        %vm1719 = vweird.f32 %v1712
        %vm1720 = vmor %vm1718, %vm1719
        %v1721 = vsel %vm1720, %v1712, %v1717
        %v1722 = vrsqrt.pop %v1394
        %v1723 = vmul.f32 %v1722, %v1394
        %v1724 = vmul.f32 %v1723, %v1722
        %v1725 = vmul.f32 0.5, %v1724
        %v1726 = vsub.f32 1.5, %v1725
        %v1727 = vmul.f32 %v1722, %v1726
        %vm1728 = vweird.f32 %v1394
        %vm1729 = vweird.f32 %v1722
        %vm1730 = vmor %vm1728, %vm1729
        %v1731 = vsel %vm1730, %v1722, %v1727
        %v1732 = vrsqrt.pop %v1395
        %v1733 = vmul.f32 %v1732, %v1395
        %v1734 = vmul.f32 %v1733, %v1732
        %v1735 = vmul.f32 0.5, %v1734
        %v1736 = vsub.f32 1.5, %v1735
        %v1737 = vmul.f32 %v1732, %v1736
        %vm1738 = vweird.f32 %v1395
        %vm1739 = vweird.f32 %v1732
        %vm1740 = vmor %vm1738, %vm1739
        %v1741 = vsel %vm1740, %v1732, %v1737
        %v1742 = vrsqrt.pop %v1396
        %v1743 = vmul.f32 %v1742, %v1396
        %v1744 = vmul.f32 %v1743, %v1742
        %v1745 = vmul.f32 0.5, %v1744
        %v1746 = vsub.f32 1.5, %v1745
        %v1747 = vmul.f32 %v1742, %v1746
        %vm1748 = vweird.f32 %v1396
        %vm1749 = vweird.f32 %v1742
        %vm1750 = vmor %vm1748, %vm1749
        %v1751 = vsel %vm1750, %v1742, %v1747
        %v1752 = vrsqrt.pop %v1397
        %v1753 = vmul.f32 %v1752, %v1397
        %v1754 = vmul.f32 %v1753, %v1752
        %v1755 = vmul.f32 0.5, %v1754
        %v1756 = vsub.f32 1.5, %v1755
        %v1757 = vmul.f32 %v1752, %v1756
        %vm1758 = vweird.f32 %v1397
        %vm1759 = vweird.f32 %v1752
        %vm1760 = vmor %vm1758, %vm1759
        %v1761 = vsel %vm1760, %v1752, %v1757
        %v1762 = vrsqrt.pop %v1398
        %v1763 = vmul.f32 %v1762, %v1398
        %v1764 = vmul.f32 %v1763, %v1762
        %v1765 = vmul.f32 0.5, %v1764
        %v1766 = vsub.f32 1.5, %v1765
        %v1767 = vmul.f32 %v1762, %v1766
        %vm1768 = vweird.f32 %v1398
        %vm1769 = vweird.f32 %v1762
        %vm1770 = vmor %vm1768, %vm1769
        %v1771 = vsel %vm1770, %v1762, %v1767
        %v1772 = vrsqrt.pop %v1399
        %v1773 = vmul.f32 %v1772, %v1399
        %v1774 = vmul.f32 %v1773, %v1772
        %v1775 = vmul.f32 0.5, %v1774
        %v1776 = vsub.f32 1.5, %v1775
        %v1777 = vmul.f32 %v1772, %v1776
        %vm1778 = vweird.f32 %v1399
        %vm1779 = vweird.f32 %v1772
        %vm1780 = vmor %vm1778, %vm1779
        %v1781 = vsel %vm1780, %v1772, %v1777
        %v1782 = vrsqrt.pop %v1400
        %v1783 = vmul.f32 %v1782, %v1400
        %v1784 = vmul.f32 %v1783, %v1782
        %v1785 = vmul.f32 0.5, %v1784
        %v1786 = vsub.f32 1.5, %v1785
        %v1787 = vmul.f32 %v1782, %v1786
        %vm1788 = vweird.f32 %v1400
        %vm1789 = vweird.f32 %v1782
        %vm1790 = vmor %vm1788, %vm1789
        %v1791 = vsel %vm1790, %v1782, %v1787
        %v1792 = vrsqrt.pop %v1401
        %v1793 = vmul.f32 %v1792, %v1401
        %v1794 = vmul.f32 %v1793, %v1792
        %v1795 = vmul.f32 0.5, %v1794
        %v1796 = vsub.f32 1.5, %v1795
        %v1797 = vmul.f32 %v1792, %v1796
        %vm1798 = vweird.f32 %v1401
        %vm1799 = vweird.f32 %v1792
        %vm1800 = vmor %vm1798, %vm1799
        %v1801 = vsel %vm1800, %v1792, %v1797
        %v1802 = vmul.f32 %v1162, %v1411
        %v1803 = vmul.f32 %v1163, %v1421
        %v1804 = vmul.f32 %v1164, %v1431
        %v1805 = vmul.f32 %v1165, %v1441
        %v1806 = vmul.f32 %v1166, %v1451
        %v1807 = vmul.f32 %v1167, %v1461
        %v1808 = vmul.f32 %v1168, %v1471
        %v1809 = vmul.f32 %v1169, %v1481
        %v1810 = vmul.f32 %v1170, %v1491
        %v1811 = vmul.f32 %v1171, %v1501
        %v1812 = vmul.f32 %v1172, %v1511
        %v1813 = vmul.f32 %v1173, %v1521
        %v1814 = vmul.f32 %v1174, %v1531
        %v1815 = vmul.f32 %v1175, %v1541
        %v1816 = vmul.f32 %v1176, %v1551
        %v1817 = vmul.f32 %v1177, %v1561
        %v1818 = vmul.f32 %v1178, %v1571
        %v1819 = vmul.f32 %v1179, %v1581
        %v1820 = vmul.f32 %v1180, %v1591
        %v1821 = vmul.f32 %v1181, %v1601
        %v1822 = vmul.f32 %v1182, %v1611
        %v1823 = vmul.f32 %v1183, %v1621
        %v1824 = vmul.f32 %v1184, %v1631
        %v1825 = vmul.f32 %v1185, %v1641
        %v1826 = vmul.f32 %v1186, %v1651
        %v1827 = vmul.f32 %v1187, %v1661
        %v1828 = vmul.f32 %v1188, %v1671
        %v1829 = vmul.f32 %v1189, %v1681
        %v1830 = vmul.f32 %v1190, %v1691
        %v1831 = vmul.f32 %v1191, %v1701
        %v1832 = vmul.f32 %v1192, %v1711
        %v1833 = vmul.f32 %v1193, %v1721
        %v1834 = vmul.f32 %v1194, %v1731
        %v1835 = vmul.f32 %v1195, %v1741
        %v1836 = vmul.f32 %v1196, %v1751
        %v1837 = vmul.f32 %v1197, %v1761
        %v1838 = vmul.f32 %v1198, %v1771
        %v1839 = vmul.f32 %v1199, %v1781
        %v1840 = vmul.f32 %v1200, %v1791
        %v1841 = vmul.f32 %v1201, %v1801
        %v1842 = vperm.slane %v1033, 0
        %v1843 = vmul.f32 %v1802, %v1842
        %v1844 = vmul.f32 %v1803, %v1842
        %v1845 = vmul.f32 %v1804, %v1842
        %v1846 = vmul.f32 %v1805, %v1842
        %v1847 = vmul.f32 %v1806, %v1842
        %v1848 = vmul.f32 %v1807, %v1842
        %v1849 = vmul.f32 %v1808, %v1842
        %v1850 = vmul.f32 %v1809, %v1842
        %v1851 = vmul.f32 %v1810, %v1842
        %v1852 = vmul.f32 %v1811, %v1842
        %v1853 = vmul.f32 %v1812, %v1842
        %v1854 = vmul.f32 %v1813, %v1842
        %v1855 = vmul.f32 %v1814, %v1842
        %v1856 = vmul.f32 %v1815, %v1842
        %v1857 = vmul.f32 %v1816, %v1842
        %v1858 = vmul.f32 %v1817, %v1842
        %v1859 = vmul.f32 %v1818, %v1842
        %v1860 = vmul.f32 %v1819, %v1842
        %v1861 = vmul.f32 %v1820, %v1842
        %v1862 = vmul.f32 %v1821, %v1842
        %v1863 = vmul.f32 %v1822, %v1842
        %v1864 = vmul.f32 %v1823, %v1842
        %v1865 = vmul.f32 %v1824, %v1842
        %v1866 = vmul.f32 %v1825, %v1842
        %v1867 = vmul.f32 %v1826, %v1842
        %v1868 = vmul.f32 %v1827, %v1842
        %v1869 = vmul.f32 %v1828, %v1842
        %v1870 = vmul.f32 %v1829, %v1842
        %v1871 = vmul.f32 %v1830, %v1842
        %v1872 = vmul.f32 %v1831, %v1842
        %v1873 = vmul.f32 %v1832, %v1842
        %v1874 = vmul.f32 %v1833, %v1842
        %v1875 = vmul.f32 %v1834, %v1842
        %v1876 = vmul.f32 %v1835, %v1842
        %v1877 = vmul.f32 %v1836, %v1842
        %v1878 = vmul.f32 %v1837, %v1842
        %v1879 = vmul.f32 %v1838, %v1842
        %v1880 = vmul.f32 %v1839, %v1842
        %v1881 = vmul.f32 %v1840, %v1842
        %v1882 = vmul.f32 %v1841, %v1842
        %v1883 = vperm.slane %v1034, 0
        %v1884 = vadd.f32 %v1843, %v1883
        %v1885 = vadd.f32 %v1844, %v1883
        %v1886 = vadd.f32 %v1845, %v1883
        %v1887 = vadd.f32 %v1846, %v1883
        %v1888 = vadd.f32 %v1847, %v1883
        %v1889 = vadd.f32 %v1848, %v1883
        %v1890 = vadd.f32 %v1849, %v1883
        %v1891 = vadd.f32 %v1850, %v1883
        %v1892 = vadd.f32 %v1851, %v1883
        %v1893 = vadd.f32 %v1852, %v1883
        %v1894 = vadd.f32 %v1853, %v1883
        %v1895 = vadd.f32 %v1854, %v1883
        %v1896 = vadd.f32 %v1855, %v1883
        %v1897 = vadd.f32 %v1856, %v1883
        %v1898 = vadd.f32 %v1857, %v1883
        %v1899 = vadd.f32 %v1858, %v1883
        %v1900 = vadd.f32 %v1859, %v1883
        %v1901 = vadd.f32 %v1860, %v1883
        %v1902 = vadd.f32 %v1861, %v1883
        %v1903 = vadd.f32 %v1862, %v1883
        %v1904 = vadd.f32 %v1863, %v1883
        %v1905 = vadd.f32 %v1864, %v1883
        %v1906 = vadd.f32 %v1865, %v1883
        %v1907 = vadd.f32 %v1866, %v1883
        %v1908 = vadd.f32 %v1867, %v1883
        %v1909 = vadd.f32 %v1868, %v1883
        %v1910 = vadd.f32 %v1869, %v1883
        %v1911 = vadd.f32 %v1870, %v1883
        %v1912 = vadd.f32 %v1871, %v1883
        %v1913 = vadd.f32 %v1872, %v1883
        %v1914 = vadd.f32 %v1873, %v1883
        %v1915 = vadd.f32 %v1874, %v1883
        %v1916 = vadd.f32 %v1875, %v1883
        %v1917 = vadd.f32 %v1876, %v1883
        %v1918 = vadd.f32 %v1877, %v1883
        %v1919 = vadd.f32 %v1878, %v1883
        %v1920 = vadd.f32 %v1879, %v1883
        %v1921 = vadd.f32 %v1880, %v1883
        %v1922 = vadd.f32 %v1881, %v1883
        %v1923 = vadd.f32 %v1882, %v1883
        %v1924 = vmax.f32 %v1884, 0.0
        %v1925 = vmax.f32 %v1885, 0.0
        %v1926 = vmax.f32 %v1886, 0.0
        %v1927 = vmax.f32 %v1887, 0.0
        %v1928 = vmax.f32 %v1888, 0.0
        %v1929 = vmax.f32 %v1889, 0.0
        %v1930 = vmax.f32 %v1890, 0.0
        %v1931 = vmax.f32 %v1891, 0.0
        %v1932 = vmax.f32 %v1892, 0.0
        %v1933 = vmax.f32 %v1893, 0.0
        %v1934 = vmax.f32 %v1894, 0.0
        %v1935 = vmax.f32 %v1895, 0.0
        %v1936 = vmax.f32 %v1896, 0.0
        %v1937 = vmax.f32 %v1897, 0.0
        %v1938 = vmax.f32 %v1898, 0.0
        %v1939 = vmax.f32 %v1899, 0.0
        %v1940 = vmax.f32 %v1900, 0.0
        %v1941 = vmax.f32 %v1901, 0.0
        %v1942 = vmax.f32 %v1902, 0.0
        %v1943 = vmax.f32 %v1903, 0.0
        %v1944 = vmax.f32 %v1904, 0.0
        %v1945 = vmax.f32 %v1905, 0.0
        %v1946 = vmax.f32 %v1906, 0.0
        %v1947 = vmax.f32 %v1907, 0.0
        %v1948 = vmax.f32 %v1908, 0.0
        %v1949 = vmax.f32 %v1909, 0.0
        %v1950 = vmax.f32 %v1910, 0.0
        %v1951 = vmax.f32 %v1911, 0.0
        %v1952 = vmax.f32 %v1912, 0.0
        %v1953 = vmax.f32 %v1913, 0.0
        %v1954 = vmax.f32 %v1914, 0.0
        %v1955 = vmax.f32 %v1915, 0.0
        %v1956 = vmax.f32 %v1916, 0.0
        %v1957 = vmax.f32 %v1917, 0.0
        %v1958 = vmax.f32 %v1918, 0.0
        %v1959 = vmax.f32 %v1919, 0.0
        %v1960 = vmax.f32 %v1920, 0.0
        %v1961 = vmax.f32 %v1921, 0.0
        %v1962 = vmax.f32 %v1922, 0.0
        %v1963 = vmax.f32 %v1923, 0.0
        %1964 = vst [vmem:[#allocation2] sm:$0x3] 0.0
        %1965 = vst [vmem:[#allocation2 + $0x2] sm:$0xff] %v1924
        %1966 = vst [vmem:[#allocation2 + $0xa] sm:$0xff] %v1925
        %1967 = vst [vmem:[#allocation2 + $0x12] sm:$0xff] %v1926
        %1968 = vst [vmem:[#allocation2 + $0x1a] sm:$0xff] %v1927
        %1969 = vst [vmem:[#allocation2 + $0x22] sm:$0xff] %v1928
        %1970 = vst [vmem:[#allocation2 + $0x2a] sm:$0xff] %v1929
        %1971 = vst [vmem:[#allocation2 + $0x32] sm:$0xff] %v1930
        %1972 = vst [vmem:[#allocation2 + $0x3a] sm:$0xff] %v1931
        %1973 = vst [vmem:[#allocation2 + $0x42] sm:$0xff] %v1932
        %1974 = vst [vmem:[#allocation2 + $0x4a] sm:$0xff] %v1933
        %1975 = vst [vmem:[#allocation2 + $0x52] sm:$0xff] %v1934
        %1976 = vst [vmem:[#allocation2 + $0x5a] sm:$0xff] %v1935
        %1977 = vst [vmem:[#allocation2 + $0x62] sm:$0xff] %v1936
        %1978 = vst [vmem:[#allocation2 + $0x6a] sm:$0xff] %v1937
        %1979 = vst [vmem:[#allocation2 + $0x72] sm:$0xff] %v1938
        %1980 = vst [vmem:[#allocation2 + $0x7a] sm:$0xff] %v1939
        %1981 = vst [vmem:[#allocation2 + $0x82] sm:$0xff] %v1940
        %1982 = vst [vmem:[#allocation2 + $0x8a] sm:$0xff] %v1941
        %1983 = vst [vmem:[#allocation2 + $0x92] sm:$0xff] %v1942
        %1984 = vst [vmem:[#allocation2 + $0x9a] sm:$0xff] %v1943
        %1985 = vst [vmem:[#allocation2 + $0xa2] sm:$0xff] %v1944
        %1986 = vst [vmem:[#allocation2 + $0xaa] sm:$0xff] %v1945
        %1987 = vst [vmem:[#allocation2 + $0xb2] sm:$0xff] %v1946
        %1988 = vst [vmem:[#allocation2 + $0xba] sm:$0xff] %v1947
        %1989 = vst [vmem:[#allocation2 + $0xc2] sm:$0xff] %v1948
        %1990 = vst [vmem:[#allocation2 + $0xca] sm:$0xff] %v1949
        %1991 = vst [vmem:[#allocation2 + $0xd2] sm:$0xff] %v1950
        %1992 = vst [vmem:[#allocation2 + $0xda] sm:$0xff] %v1951
        %1993 = vst [vmem:[#allocation2 + $0xe2] sm:$0xff] %v1952
        %1994 = vst [vmem:[#allocation2 + $0xea] sm:$0xff] %v1953
        %1995 = vst [vmem:[#allocation2 + $0xf2] sm:$0xff] %v1954
        %1996 = vst [vmem:[#allocation2 + $0xfa] sm:$0xff] %v1955
        %1997 = vst [vmem:[#allocation2 + $0x102] sm:$0xff] %v1956
        %1998 = vst [vmem:[#allocation2 + $0x10a] sm:$0xff] %v1957
        %1999 = vst [vmem:[#allocation2 + $0x112] sm:$0xff] %v1958
        %2000 = vst [vmem:[#allocation2 + $0x11a] sm:$0xff] %v1959
        %2001 = vst [vmem:[#allocation2 + $0x122] sm:$0xff] %v1960
        %2002 = vst [vmem:[#allocation2 + $0x12a] sm:$0xff] %v1961
        %2003 = vst [vmem:[#allocation2 + $0x132] sm:$0xff] %v1962
        %2004 = vst [vmem:[#allocation2 + $0x13a] sm:$0xff] %v1963
        %2005 = vst [vmem:[#allocation2 + $0x142] sm:$0x3] 0.0
        %v2006 = vld [vmem:[#allocation2] ss:$4 sm:$0xff]
        %s2007 = scalar_lea.vmem [#allocation2], 32
        %v2008 = vld [vmem:[%s2007] ss:$4 sm:$0xff]
        %s2009 = scalar_lea.vmem [#allocation2], 64
        %v2010 = vld [vmem:[%s2009] ss:$4 sm:$0xff]
        %s2011 = scalar_lea.vmem [#allocation2], 96
        %v2012 = vld [vmem:[%s2011] ss:$4 sm:$0xff]
        %s2013 = scalar_lea.vmem [#allocation2], 128
        %v2014 = vld [vmem:[%s2013] ss:$4 sm:$0xff]
        %s2015 = scalar_lea.vmem [#allocation2], 160
        %v2016 = vld [vmem:[%s2015] ss:$4 sm:$0xff]
        %s2017 = scalar_lea.vmem [#allocation2], 192
        %v2018 = vld [vmem:[%s2017] ss:$4 sm:$0xff]
        %s2019 = scalar_lea.vmem [#allocation2], 224
        %v2020 = vld [vmem:[%s2019] ss:$4 sm:$0xff]
        %s2021 = scalar_lea.vmem [#allocation2], 256
        %v2022 = vld [vmem:[%s2021] ss:$4 sm:$0xff]
        %s2023 = scalar_lea.vmem [#allocation2], 288
        %v2024 = vld [vmem:[%s2023] ss:$4 sm:$0xff]
        %v2025 = vld [vmem:[#allocation6] sm:$0xff]
        %v2026 = vld [vmem:[#allocation6 + $0x8] sm:$0xff]
        %v2027 = vld [vmem:[#allocation6 + $0x10] sm:$0xff]
        %v2028 = vld [vmem:[#allocation6 + $0x18] sm:$0xff]
        %v2029 = vld [vmem:[#allocation6 + $0x20] sm:$0xff]
        %v2030 = vld [vmem:[#allocation6 + $0x28] sm:$0xff]
        %v2031 = vld [vmem:[#allocation6 + $0x30] sm:$0xff]
        %v2032 = vld [vmem:[#allocation6 + $0x38] sm:$0xff]
        %v2033 = vld [vmem:[#allocation6 + $0x40] sm:$0xff]
        %v2034 = vld [vmem:[#allocation6 + $0x48] sm:$0xff]
        %v2035 = vld [vmem:[#allocation6 + $0x50] sm:$0xff]
        %v2036 = vld [vmem:[#allocation6 + $0x58] sm:$0xff]
        %v2037 = vld [vmem:[#allocation6 + $0x60] sm:$0xff]
        %v2038 = vld [vmem:[#allocation6 + $0x68] sm:$0xff]
        %v2039 = vld [vmem:[#allocation6 + $0x70] sm:$0xff]
        %v2040 = vld [vmem:[#allocation6 + $0x78] sm:$0xff]
        %s2041 = scalar_lea.vmem [#allocation2], 1
        %v2042 = vld [vmem:[%s2041] ss:$4 sm:$0xff]
        %s2043 = scalar_lea.vmem [#allocation2], 33
        %v2044 = vld [vmem:[%s2043] ss:$4 sm:$0xff]
        %s2045 = scalar_lea.vmem [#allocation2], 65
        %v2046 = vld [vmem:[%s2045] ss:$4 sm:$0xff]
        %s2047 = scalar_lea.vmem [#allocation2], 97
        %v2048 = vld [vmem:[%s2047] ss:$4 sm:$0xff]
        %s2049 = scalar_lea.vmem [#allocation2], 129
        %v2050 = vld [vmem:[%s2049] ss:$4 sm:$0xff]
        %s2051 = scalar_lea.vmem [#allocation2], 161
        %v2052 = vld [vmem:[%s2051] ss:$4 sm:$0xff]
        %s2053 = scalar_lea.vmem [#allocation2], 193
        %v2054 = vld [vmem:[%s2053] ss:$4 sm:$0xff]
        %s2055 = scalar_lea.vmem [#allocation2], 225
        %v2056 = vld [vmem:[%s2055] ss:$4 sm:$0xff]
        %s2057 = scalar_lea.vmem [#allocation2], 257
        %v2058 = vld [vmem:[%s2057] ss:$4 sm:$0xff]
        %s2059 = scalar_lea.vmem [#allocation2], 289
        %v2060 = vld [vmem:[%s2059] ss:$4 sm:$0xff]
        %s2061 = scalar_lea.vmem [#allocation6], 128
        %v2062 = vld [vmem:[%s2061] sm:$0xff]
        %v2063 = vld [vmem:[%s2061 + $0x8] sm:$0xff]
        %v2064 = vld [vmem:[%s2061 + $0x10] sm:$0xff]
        %v2065 = vld [vmem:[%s2061 + $0x18] sm:$0xff]
        %v2066 = vld [vmem:[%s2061 + $0x20] sm:$0xff]
        %v2067 = vld [vmem:[%s2061 + $0x28] sm:$0xff]
        %v2068 = vld [vmem:[%s2061 + $0x30] sm:$0xff]
        %v2069 = vld [vmem:[%s2061 + $0x38] sm:$0xff]
        %v2070 = vld [vmem:[%s2061 + $0x40] sm:$0xff]
        %v2071 = vld [vmem:[%s2061 + $0x48] sm:$0xff]
        %v2072 = vld [vmem:[%s2061 + $0x50] sm:$0xff]
        %v2073 = vld [vmem:[%s2061 + $0x58] sm:$0xff]
        %v2074 = vld [vmem:[%s2061 + $0x60] sm:$0xff]
        %v2075 = vld [vmem:[%s2061 + $0x68] sm:$0xff]
        %v2076 = vld [vmem:[%s2061 + $0x70] sm:$0xff]
        %v2077 = vld [vmem:[%s2061 + $0x78] sm:$0xff]
        %2078 = vmatpush.msra.mxu0 %v2077
        %2079 = vmatpush.msra.mxu0 %v2076
        %2080 = vmatpush.msra.mxu0 %v2075
        %2081 = vmatpush.msra.mxu0 %v2074
        %2082 = vmatpush.msra.mxu0 %v2073
        %2083 = vmatpush.msra.mxu0 %v2072
        %2084 = vmatpush.msra.mxu0 %v2071
        %2085 = vmatpush.msra.mxu0 %v2070
        %2086 = vmatpush.msra.mxu0 %v2069
        %2087 = vmatpush.msra.mxu0 %v2068
        %2088 = vmatpush.msra.mxu0 %v2067
        %2089 = vmatpush.msra.mxu0 %v2066
        %2090 = vmatpush.msra.mxu0 %v2065
        %2091 = vmatpush.msra.mxu0 %v2064
        %2092 = vmatpush.msra.mxu0 %v2063
        %2093 = vmatpush.msra.mxu0 %v2062
        %2094 = vmatmul.f32.gmra.mxu0 %v2042
        %v2095 = vpop.f32.mrf.mxu0
        %v2096 = vadd.f32 0.0, %v2095
        %2097 = vmatmul.f32.gmra.mxu0 %v2044
        %v2098 = vpop.f32.mrf.mxu0
        %v2099 = vadd.f32 0.0, %v2098
        %2100 = vmatmul.f32.gmra.mxu0 %v2046
        %v2101 = vpop.f32.mrf.mxu0
        %v2102 = vadd.f32 0.0, %v2101
        %2103 = vmatmul.f32.gmra.mxu0 %v2048
        %v2104 = vpop.f32.mrf.mxu0
        %v2105 = vadd.f32 0.0, %v2104
        %2106 = vmatmul.f32.gmra.mxu0 %v2050
        %v2107 = vpop.f32.mrf.mxu0
        %v2108 = vadd.f32 0.0, %v2107
        %2109 = vmatmul.f32.gmra.mxu0 %v2052
        %v2110 = vpop.f32.mrf.mxu0
        %v2111 = vadd.f32 0.0, %v2110
        %2112 = vmatmul.f32.gmra.mxu0 %v2054
        %v2113 = vpop.f32.mrf.mxu0
        %v2114 = vadd.f32 0.0, %v2113
        %2115 = vmatmul.f32.gmra.mxu0 %v2056
        %v2116 = vpop.f32.mrf.mxu0
        %v2117 = vadd.f32 0.0, %v2116
        %2118 = vmatmul.f32.gmra.mxu0 %v2058
        %v2119 = vpop.f32.mrf.mxu0
        %v2120 = vadd.f32 0.0, %v2119
        %2121 = vmatmul.f32.gmra.mxu0 %v2060
        %v2122 = vpop.f32.mrf.mxu0
        %v2123 = vadd.f32 0.0, %v2122
        %2124 = vdwg.mxu0
        %2125 = vmatpush.msra.mxu0 %v2040
        %2126 = vmatpush.msra.mxu0 %v2039
        %2127 = vmatpush.msra.mxu0 %v2038
        %2128 = vmatpush.msra.mxu0 %v2037
        %2129 = vmatpush.msra.mxu0 %v2036
        %2130 = vmatpush.msra.mxu0 %v2035
        %2131 = vmatpush.msra.mxu0 %v2034
        %2132 = vmatpush.msra.mxu0 %v2033
        %2133 = vmatpush.msra.mxu0 %v2032
        %2134 = vmatpush.msra.mxu0 %v2031
        %2135 = vmatpush.msra.mxu0 %v2030
        %2136 = vmatpush.msra.mxu0 %v2029
        %2137 = vmatpush.msra.mxu0 %v2028
        %2138 = vmatpush.msra.mxu0 %v2027
        %2139 = vmatpush.msra.mxu0 %v2026
        %2140 = vmatpush.msra.mxu0 %v2025
        %2141 = vmatmul.f32.gmra.mxu0 %v2006
        %v2142 = vpop.f32.mrf.mxu0
        %v2143 = vadd.f32 %v2096, %v2142
        %2144 = vmatmul.f32.gmra.mxu0 %v2008
        %v2145 = vpop.f32.mrf.mxu0
        %v2146 = vadd.f32 %v2099, %v2145
        %2147 = vmatmul.f32.gmra.mxu0 %v2010
        %v2148 = vpop.f32.mrf.mxu0
        %v2149 = vadd.f32 %v2102, %v2148
        %2150 = vmatmul.f32.gmra.mxu0 %v2012
        %v2151 = vpop.f32.mrf.mxu0
        %v2152 = vadd.f32 %v2105, %v2151
        %2153 = vmatmul.f32.gmra.mxu0 %v2014
        %v2154 = vpop.f32.mrf.mxu0
        %v2155 = vadd.f32 %v2108, %v2154
        %2156 = vmatmul.f32.gmra.mxu0 %v2016
        %v2157 = vpop.f32.mrf.mxu0
        %v2158 = vadd.f32 %v2111, %v2157
        %2159 = vmatmul.f32.gmra.mxu0 %v2018
        %v2160 = vpop.f32.mrf.mxu0
        %v2161 = vadd.f32 %v2114, %v2160
        %2162 = vmatmul.f32.gmra.mxu0 %v2020
        %v2163 = vpop.f32.mrf.mxu0
        %v2164 = vadd.f32 %v2117, %v2163
        %2165 = vmatmul.f32.gmra.mxu0 %v2022
        %v2166 = vpop.f32.mrf.mxu0
        %v2167 = vadd.f32 %v2120, %v2166
        %2168 = vmatmul.f32.gmra.mxu0 %v2024
        %v2169 = vpop.f32.mrf.mxu0
        %v2170 = vadd.f32 %v2123, %v2169
        %2171 = vdwg.mxu0
        %s2172 = scalar_lea.vmem [#allocation2], 2
        %v2173 = vld [vmem:[%s2172] ss:$4 sm:$0xff]
        %s2174 = scalar_lea.vmem [#allocation2], 34
        %v2175 = vld [vmem:[%s2174] ss:$4 sm:$0xff]
        %s2176 = scalar_lea.vmem [#allocation2], 66
        %v2177 = vld [vmem:[%s2176] ss:$4 sm:$0xff]
        %s2178 = scalar_lea.vmem [#allocation2], 98
        %v2179 = vld [vmem:[%s2178] ss:$4 sm:$0xff]
        %s2180 = scalar_lea.vmem [#allocation2], 130
        %v2181 = vld [vmem:[%s2180] ss:$4 sm:$0xff]
        %s2182 = scalar_lea.vmem [#allocation2], 162
        %v2183 = vld [vmem:[%s2182] ss:$4 sm:$0xff]
        %s2184 = scalar_lea.vmem [#allocation2], 194
        %v2185 = vld [vmem:[%s2184] ss:$4 sm:$0xff]
        %s2186 = scalar_lea.vmem [#allocation2], 226
        %v2187 = vld [vmem:[%s2186] ss:$4 sm:$0xff]
        %s2188 = scalar_lea.vmem [#allocation2], 258
        %v2189 = vld [vmem:[%s2188] ss:$4 sm:$0xff]
        %s2190 = scalar_lea.vmem [#allocation2], 290
        %v2191 = vld [vmem:[%s2190] ss:$4 sm:$0xff]
        %s2192 = scalar_lea.vmem [#allocation6], 256
        %v2193 = vld [vmem:[%s2192] sm:$0xff]
        %v2194 = vld [vmem:[%s2192 + $0x8] sm:$0xff]
        %v2195 = vld [vmem:[%s2192 + $0x10] sm:$0xff]
        %v2196 = vld [vmem:[%s2192 + $0x18] sm:$0xff]
        %v2197 = vld [vmem:[%s2192 + $0x20] sm:$0xff]
        %v2198 = vld [vmem:[%s2192 + $0x28] sm:$0xff]
        %v2199 = vld [vmem:[%s2192 + $0x30] sm:$0xff]
        %v2200 = vld [vmem:[%s2192 + $0x38] sm:$0xff]
        %v2201 = vld [vmem:[%s2192 + $0x40] sm:$0xff]
        %v2202 = vld [vmem:[%s2192 + $0x48] sm:$0xff]
        %v2203 = vld [vmem:[%s2192 + $0x50] sm:$0xff]
        %v2204 = vld [vmem:[%s2192 + $0x58] sm:$0xff]
        %v2205 = vld [vmem:[%s2192 + $0x60] sm:$0xff]
        %v2206 = vld [vmem:[%s2192 + $0x68] sm:$0xff]
        %v2207 = vld [vmem:[%s2192 + $0x70] sm:$0xff]
        %v2208 = vld [vmem:[%s2192 + $0x78] sm:$0xff]
        %2209 = vmatpush.msra.mxu0 %v2208
        %2210 = vmatpush.msra.mxu0 %v2207
        %2211 = vmatpush.msra.mxu0 %v2206
        %2212 = vmatpush.msra.mxu0 %v2205
        %2213 = vmatpush.msra.mxu0 %v2204
        %2214 = vmatpush.msra.mxu0 %v2203
        %2215 = vmatpush.msra.mxu0 %v2202
        %2216 = vmatpush.msra.mxu0 %v2201
        %2217 = vmatpush.msra.mxu0 %v2200
        %2218 = vmatpush.msra.mxu0 %v2199
        %2219 = vmatpush.msra.mxu0 %v2198
        %2220 = vmatpush.msra.mxu0 %v2197
        %2221 = vmatpush.msra.mxu0 %v2196
        %2222 = vmatpush.msra.mxu0 %v2195
        %2223 = vmatpush.msra.mxu0 %v2194
        %2224 = vmatpush.msra.mxu0 %v2193
        %2225 = vmatmul.f32.gmra.mxu0 %v2173
        %v2226 = vpop.f32.mrf.mxu0
        %v2227 = vadd.f32 0.0, %v2226
        %2228 = vmatmul.f32.gmra.mxu0 %v2175
        %v2229 = vpop.f32.mrf.mxu0
        %v2230 = vadd.f32 0.0, %v2229
        %2231 = vmatmul.f32.gmra.mxu0 %v2177
        %v2232 = vpop.f32.mrf.mxu0
        %v2233 = vadd.f32 0.0, %v2232
        %2234 = vmatmul.f32.gmra.mxu0 %v2179
        %v2235 = vpop.f32.mrf.mxu0
        %v2236 = vadd.f32 0.0, %v2235
        %2237 = vmatmul.f32.gmra.mxu0 %v2181
        %v2238 = vpop.f32.mrf.mxu0
        %v2239 = vadd.f32 0.0, %v2238
        %2240 = vmatmul.f32.gmra.mxu0 %v2183
        %v2241 = vpop.f32.mrf.mxu0
        %v2242 = vadd.f32 0.0, %v2241
        %2243 = vmatmul.f32.gmra.mxu0 %v2185
        %v2244 = vpop.f32.mrf.mxu0
        %v2245 = vadd.f32 0.0, %v2244
        %2246 = vmatmul.f32.gmra.mxu0 %v2187
        %v2247 = vpop.f32.mrf.mxu0
        %v2248 = vadd.f32 0.0, %v2247
        %2249 = vmatmul.f32.gmra.mxu0 %v2189
        %v2250 = vpop.f32.mrf.mxu0
        %v2251 = vadd.f32 0.0, %v2250
        %2252 = vmatmul.f32.gmra.mxu0 %v2191
        %v2253 = vpop.f32.mrf.mxu0
        %v2254 = vadd.f32 0.0, %v2253
        %2255 = vdwg.mxu0
        %v2256 = vadd.f32 %v2143, %v2227
        %v2257 = vadd.f32 %v2146, %v2230
        %v2258 = vadd.f32 %v2149, %v2233
        %v2259 = vadd.f32 %v2152, %v2236
        %v2260 = vadd.f32 %v2155, %v2239
        %v2261 = vadd.f32 %v2158, %v2242
        %v2262 = vadd.f32 %v2161, %v2245
        %v2263 = vadd.f32 %v2164, %v2248
        %v2264 = vadd.f32 %v2167, %v2251
        %v2265 = vadd.f32 %v2170, %v2254
        %s2266 = scalar_lea.vmem [#allocation2], 3
        %v2267 = vld [vmem:[%s2266] ss:$4 sm:$0xff]
        %s2268 = scalar_lea.vmem [#allocation2], 35
        %v2269 = vld [vmem:[%s2268] ss:$4 sm:$0xff]
        %s2270 = scalar_lea.vmem [#allocation2], 67
        %v2271 = vld [vmem:[%s2270] ss:$4 sm:$0xff]
        %s2272 = scalar_lea.vmem [#allocation2], 99
        %v2273 = vld [vmem:[%s2272] ss:$4 sm:$0xff]
        %s2274 = scalar_lea.vmem [#allocation2], 131
        %v2275 = vld [vmem:[%s2274] ss:$4 sm:$0xff]
        %s2276 = scalar_lea.vmem [#allocation2], 163
        %v2277 = vld [vmem:[%s2276] ss:$4 sm:$0xff]
        %s2278 = scalar_lea.vmem [#allocation2], 195
        %v2279 = vld [vmem:[%s2278] ss:$4 sm:$0xff]
        %s2280 = scalar_lea.vmem [#allocation2], 227
        %v2281 = vld [vmem:[%s2280] ss:$4 sm:$0xff]
        %s2282 = scalar_lea.vmem [#allocation2], 259
        %v2283 = vld [vmem:[%s2282] ss:$4 sm:$0xff]
        %s2284 = scalar_lea.vmem [#allocation2], 291
        %v2285 = vld [vmem:[%s2284] ss:$4 sm:$0xff]
        %s2286 = scalar_lea.vmem [#allocation6], 384
        %v2287 = vld [vmem:[%s2286] sm:$0xff]
        %v2288 = vld [vmem:[%s2286 + $0x8] sm:$0xff]
        %v2289 = vld [vmem:[%s2286 + $0x10] sm:$0xff]
        %v2290 = vld [vmem:[%s2286 + $0x18] sm:$0xff]
        %v2291 = vld [vmem:[%s2286 + $0x20] sm:$0xff]
        %v2292 = vld [vmem:[%s2286 + $0x28] sm:$0xff]
        %v2293 = vld [vmem:[%s2286 + $0x30] sm:$0xff]
        %v2294 = vld [vmem:[%s2286 + $0x38] sm:$0xff]
        %v2295 = vld [vmem:[%s2286 + $0x40] sm:$0xff]
        %v2296 = vld [vmem:[%s2286 + $0x48] sm:$0xff]
        %v2297 = vld [vmem:[%s2286 + $0x50] sm:$0xff]
        %v2298 = vld [vmem:[%s2286 + $0x58] sm:$0xff]
        %v2299 = vld [vmem:[%s2286 + $0x60] sm:$0xff]
        %v2300 = vld [vmem:[%s2286 + $0x68] sm:$0xff]
        %v2301 = vld [vmem:[%s2286 + $0x70] sm:$0xff]
        %v2302 = vld [vmem:[%s2286 + $0x78] sm:$0xff]
        %2303 = vmatpush.msra.mxu0 %v2302
        %2304 = vmatpush.msra.mxu0 %v2301
        %2305 = vmatpush.msra.mxu0 %v2300
        %2306 = vmatpush.msra.mxu0 %v2299
        %2307 = vmatpush.msra.mxu0 %v2298
        %2308 = vmatpush.msra.mxu0 %v2297
        %2309 = vmatpush.msra.mxu0 %v2296
        %2310 = vmatpush.msra.mxu0 %v2295
        %2311 = vmatpush.msra.mxu0 %v2294
        %2312 = vmatpush.msra.mxu0 %v2293
        %2313 = vmatpush.msra.mxu0 %v2292
        %2314 = vmatpush.msra.mxu0 %v2291
        %2315 = vmatpush.msra.mxu0 %v2290
        %2316 = vmatpush.msra.mxu0 %v2289
        %2317 = vmatpush.msra.mxu0 %v2288
        %2318 = vmatpush.msra.mxu0 %v2287
        %2319 = vmatmul.f32.gmra.mxu0 %v2267
        %v2320 = vpop.f32.mrf.mxu0
        %v2321 = vadd.f32 0.0, %v2320
        %2322 = vmatmul.f32.gmra.mxu0 %v2269
        %v2323 = vpop.f32.mrf.mxu0
        %v2324 = vadd.f32 0.0, %v2323
        %2325 = vmatmul.f32.gmra.mxu0 %v2271
        %v2326 = vpop.f32.mrf.mxu0
        %v2327 = vadd.f32 0.0, %v2326
        %2328 = vmatmul.f32.gmra.mxu0 %v2273
        %v2329 = vpop.f32.mrf.mxu0
        %v2330 = vadd.f32 0.0, %v2329
        %2331 = vmatmul.f32.gmra.mxu0 %v2275
        %v2332 = vpop.f32.mrf.mxu0
        %v2333 = vadd.f32 0.0, %v2332
        %2334 = vmatmul.f32.gmra.mxu0 %v2277
        %v2335 = vpop.f32.mrf.mxu0
        %v2336 = vadd.f32 0.0, %v2335
        %2337 = vmatmul.f32.gmra.mxu0 %v2279
        %v2338 = vpop.f32.mrf.mxu0
        %v2339 = vadd.f32 0.0, %v2338
        %2340 = vmatmul.f32.gmra.mxu0 %v2281
        %v2341 = vpop.f32.mrf.mxu0
        %v2342 = vadd.f32 0.0, %v2341
        %2343 = vmatmul.f32.gmra.mxu0 %v2283
        %v2344 = vpop.f32.mrf.mxu0
        %v2345 = vadd.f32 0.0, %v2344
        %2346 = vmatmul.f32.gmra.mxu0 %v2285
        %v2347 = vpop.f32.mrf.mxu0
        %v2348 = vadd.f32 0.0, %v2347
        %2349 = vdwg.mxu0
        %v2350 = vadd.f32 %v2256, %v2321
        %v2351 = vadd.f32 %v2257, %v2324
        %v2352 = vadd.f32 %v2258, %v2327
        %v2353 = vadd.f32 %v2259, %v2330
        %v2354 = vadd.f32 %v2260, %v2333
        %v2355 = vadd.f32 %v2261, %v2336
        %v2356 = vadd.f32 %v2262, %v2339
        %v2357 = vadd.f32 %v2263, %v2342
        %v2358 = vadd.f32 %v2264, %v2345
        %v2359 = vadd.f32 %v2265, %v2348
        %s2360 = scalar_lea.vmem [#allocation2], 4
        %v2361 = vld [vmem:[%s2360] ss:$4 sm:$0xff]
        %s2362 = scalar_lea.vmem [#allocation2], 36
        %v2363 = vld [vmem:[%s2362] ss:$4 sm:$0xff]
        %s2364 = scalar_lea.vmem [#allocation2], 68
        %v2365 = vld [vmem:[%s2364] ss:$4 sm:$0xff]
        %s2366 = scalar_lea.vmem [#allocation2], 100
        %v2367 = vld [vmem:[%s2366] ss:$4 sm:$0xff]
        %s2368 = scalar_lea.vmem [#allocation2], 132
        %v2369 = vld [vmem:[%s2368] ss:$4 sm:$0xff]
        %s2370 = scalar_lea.vmem [#allocation2], 164
        %v2371 = vld [vmem:[%s2370] ss:$4 sm:$0xff]
        %s2372 = scalar_lea.vmem [#allocation2], 196
        %v2373 = vld [vmem:[%s2372] ss:$4 sm:$0xff]
        %s2374 = scalar_lea.vmem [#allocation2], 228
        %v2375 = vld [vmem:[%s2374] ss:$4 sm:$0xff]
        %s2376 = scalar_lea.vmem [#allocation2], 260
        %v2377 = vld [vmem:[%s2376] ss:$4 sm:$0xff]
        %s2378 = scalar_lea.vmem [#allocation2], 292
        %v2379 = vld [vmem:[%s2378] ss:$4 sm:$0xff]
        %s2380 = scalar_lea.vmem [#allocation6], 512
        %v2381 = vld [vmem:[%s2380] sm:$0xff]
        %v2382 = vld [vmem:[%s2380 + $0x8] sm:$0xff]
        %v2383 = vld [vmem:[%s2380 + $0x10] sm:$0xff]
        %v2384 = vld [vmem:[%s2380 + $0x18] sm:$0xff]
        %v2385 = vld [vmem:[%s2380 + $0x20] sm:$0xff]
        %v2386 = vld [vmem:[%s2380 + $0x28] sm:$0xff]
        %v2387 = vld [vmem:[%s2380 + $0x30] sm:$0xff]
        %v2388 = vld [vmem:[%s2380 + $0x38] sm:$0xff]
        %v2389 = vld [vmem:[%s2380 + $0x40] sm:$0xff]
        %v2390 = vld [vmem:[%s2380 + $0x48] sm:$0xff]
        %v2391 = vld [vmem:[%s2380 + $0x50] sm:$0xff]
        %v2392 = vld [vmem:[%s2380 + $0x58] sm:$0xff]
        %v2393 = vld [vmem:[%s2380 + $0x60] sm:$0xff]
        %v2394 = vld [vmem:[%s2380 + $0x68] sm:$0xff]
        %v2395 = vld [vmem:[%s2380 + $0x70] sm:$0xff]
        %v2396 = vld [vmem:[%s2380 + $0x78] sm:$0xff]
        %2397 = vmatpush.msra.mxu0 %v2396
        %2398 = vmatpush.msra.mxu0 %v2395
        %2399 = vmatpush.msra.mxu0 %v2394
        %2400 = vmatpush.msra.mxu0 %v2393
        %2401 = vmatpush.msra.mxu0 %v2392
        %2402 = vmatpush.msra.mxu0 %v2391
        %2403 = vmatpush.msra.mxu0 %v2390
        %2404 = vmatpush.msra.mxu0 %v2389
        %2405 = vmatpush.msra.mxu0 %v2388
        %2406 = vmatpush.msra.mxu0 %v2387
        %2407 = vmatpush.msra.mxu0 %v2386
        %2408 = vmatpush.msra.mxu0 %v2385
        %2409 = vmatpush.msra.mxu0 %v2384
        %2410 = vmatpush.msra.mxu0 %v2383
        %2411 = vmatpush.msra.mxu0 %v2382
        %2412 = vmatpush.msra.mxu0 %v2381
        %2413 = vmatmul.f32.gmra.mxu0 %v2361
        %v2414 = vpop.f32.mrf.mxu0
        %v2415 = vadd.f32 0.0, %v2414
        %2416 = vmatmul.f32.gmra.mxu0 %v2363
        %v2417 = vpop.f32.mrf.mxu0
        %v2418 = vadd.f32 0.0, %v2417
        %2419 = vmatmul.f32.gmra.mxu0 %v2365
        %v2420 = vpop.f32.mrf.mxu0
        %v2421 = vadd.f32 0.0, %v2420
        %2422 = vmatmul.f32.gmra.mxu0 %v2367
        %v2423 = vpop.f32.mrf.mxu0
        %v2424 = vadd.f32 0.0, %v2423
        %2425 = vmatmul.f32.gmra.mxu0 %v2369
        %v2426 = vpop.f32.mrf.mxu0
        %v2427 = vadd.f32 0.0, %v2426
        %2428 = vmatmul.f32.gmra.mxu0 %v2371
        %v2429 = vpop.f32.mrf.mxu0
        %v2430 = vadd.f32 0.0, %v2429
        %2431 = vmatmul.f32.gmra.mxu0 %v2373
        %v2432 = vpop.f32.mrf.mxu0
        %v2433 = vadd.f32 0.0, %v2432
        %2434 = vmatmul.f32.gmra.mxu0 %v2375
        %v2435 = vpop.f32.mrf.mxu0
        %v2436 = vadd.f32 0.0, %v2435
        %2437 = vmatmul.f32.gmra.mxu0 %v2377
        %v2438 = vpop.f32.mrf.mxu0
        %v2439 = vadd.f32 0.0, %v2438
        %2440 = vmatmul.f32.gmra.mxu0 %v2379
        %v2441 = vpop.f32.mrf.mxu0
        %v2442 = vadd.f32 0.0, %v2441
        %2443 = vdwg.mxu0
        %v2444 = vadd.f32 %v2350, %v2415
        %v2445 = vadd.f32 %v2351, %v2418
        %v2446 = vadd.f32 %v2352, %v2421
        %v2447 = vadd.f32 %v2353, %v2424
        %v2448 = vadd.f32 %v2354, %v2427
        %v2449 = vadd.f32 %v2355, %v2430
        %v2450 = vadd.f32 %v2356, %v2433
        %v2451 = vadd.f32 %v2357, %v2436
        %v2452 = vadd.f32 %v2358, %v2439
        %v2453 = vadd.f32 %v2359, %v2442
        %s2454 = scalar_lea.vmem [#allocation2], 5
        %v2455 = vld [vmem:[%s2454] ss:$4 sm:$0xff]
        %s2456 = scalar_lea.vmem [#allocation2], 37
        %v2457 = vld [vmem:[%s2456] ss:$4 sm:$0xff]
        %s2458 = scalar_lea.vmem [#allocation2], 69
        %v2459 = vld [vmem:[%s2458] ss:$4 sm:$0xff]
        %s2460 = scalar_lea.vmem [#allocation2], 101
        %v2461 = vld [vmem:[%s2460] ss:$4 sm:$0xff]
        %s2462 = scalar_lea.vmem [#allocation2], 133
        %v2463 = vld [vmem:[%s2462] ss:$4 sm:$0xff]
        %s2464 = scalar_lea.vmem [#allocation2], 165
        %v2465 = vld [vmem:[%s2464] ss:$4 sm:$0xff]
        %s2466 = scalar_lea.vmem [#allocation2], 197
        %v2467 = vld [vmem:[%s2466] ss:$4 sm:$0xff]
        %s2468 = scalar_lea.vmem [#allocation2], 229
        %v2469 = vld [vmem:[%s2468] ss:$4 sm:$0xff]
        %s2470 = scalar_lea.vmem [#allocation2], 261
        %v2471 = vld [vmem:[%s2470] ss:$4 sm:$0xff]
        %s2472 = scalar_lea.vmem [#allocation2], 293
        %v2473 = vld [vmem:[%s2472] ss:$4 sm:$0xff]
        %s2474 = scalar_lea.vmem [#allocation6], 640
        %v2475 = vld [vmem:[%s2474] sm:$0xff]
        %v2476 = vld [vmem:[%s2474 + $0x8] sm:$0xff]
        %v2477 = vld [vmem:[%s2474 + $0x10] sm:$0xff]
        %v2478 = vld [vmem:[%s2474 + $0x18] sm:$0xff]
        %v2479 = vld [vmem:[%s2474 + $0x20] sm:$0xff]
        %v2480 = vld [vmem:[%s2474 + $0x28] sm:$0xff]
        %v2481 = vld [vmem:[%s2474 + $0x30] sm:$0xff]
        %v2482 = vld [vmem:[%s2474 + $0x38] sm:$0xff]
        %v2483 = vld [vmem:[%s2474 + $0x40] sm:$0xff]
        %v2484 = vld [vmem:[%s2474 + $0x48] sm:$0xff]
        %v2485 = vld [vmem:[%s2474 + $0x50] sm:$0xff]
        %v2486 = vld [vmem:[%s2474 + $0x58] sm:$0xff]
        %v2487 = vld [vmem:[%s2474 + $0x60] sm:$0xff]
        %v2488 = vld [vmem:[%s2474 + $0x68] sm:$0xff]
        %v2489 = vld [vmem:[%s2474 + $0x70] sm:$0xff]
        %v2490 = vld [vmem:[%s2474 + $0x78] sm:$0xff]
        %2491 = vmatpush.msra.mxu0 %v2490
        %2492 = vmatpush.msra.mxu0 %v2489
        %2493 = vmatpush.msra.mxu0 %v2488
        %2494 = vmatpush.msra.mxu0 %v2487
        %2495 = vmatpush.msra.mxu0 %v2486
        %2496 = vmatpush.msra.mxu0 %v2485
        %2497 = vmatpush.msra.mxu0 %v2484
        %2498 = vmatpush.msra.mxu0 %v2483
        %2499 = vmatpush.msra.mxu0 %v2482
        %2500 = vmatpush.msra.mxu0 %v2481
        %2501 = vmatpush.msra.mxu0 %v2480
        %2502 = vmatpush.msra.mxu0 %v2479
        %2503 = vmatpush.msra.mxu0 %v2478
        %2504 = vmatpush.msra.mxu0 %v2477
        %2505 = vmatpush.msra.mxu0 %v2476
        %2506 = vmatpush.msra.mxu0 %v2475
        %2507 = vmatmul.f32.gmra.mxu0 %v2455
        %v2508 = vpop.f32.mrf.mxu0
        %v2509 = vadd.f32 0.0, %v2508
        %2510 = vmatmul.f32.gmra.mxu0 %v2457
        %v2511 = vpop.f32.mrf.mxu0
        %v2512 = vadd.f32 0.0, %v2511
        %2513 = vmatmul.f32.gmra.mxu0 %v2459
        %v2514 = vpop.f32.mrf.mxu0
        %v2515 = vadd.f32 0.0, %v2514
        %2516 = vmatmul.f32.gmra.mxu0 %v2461
        %v2517 = vpop.f32.mrf.mxu0
        %v2518 = vadd.f32 0.0, %v2517
        %2519 = vmatmul.f32.gmra.mxu0 %v2463
        %v2520 = vpop.f32.mrf.mxu0
        %v2521 = vadd.f32 0.0, %v2520
        %2522 = vmatmul.f32.gmra.mxu0 %v2465
        %v2523 = vpop.f32.mrf.mxu0
        %v2524 = vadd.f32 0.0, %v2523
        %2525 = vmatmul.f32.gmra.mxu0 %v2467
        %v2526 = vpop.f32.mrf.mxu0
        %v2527 = vadd.f32 0.0, %v2526
        %2528 = vmatmul.f32.gmra.mxu0 %v2469
        %v2529 = vpop.f32.mrf.mxu0
        %v2530 = vadd.f32 0.0, %v2529
        %2531 = vmatmul.f32.gmra.mxu0 %v2471
        %v2532 = vpop.f32.mrf.mxu0
        %v2533 = vadd.f32 0.0, %v2532
        %2534 = vmatmul.f32.gmra.mxu0 %v2473
        %v2535 = vpop.f32.mrf.mxu0
        %v2536 = vadd.f32 0.0, %v2535
        %2537 = vdwg.mxu0
        %v2538 = vadd.f32 %v2444, %v2509
        %v2539 = vadd.f32 %v2445, %v2512
        %v2540 = vadd.f32 %v2446, %v2515
        %v2541 = vadd.f32 %v2447, %v2518
        %v2542 = vadd.f32 %v2448, %v2521
        %v2543 = vadd.f32 %v2449, %v2524
        %v2544 = vadd.f32 %v2450, %v2527
        %v2545 = vadd.f32 %v2451, %v2530
        %v2546 = vadd.f32 %v2452, %v2533
        %v2547 = vadd.f32 %v2453, %v2536
        %s2548 = scalar_lea.vmem [#allocation2], 6
        %v2549 = vld [vmem:[%s2548] ss:$4 sm:$0xff]
        %s2550 = scalar_lea.vmem [#allocation2], 38
        %v2551 = vld [vmem:[%s2550] ss:$4 sm:$0xff]
        %s2552 = scalar_lea.vmem [#allocation2], 70
        %v2553 = vld [vmem:[%s2552] ss:$4 sm:$0xff]
        %s2554 = scalar_lea.vmem [#allocation2], 102
        %v2555 = vld [vmem:[%s2554] ss:$4 sm:$0xff]
        %s2556 = scalar_lea.vmem [#allocation2], 134
        %v2557 = vld [vmem:[%s2556] ss:$4 sm:$0xff]
        %s2558 = scalar_lea.vmem [#allocation2], 166
        %v2559 = vld [vmem:[%s2558] ss:$4 sm:$0xff]
        %s2560 = scalar_lea.vmem [#allocation2], 198
        %v2561 = vld [vmem:[%s2560] ss:$4 sm:$0xff]
        %s2562 = scalar_lea.vmem [#allocation2], 230
        %v2563 = vld [vmem:[%s2562] ss:$4 sm:$0xff]
        %s2564 = scalar_lea.vmem [#allocation2], 262
        %v2565 = vld [vmem:[%s2564] ss:$4 sm:$0xff]
        %s2566 = scalar_lea.vmem [#allocation2], 294
        %v2567 = vld [vmem:[%s2566] ss:$4 sm:$0xff]
        %s2568 = scalar_lea.vmem [#allocation6], 768
        %v2569 = vld [vmem:[%s2568] sm:$0xff]
        %v2570 = vld [vmem:[%s2568 + $0x8] sm:$0xff]
        %v2571 = vld [vmem:[%s2568 + $0x10] sm:$0xff]
        %v2572 = vld [vmem:[%s2568 + $0x18] sm:$0xff]
        %v2573 = vld [vmem:[%s2568 + $0x20] sm:$0xff]
        %v2574 = vld [vmem:[%s2568 + $0x28] sm:$0xff]
        %v2575 = vld [vmem:[%s2568 + $0x30] sm:$0xff]
        %v2576 = vld [vmem:[%s2568 + $0x38] sm:$0xff]
        %v2577 = vld [vmem:[%s2568 + $0x40] sm:$0xff]
        %v2578 = vld [vmem:[%s2568 + $0x48] sm:$0xff]
        %v2579 = vld [vmem:[%s2568 + $0x50] sm:$0xff]
        %v2580 = vld [vmem:[%s2568 + $0x58] sm:$0xff]
        %v2581 = vld [vmem:[%s2568 + $0x60] sm:$0xff]
        %v2582 = vld [vmem:[%s2568 + $0x68] sm:$0xff]
        %v2583 = vld [vmem:[%s2568 + $0x70] sm:$0xff]
        %v2584 = vld [vmem:[%s2568 + $0x78] sm:$0xff]
        %2585 = vmatpush.msra.mxu0 %v2584
        %2586 = vmatpush.msra.mxu0 %v2583
        %2587 = vmatpush.msra.mxu0 %v2582
        %2588 = vmatpush.msra.mxu0 %v2581
        %2589 = vmatpush.msra.mxu0 %v2580
        %2590 = vmatpush.msra.mxu0 %v2579
        %2591 = vmatpush.msra.mxu0 %v2578
        %2592 = vmatpush.msra.mxu0 %v2577
        %2593 = vmatpush.msra.mxu0 %v2576
        %2594 = vmatpush.msra.mxu0 %v2575
        %2595 = vmatpush.msra.mxu0 %v2574
        %2596 = vmatpush.msra.mxu0 %v2573
        %2597 = vmatpush.msra.mxu0 %v2572
        %2598 = vmatpush.msra.mxu0 %v2571
        %2599 = vmatpush.msra.mxu0 %v2570
        %2600 = vmatpush.msra.mxu0 %v2569
        %2601 = vmatmul.f32.gmra.mxu0 %v2549
        %v2602 = vpop.f32.mrf.mxu0
        %v2603 = vadd.f32 0.0, %v2602
        %2604 = vmatmul.f32.gmra.mxu0 %v2551
        %v2605 = vpop.f32.mrf.mxu0
        %v2606 = vadd.f32 0.0, %v2605
        %2607 = vmatmul.f32.gmra.mxu0 %v2553
        %v2608 = vpop.f32.mrf.mxu0
        %v2609 = vadd.f32 0.0, %v2608
        %2610 = vmatmul.f32.gmra.mxu0 %v2555
        %v2611 = vpop.f32.mrf.mxu0
        %v2612 = vadd.f32 0.0, %v2611
        %2613 = vmatmul.f32.gmra.mxu0 %v2557
        %v2614 = vpop.f32.mrf.mxu0
        %v2615 = vadd.f32 0.0, %v2614
        %2616 = vmatmul.f32.gmra.mxu0 %v2559
        %v2617 = vpop.f32.mrf.mxu0
        %v2618 = vadd.f32 0.0, %v2617
        %2619 = vmatmul.f32.gmra.mxu0 %v2561
        %v2620 = vpop.f32.mrf.mxu0
        %v2621 = vadd.f32 0.0, %v2620
        %2622 = vmatmul.f32.gmra.mxu0 %v2563
        %v2623 = vpop.f32.mrf.mxu0
        %v2624 = vadd.f32 0.0, %v2623
        %2625 = vmatmul.f32.gmra.mxu0 %v2565
        %v2626 = vpop.f32.mrf.mxu0
        %v2627 = vadd.f32 0.0, %v2626
        %2628 = vmatmul.f32.gmra.mxu0 %v2567
        %v2629 = vpop.f32.mrf.mxu0
        %v2630 = vadd.f32 0.0, %v2629
        %2631 = vdwg.mxu0
        %v2632 = vadd.f32 %v2538, %v2603
        %v2633 = vadd.f32 %v2539, %v2606
        %v2634 = vadd.f32 %v2540, %v2609
        %v2635 = vadd.f32 %v2541, %v2612
        %v2636 = vadd.f32 %v2542, %v2615
        %v2637 = vadd.f32 %v2543, %v2618
        %v2638 = vadd.f32 %v2544, %v2621
        %v2639 = vadd.f32 %v2545, %v2624
        %v2640 = vadd.f32 %v2546, %v2627
        %v2641 = vadd.f32 %v2547, %v2630
        %s2642 = scalar_lea.vmem [#allocation2], 7
        %v2643 = vld [vmem:[%s2642] ss:$4 sm:$0xff]
        %s2644 = scalar_lea.vmem [#allocation2], 39
        %v2645 = vld [vmem:[%s2644] ss:$4 sm:$0xff]
        %s2646 = scalar_lea.vmem [#allocation2], 71
        %v2647 = vld [vmem:[%s2646] ss:$4 sm:$0xff]
        %s2648 = scalar_lea.vmem [#allocation2], 103
        %v2649 = vld [vmem:[%s2648] ss:$4 sm:$0xff]
        %s2650 = scalar_lea.vmem [#allocation2], 135
        %v2651 = vld [vmem:[%s2650] ss:$4 sm:$0xff]
        %s2652 = scalar_lea.vmem [#allocation2], 167
        %v2653 = vld [vmem:[%s2652] ss:$4 sm:$0xff]
        %s2654 = scalar_lea.vmem [#allocation2], 199
        %v2655 = vld [vmem:[%s2654] ss:$4 sm:$0xff]
        %s2656 = scalar_lea.vmem [#allocation2], 231
        %v2657 = vld [vmem:[%s2656] ss:$4 sm:$0xff]
        %s2658 = scalar_lea.vmem [#allocation2], 263
        %v2659 = vld [vmem:[%s2658] ss:$4 sm:$0xff]
        %s2660 = scalar_lea.vmem [#allocation2], 295
        %v2661 = vld [vmem:[%s2660] ss:$4 sm:$0xff]
        %s2662 = scalar_lea.vmem [#allocation6], 896
        %v2663 = vld [vmem:[%s2662] sm:$0xff]
        %v2664 = vld [vmem:[%s2662 + $0x8] sm:$0xff]
        %v2665 = vld [vmem:[%s2662 + $0x10] sm:$0xff]
        %v2666 = vld [vmem:[%s2662 + $0x18] sm:$0xff]
        %v2667 = vld [vmem:[%s2662 + $0x20] sm:$0xff]
        %v2668 = vld [vmem:[%s2662 + $0x28] sm:$0xff]
        %v2669 = vld [vmem:[%s2662 + $0x30] sm:$0xff]
        %v2670 = vld [vmem:[%s2662 + $0x38] sm:$0xff]
        %v2671 = vld [vmem:[%s2662 + $0x40] sm:$0xff]
        %v2672 = vld [vmem:[%s2662 + $0x48] sm:$0xff]
        %v2673 = vld [vmem:[%s2662 + $0x50] sm:$0xff]
        %v2674 = vld [vmem:[%s2662 + $0x58] sm:$0xff]
        %v2675 = vld [vmem:[%s2662 + $0x60] sm:$0xff]
        %v2676 = vld [vmem:[%s2662 + $0x68] sm:$0xff]
        %v2677 = vld [vmem:[%s2662 + $0x70] sm:$0xff]
        %v2678 = vld [vmem:[%s2662 + $0x78] sm:$0xff]
        %2679 = vmatpush.msra.mxu0 %v2678
        %2680 = vmatpush.msra.mxu0 %v2677
        %2681 = vmatpush.msra.mxu0 %v2676
        %2682 = vmatpush.msra.mxu0 %v2675
        %2683 = vmatpush.msra.mxu0 %v2674
        %2684 = vmatpush.msra.mxu0 %v2673
        %2685 = vmatpush.msra.mxu0 %v2672
        %2686 = vmatpush.msra.mxu0 %v2671
        %2687 = vmatpush.msra.mxu0 %v2670
        %2688 = vmatpush.msra.mxu0 %v2669
        %2689 = vmatpush.msra.mxu0 %v2668
        %2690 = vmatpush.msra.mxu0 %v2667
        %2691 = vmatpush.msra.mxu0 %v2666
        %2692 = vmatpush.msra.mxu0 %v2665
        %2693 = vmatpush.msra.mxu0 %v2664
        %2694 = vmatpush.msra.mxu0 %v2663
        %2695 = vmatmul.f32.gmra.mxu0 %v2643
        %v2696 = vpop.f32.mrf.mxu0
        %v2697 = vadd.f32 0.0, %v2696
        %2698 = vmatmul.f32.gmra.mxu0 %v2645
        %v2699 = vpop.f32.mrf.mxu0
        %v2700 = vadd.f32 0.0, %v2699
        %2701 = vmatmul.f32.gmra.mxu0 %v2647
        %v2702 = vpop.f32.mrf.mxu0
        %v2703 = vadd.f32 0.0, %v2702
        %2704 = vmatmul.f32.gmra.mxu0 %v2649
        %v2705 = vpop.f32.mrf.mxu0
        %v2706 = vadd.f32 0.0, %v2705
        %2707 = vmatmul.f32.gmra.mxu0 %v2651
        %v2708 = vpop.f32.mrf.mxu0
        %v2709 = vadd.f32 0.0, %v2708
        %2710 = vmatmul.f32.gmra.mxu0 %v2653
        %v2711 = vpop.f32.mrf.mxu0
        %v2712 = vadd.f32 0.0, %v2711
        %2713 = vmatmul.f32.gmra.mxu0 %v2655
        %v2714 = vpop.f32.mrf.mxu0
        %v2715 = vadd.f32 0.0, %v2714
        %2716 = vmatmul.f32.gmra.mxu0 %v2657
        %v2717 = vpop.f32.mrf.mxu0
        %v2718 = vadd.f32 0.0, %v2717
        %2719 = vmatmul.f32.gmra.mxu0 %v2659
        %v2720 = vpop.f32.mrf.mxu0
        %v2721 = vadd.f32 0.0, %v2720
        %2722 = vmatmul.f32.gmra.mxu0 %v2661
        %v2723 = vpop.f32.mrf.mxu0
        %v2724 = vadd.f32 0.0, %v2723
        %2725 = vdwg.mxu0
        %v2726 = vadd.f32 %v2632, %v2697
        %v2727 = vadd.f32 %v2633, %v2700
        %v2728 = vadd.f32 %v2634, %v2703
        %v2729 = vadd.f32 %v2635, %v2706
        %v2730 = vadd.f32 %v2636, %v2709
        %v2731 = vadd.f32 %v2637, %v2712
        %v2732 = vadd.f32 %v2638, %v2715
        %v2733 = vadd.f32 %v2639, %v2718
        %v2734 = vadd.f32 %v2640, %v2721
        %v2735 = vadd.f32 %v2641, %v2724
        %v2736 = vld [vmem:[%s6 + $0x1] sm:$0x1]
        %v2737 = vperm.slane %v2736, 0
        %v2738 = vadd.f32 %v2726, %v2737
        %v2739 = vadd.f32 %v2727, %v2737
        %v2740 = vadd.f32 %v2728, %v2737
        %v2741 = vadd.f32 %v2729, %v2737
        %v2742 = vadd.f32 %v2730, %v2737
        %v2743 = vadd.f32 %v2731, %v2737
        %v2744 = vadd.f32 %v2732, %v2737
        %v2745 = vadd.f32 %v2733, %v2737
        %v2746 = vadd.f32 %v2734, %v2737
        %v2747 = vadd.f32 %v2735, %v2737
        %v2748 = vld [vmem:[%s7 + $0x1] sm:$0x1]
        %v2749 = vld [vmem:[%s8 + $0x1] sm:$0x1]
        %2750 = vadd.xlane.f32.xlu0 %v2738
        %v2751 = vpop.xlane.xlu0 %2750
        %2752 = vadd.xlane.f32.xlu0 %v2739
        %v2753 = vpop.xlane.xlu0 %2752
        %2754 = vadd.xlane.f32.xlu0 %v2740
        %v2755 = vpop.xlane.xlu0 %2754
        %2756 = vadd.xlane.f32.xlu0 %v2741
        %v2757 = vpop.xlane.xlu0 %2756
        %2758 = vadd.xlane.f32.xlu0 %v2742
        %v2759 = vpop.xlane.xlu0 %2758
        %2760 = vadd.xlane.f32.xlu0 %v2743
        %v2761 = vpop.xlane.xlu0 %2760
        %2762 = vadd.xlane.f32.xlu0 %v2744
        %v2763 = vpop.xlane.xlu0 %2762
        %2764 = vadd.xlane.f32.xlu0 %v2745
        %v2765 = vpop.xlane.xlu0 %2764
        %2766 = vadd.xlane.f32.xlu0 %v2746
        %v2767 = vpop.xlane.xlu0 %2766
        %2768 = vadd.xlane.f32.xlu0 %v2747
        %v2769 = vpop.xlane.xlu0 %2768
        %v2770 = vmul.f32 %v2751, %v1121
        %v2771 = vmul.f32 %v2753, %v1121
        %v2772 = vmul.f32 %v2755, %v1121
        %v2773 = vmul.f32 %v2757, %v1121
        %v2774 = vmul.f32 %v2759, %v1121
        %v2775 = vmul.f32 %v2761, %v1121
        %v2776 = vmul.f32 %v2763, %v1121
        %v2777 = vmul.f32 %v2765, %v1121
        %v2778 = vmul.f32 %v2767, %v1121
        %v2779 = vmul.f32 %v2769, %v1121
        %v2780 = vsub.f32 %v2738, %v2770
        %v2781 = vsub.f32 %v2739, %v2771
        %v2782 = vsub.f32 %v2740, %v2772
        %v2783 = vsub.f32 %v2741, %v2773
        %v2784 = vsub.f32 %v2742, %v2774
        %v2785 = vsub.f32 %v2743, %v2775
        %v2786 = vsub.f32 %v2744, %v2776
        %v2787 = vsub.f32 %v2745, %v2777
        %v2788 = vsub.f32 %v2746, %v2778
        %v2789 = vsub.f32 %v2747, %v2779
        %v2790 = vmul.f32 %v2780, %v2780
        %v2791 = vmul.f32 %v2781, %v2781
        %v2792 = vmul.f32 %v2782, %v2782
        %v2793 = vmul.f32 %v2783, %v2783
        %v2794 = vmul.f32 %v2784, %v2784
        %v2795 = vmul.f32 %v2785, %v2785
        %v2796 = vmul.f32 %v2786, %v2786
        %v2797 = vmul.f32 %v2787, %v2787
        %v2798 = vmul.f32 %v2788, %v2788
        %v2799 = vmul.f32 %v2789, %v2789
        %2800 = vadd.xlane.f32.xlu0 %v2790
        %v2801 = vpop.xlane.xlu0 %2800
        %2802 = vadd.xlane.f32.xlu0 %v2791
        %v2803 = vpop.xlane.xlu0 %2802
        %2804 = vadd.xlane.f32.xlu0 %v2792
        %v2805 = vpop.xlane.xlu0 %2804
        %2806 = vadd.xlane.f32.xlu0 %v2793
        %v2807 = vpop.xlane.xlu0 %2806
        %2808 = vadd.xlane.f32.xlu0 %v2794
        %v2809 = vpop.xlane.xlu0 %2808
        %2810 = vadd.xlane.f32.xlu0 %v2795
        %v2811 = vpop.xlane.xlu0 %2810
        %2812 = vadd.xlane.f32.xlu0 %v2796
        %v2813 = vpop.xlane.xlu0 %2812
        %2814 = vadd.xlane.f32.xlu0 %v2797
        %v2815 = vpop.xlane.xlu0 %2814
        %2816 = vadd.xlane.f32.xlu0 %v2798
        %v2817 = vpop.xlane.xlu0 %2816
        %2818 = vadd.xlane.f32.xlu0 %v2799
        %v2819 = vpop.xlane.xlu0 %2818
        %v2820 = vmul.f32 %v2801, 0.007874016
        %v2821 = vmul.f32 %v2803, 0.007874016
        %v2822 = vmul.f32 %v2805, 0.007874016
        %v2823 = vmul.f32 %v2807, 0.007874016
        %v2824 = vmul.f32 %v2809, 0.007874016
        %v2825 = vmul.f32 %v2811, 0.007874016
        %v2826 = vmul.f32 %v2813, 0.007874016
        %v2827 = vmul.f32 %v2815, 0.007874016
        %v2828 = vmul.f32 %v2817, 0.007874016
        %v2829 = vmul.f32 %v2819, 0.007874016
        %v2830 = vadd.f32 %v2820, 1e-05
        %v2831 = vadd.f32 %v2821, 1e-05
        %v2832 = vadd.f32 %v2822, 1e-05
        %v2833 = vadd.f32 %v2823, 1e-05
        %v2834 = vadd.f32 %v2824, 1e-05
        %v2835 = vadd.f32 %v2825, 1e-05
        %v2836 = vadd.f32 %v2826, 1e-05
        %v2837 = vadd.f32 %v2827, 1e-05
        %v2838 = vadd.f32 %v2828, 1e-05
        %v2839 = vadd.f32 %v2829, 1e-05
        %v2840 = vrsqrt.pop %v2830
        %v2841 = vmul.f32 %v2840, %v2830
        %v2842 = vmul.f32 %v2841, %v2840
        %v2843 = vmul.f32 0.5, %v2842
        %v2844 = vsub.f32 1.5, %v2843
        %v2845 = vmul.f32 %v2840, %v2844
        %vm2846 = vweird.f32 %v2830
        %vm2847 = vweird.f32 %v2840
        %vm2848 = vmor %vm2846, %vm2847
        %v2849 = vsel %vm2848, %v2840, %v2845
        %v2850 = vrsqrt.pop %v2831
        %v2851 = vmul.f32 %v2850, %v2831
        %v2852 = vmul.f32 %v2851, %v2850
        %v2853 = vmul.f32 0.5, %v2852
        %v2854 = vsub.f32 1.5, %v2853
        %v2855 = vmul.f32 %v2850, %v2854
        %vm2856 = vweird.f32 %v2831
        %vm2857 = vweird.f32 %v2850
        %vm2858 = vmor %vm2856, %vm2857
        %v2859 = vsel %vm2858, %v2850, %v2855
        %v2860 = vrsqrt.pop %v2832
        %v2861 = vmul.f32 %v2860, %v2832
        %v2862 = vmul.f32 %v2861, %v2860
        %v2863 = vmul.f32 0.5, %v2862
        %v2864 = vsub.f32 1.5, %v2863
        %v2865 = vmul.f32 %v2860, %v2864
        %vm2866 = vweird.f32 %v2832
        %vm2867 = vweird.f32 %v2860
        %vm2868 = vmor %vm2866, %vm2867
        %v2869 = vsel %vm2868, %v2860, %v2865
        %v2870 = vrsqrt.pop %v2833
        %v2871 = vmul.f32 %v2870, %v2833
        %v2872 = vmul.f32 %v2871, %v2870
        %v2873 = vmul.f32 0.5, %v2872
        %v2874 = vsub.f32 1.5, %v2873
        %v2875 = vmul.f32 %v2870, %v2874
        %vm2876 = vweird.f32 %v2833
        %vm2877 = vweird.f32 %v2870
        %vm2878 = vmor %vm2876, %vm2877
        %v2879 = vsel %vm2878, %v2870, %v2875
        %v2880 = vrsqrt.pop %v2834
        %v2881 = vmul.f32 %v2880, %v2834
        %v2882 = vmul.f32 %v2881, %v2880
        %v2883 = vmul.f32 0.5, %v2882
        %v2884 = vsub.f32 1.5, %v2883
        %v2885 = vmul.f32 %v2880, %v2884
        %vm2886 = vweird.f32 %v2834
        %vm2887 = vweird.f32 %v2880
        %vm2888 = vmor %vm2886, %vm2887
        %v2889 = vsel %vm2888, %v2880, %v2885
        %v2890 = vrsqrt.pop %v2835
        %v2891 = vmul.f32 %v2890, %v2835
        %v2892 = vmul.f32 %v2891, %v2890
        %v2893 = vmul.f32 0.5, %v2892
        %v2894 = vsub.f32 1.5, %v2893
        %v2895 = vmul.f32 %v2890, %v2894
        %vm2896 = vweird.f32 %v2835
        %vm2897 = vweird.f32 %v2890
        %vm2898 = vmor %vm2896, %vm2897
        %v2899 = vsel %vm2898, %v2890, %v2895
        %v2900 = vrsqrt.pop %v2836
        %v2901 = vmul.f32 %v2900, %v2836
        %v2902 = vmul.f32 %v2901, %v2900
        %v2903 = vmul.f32 0.5, %v2902
        %v2904 = vsub.f32 1.5, %v2903
        %v2905 = vmul.f32 %v2900, %v2904
        %vm2906 = vweird.f32 %v2836
        %vm2907 = vweird.f32 %v2900
        %vm2908 = vmor %vm2906, %vm2907
        %v2909 = vsel %vm2908, %v2900, %v2905
        %v2910 = vrsqrt.pop %v2837
        %v2911 = vmul.f32 %v2910, %v2837
        %v2912 = vmul.f32 %v2911, %v2910
        %v2913 = vmul.f32 0.5, %v2912
        %v2914 = vsub.f32 1.5, %v2913
        %v2915 = vmul.f32 %v2910, %v2914
        %vm2916 = vweird.f32 %v2837
        %vm2917 = vweird.f32 %v2910
        %vm2918 = vmor %vm2916, %vm2917
        %v2919 = vsel %vm2918, %v2910, %v2915
        %v2920 = vrsqrt.pop %v2838
        %v2921 = vmul.f32 %v2920, %v2838
        %v2922 = vmul.f32 %v2921, %v2920
        %v2923 = vmul.f32 0.5, %v2922
        %v2924 = vsub.f32 1.5, %v2923
        %v2925 = vmul.f32 %v2920, %v2924
        %vm2926 = vweird.f32 %v2838
        %vm2927 = vweird.f32 %v2920
        %vm2928 = vmor %vm2926, %vm2927
        %v2929 = vsel %vm2928, %v2920, %v2925
        %v2930 = vrsqrt.pop %v2839
        %v2931 = vmul.f32 %v2930, %v2839
        %v2932 = vmul.f32 %v2931, %v2930
        %v2933 = vmul.f32 0.5, %v2932
        %v2934 = vsub.f32 1.5, %v2933
        %v2935 = vmul.f32 %v2930, %v2934
        %vm2936 = vweird.f32 %v2839
        %vm2937 = vweird.f32 %v2930
        %vm2938 = vmor %vm2936, %vm2937
        %v2939 = vsel %vm2938, %v2930, %v2935
        %v2940 = vmul.f32 %v2780, %v2849
        %v2941 = vmul.f32 %v2781, %v2859
        %v2942 = vmul.f32 %v2782, %v2869
        %v2943 = vmul.f32 %v2783, %v2879
        %v2944 = vmul.f32 %v2784, %v2889
        %v2945 = vmul.f32 %v2785, %v2899
        %v2946 = vmul.f32 %v2786, %v2909
        %v2947 = vmul.f32 %v2787, %v2919
        %v2948 = vmul.f32 %v2788, %v2929
        %v2949 = vmul.f32 %v2789, %v2939
        %v2950 = vperm.slane %v2748, 0
        %v2951 = vmul.f32 %v2940, %v2950
        %v2952 = vmul.f32 %v2941, %v2950
        %v2953 = vmul.f32 %v2942, %v2950
        %v2954 = vmul.f32 %v2943, %v2950
        %v2955 = vmul.f32 %v2944, %v2950
        %v2956 = vmul.f32 %v2945, %v2950
        %v2957 = vmul.f32 %v2946, %v2950
        %v2958 = vmul.f32 %v2947, %v2950
        %v2959 = vmul.f32 %v2948, %v2950
        %v2960 = vmul.f32 %v2949, %v2950
        %v2961 = vperm.slane %v2749, 0
        %v2962 = vadd.f32 %v2951, %v2961
        %v2963 = vadd.f32 %v2952, %v2961
        %v2964 = vadd.f32 %v2953, %v2961
        %v2965 = vadd.f32 %v2954, %v2961
        %v2966 = vadd.f32 %v2955, %v2961
        %v2967 = vadd.f32 %v2956, %v2961
        %v2968 = vadd.f32 %v2957, %v2961
        %v2969 = vadd.f32 %v2958, %v2961
        %v2970 = vadd.f32 %v2959, %v2961
        %v2971 = vadd.f32 %v2960, %v2961
        %v2972 = vmax.f32 %v2962, 0.0
        %v2973 = vmax.f32 %v2963, 0.0
        %v2974 = vmax.f32 %v2964, 0.0
        %v2975 = vmax.f32 %v2965, 0.0
        %v2976 = vmax.f32 %v2966, 0.0
        %v2977 = vmax.f32 %v2967, 0.0
        %v2978 = vmax.f32 %v2968, 0.0
        %v2979 = vmax.f32 %v2969, 0.0
        %v2980 = vmax.f32 %v2970, 0.0
        %v2981 = vmax.f32 %v2971, 0.0
        %2982 = vst [vmem:[#allocation3] sm:$0x1] 0.0
        %2983 = vst [vmem:[#allocation3 + $0x1] sm:$0xff] %v2972
        %2984 = vst [vmem:[#allocation3 + $0x9] sm:$0xff] %v2973
        %2985 = vst [vmem:[#allocation3 + $0x11] sm:$0xff] %v2974
        %2986 = vst [vmem:[#allocation3 + $0x19] sm:$0xff] %v2975
        %2987 = vst [vmem:[#allocation3 + $0x21] sm:$0xff] %v2976
        %2988 = vst [vmem:[#allocation3 + $0x29] sm:$0xff] %v2977
        %2989 = vst [vmem:[#allocation3 + $0x31] sm:$0xff] %v2978
        %2990 = vst [vmem:[#allocation3 + $0x39] sm:$0xff] %v2979
        %2991 = vst [vmem:[#allocation3 + $0x41] sm:$0xff] %v2980
        %2992 = vst [vmem:[#allocation3 + $0x49] sm:$0xff] %v2981
        %2993 = vst [vmem:[#allocation3 + $0x51] sm:$0x1] 0.0
        %v2994 = vld [vmem:[#allocation3] ss:$2 sm:$0xff]
        %s2995 = scalar_lea.vmem [#allocation3], 16
        %v2996 = vld [vmem:[%s2995] ss:$2 sm:$0xff]
        %s2997 = scalar_lea.vmem [#allocation3], 32
        %v2998 = vld [vmem:[%s2997] ss:$2 sm:$0xff]
        %s2999 = scalar_lea.vmem [#allocation3], 48
        %v3000 = vld [vmem:[%s2999] ss:$2 sm:$0xff]
        %s3001 = scalar_lea.vmem [#allocation3], 64
        %v3002 = vld [vmem:[%s3001] ss:$2 sm:$0xff]
        %v3003 = vld [vmem:[%s3] sm:$0xff]
        %v3004 = vld [vmem:[%s3 + $0x8] sm:$0xff]
        %v3005 = vld [vmem:[%s3 + $0x10] sm:$0xff]
        %v3006 = vld [vmem:[%s3 + $0x18] sm:$0xff]
        %v3007 = vld [vmem:[%s3 + $0x20] sm:$0xff]
        %v3008 = vld [vmem:[%s3 + $0x28] sm:$0xff]
        %v3009 = vld [vmem:[%s3 + $0x30] sm:$0xff]
        %v3010 = vld [vmem:[%s3 + $0x38] sm:$0xff]
        %v3011 = vld [vmem:[%s3 + $0x40] sm:$0xff]
        %v3012 = vld [vmem:[%s3 + $0x48] sm:$0xff]
        %v3013 = vld [vmem:[%s3 + $0x50] sm:$0xff]
        %v3014 = vld [vmem:[%s3 + $0x58] sm:$0xff]
        %v3015 = vld [vmem:[%s3 + $0x60] sm:$0xff]
        %v3016 = vld [vmem:[%s3 + $0x68] sm:$0xff]
        %v3017 = vld [vmem:[%s3 + $0x70] sm:$0xff]
        %v3018 = vld [vmem:[%s3 + $0x78] sm:$0xff]
        %s3019 = scalar_lea.vmem [#allocation3], 1
        %v3020 = vld [vmem:[%s3019] ss:$2 sm:$0xff]
        %s3021 = scalar_lea.vmem [#allocation3], 17
        %v3022 = vld [vmem:[%s3021] ss:$2 sm:$0xff]
        %s3023 = scalar_lea.vmem [#allocation3], 33
        %v3024 = vld [vmem:[%s3023] ss:$2 sm:$0xff]
        %s3025 = scalar_lea.vmem [#allocation3], 49
        %v3026 = vld [vmem:[%s3025] ss:$2 sm:$0xff]
        %s3027 = scalar_lea.vmem [#allocation3], 65
        %v3028 = vld [vmem:[%s3027] ss:$2 sm:$0xff]
        %s3029 = scalar_lea.vmem %s3, 128
        %v3030 = vld [vmem:[%s3029] sm:$0xff]
        %v3031 = vld [vmem:[%s3029 + $0x8] sm:$0xff]
        %v3032 = vld [vmem:[%s3029 + $0x10] sm:$0xff]
        %v3033 = vld [vmem:[%s3029 + $0x18] sm:$0xff]
        %v3034 = vld [vmem:[%s3029 + $0x20] sm:$0xff]
        %v3035 = vld [vmem:[%s3029 + $0x28] sm:$0xff]
        %v3036 = vld [vmem:[%s3029 + $0x30] sm:$0xff]
        %v3037 = vld [vmem:[%s3029 + $0x38] sm:$0xff]
        %v3038 = vld [vmem:[%s3029 + $0x40] sm:$0xff]
        %v3039 = vld [vmem:[%s3029 + $0x48] sm:$0xff]
        %v3040 = vld [vmem:[%s3029 + $0x50] sm:$0xff]
        %v3041 = vld [vmem:[%s3029 + $0x58] sm:$0xff]
        %v3042 = vld [vmem:[%s3029 + $0x60] sm:$0xff]
        %v3043 = vld [vmem:[%s3029 + $0x68] sm:$0xff]
        %v3044 = vld [vmem:[%s3029 + $0x70] sm:$0xff]
        %v3045 = vld [vmem:[%s3029 + $0x78] sm:$0xff]
        %3046 = vmatpush.msra.mxu0 %v3045
        %3047 = vmatpush.msra.mxu0 %v3044
        %3048 = vmatpush.msra.mxu0 %v3043
        %3049 = vmatpush.msra.mxu0 %v3042
        %3050 = vmatpush.msra.mxu0 %v3041
        %3051 = vmatpush.msra.mxu0 %v3040
        %3052 = vmatpush.msra.mxu0 %v3039
        %3053 = vmatpush.msra.mxu0 %v3038
        %3054 = vmatpush.msra.mxu0 %v3037
        %3055 = vmatpush.msra.mxu0 %v3036
        %3056 = vmatpush.msra.mxu0 %v3035
        %3057 = vmatpush.msra.mxu0 %v3034
        %3058 = vmatpush.msra.mxu0 %v3033
        %3059 = vmatpush.msra.mxu0 %v3032
        %3060 = vmatpush.msra.mxu0 %v3031
        %3061 = vmatpush.msra.mxu0 %v3030
        %3062 = vmatmul.f32.gmra.mxu0 %v3020
        %v3063 = vpop.f32.mrf.mxu0
        %v3064 = vadd.f32 0.0, %v3063
        %3065 = vmatmul.f32.gmra.mxu0 %v3022
        %v3066 = vpop.f32.mrf.mxu0
        %v3067 = vadd.f32 0.0, %v3066
        %3068 = vmatmul.f32.gmra.mxu0 %v3024
        %v3069 = vpop.f32.mrf.mxu0
        %v3070 = vadd.f32 0.0, %v3069
        %3071 = vmatmul.f32.gmra.mxu0 %v3026
        %v3072 = vpop.f32.mrf.mxu0
        %v3073 = vadd.f32 0.0, %v3072
        %3074 = vmatmul.f32.gmra.mxu0 %v3028
        %v3075 = vpop.f32.mrf.mxu0
        %v3076 = vadd.f32 0.0, %v3075
        %3077 = vdwg.mxu0
        %3078 = vmatpush.msra.mxu0 %v3018
        %3079 = vmatpush.msra.mxu0 %v3017
        %3080 = vmatpush.msra.mxu0 %v3016
        %3081 = vmatpush.msra.mxu0 %v3015
        %3082 = vmatpush.msra.mxu0 %v3014
        %3083 = vmatpush.msra.mxu0 %v3013
        %3084 = vmatpush.msra.mxu0 %v3012
        %3085 = vmatpush.msra.mxu0 %v3011
        %3086 = vmatpush.msra.mxu0 %v3010
        %3087 = vmatpush.msra.mxu0 %v3009
        %3088 = vmatpush.msra.mxu0 %v3008
        %3089 = vmatpush.msra.mxu0 %v3007
        %3090 = vmatpush.msra.mxu0 %v3006
        %3091 = vmatpush.msra.mxu0 %v3005
        %3092 = vmatpush.msra.mxu0 %v3004
        %3093 = vmatpush.msra.mxu0 %v3003
        %3094 = vmatmul.f32.gmra.mxu0 %v2994
        %v3095 = vpop.f32.mrf.mxu0
        %v3096 = vadd.f32 %v3064, %v3095
        %3097 = vmatmul.f32.gmra.mxu0 %v2996
        %v3098 = vpop.f32.mrf.mxu0
        %v3099 = vadd.f32 %v3067, %v3098
        %3100 = vmatmul.f32.gmra.mxu0 %v2998
        %v3101 = vpop.f32.mrf.mxu0
        %v3102 = vadd.f32 %v3070, %v3101
        %3103 = vmatmul.f32.gmra.mxu0 %v3000
        %v3104 = vpop.f32.mrf.mxu0
        %v3105 = vadd.f32 %v3073, %v3104
        %3106 = vmatmul.f32.gmra.mxu0 %v3002
        %v3107 = vpop.f32.mrf.mxu0
        %v3108 = vadd.f32 %v3076, %v3107
        %3109 = vdwg.mxu0
        %s3110 = scalar_lea.vmem [#allocation3], 2
        %v3111 = vld [vmem:[%s3110] ss:$2 sm:$0xff]
        %s3112 = scalar_lea.vmem [#allocation3], 18
        %v3113 = vld [vmem:[%s3112] ss:$2 sm:$0xff]
        %s3114 = scalar_lea.vmem [#allocation3], 34
        %v3115 = vld [vmem:[%s3114] ss:$2 sm:$0xff]
        %s3116 = scalar_lea.vmem [#allocation3], 50
        %v3117 = vld [vmem:[%s3116] ss:$2 sm:$0xff]
        %s3118 = scalar_lea.vmem [#allocation3], 66
        %v3119 = vld [vmem:[%s3118] ss:$2 sm:$0xff]
        %s3120 = scalar_lea.vmem %s3, 256
        %v3121 = vld [vmem:[%s3120] sm:$0xff]
        %v3122 = vld [vmem:[%s3120 + $0x8] sm:$0xff]
        %v3123 = vld [vmem:[%s3120 + $0x10] sm:$0xff]
        %v3124 = vld [vmem:[%s3120 + $0x18] sm:$0xff]
        %v3125 = vld [vmem:[%s3120 + $0x20] sm:$0xff]
        %v3126 = vld [vmem:[%s3120 + $0x28] sm:$0xff]
        %v3127 = vld [vmem:[%s3120 + $0x30] sm:$0xff]
        %v3128 = vld [vmem:[%s3120 + $0x38] sm:$0xff]
        %v3129 = vld [vmem:[%s3120 + $0x40] sm:$0xff]
        %v3130 = vld [vmem:[%s3120 + $0x48] sm:$0xff]
        %v3131 = vld [vmem:[%s3120 + $0x50] sm:$0xff]
        %v3132 = vld [vmem:[%s3120 + $0x58] sm:$0xff]
        %v3133 = vld [vmem:[%s3120 + $0x60] sm:$0xff]
        %v3134 = vld [vmem:[%s3120 + $0x68] sm:$0xff]
        %v3135 = vld [vmem:[%s3120 + $0x70] sm:$0xff]
        %v3136 = vld [vmem:[%s3120 + $0x78] sm:$0xff]
        %3137 = vmatpush.msra.mxu0 %v3136
        %3138 = vmatpush.msra.mxu0 %v3135
        %3139 = vmatpush.msra.mxu0 %v3134
        %3140 = vmatpush.msra.mxu0 %v3133
        %3141 = vmatpush.msra.mxu0 %v3132
        %3142 = vmatpush.msra.mxu0 %v3131
        %3143 = vmatpush.msra.mxu0 %v3130
        %3144 = vmatpush.msra.mxu0 %v3129
        %3145 = vmatpush.msra.mxu0 %v3128
        %3146 = vmatpush.msra.mxu0 %v3127
        %3147 = vmatpush.msra.mxu0 %v3126
        %3148 = vmatpush.msra.mxu0 %v3125
        %3149 = vmatpush.msra.mxu0 %v3124
        %3150 = vmatpush.msra.mxu0 %v3123
        %3151 = vmatpush.msra.mxu0 %v3122
        %3152 = vmatpush.msra.mxu0 %v3121
        %3153 = vmatmul.f32.gmra.mxu0 %v3111
        %v3154 = vpop.f32.mrf.mxu0
        %v3155 = vadd.f32 0.0, %v3154
        %3156 = vmatmul.f32.gmra.mxu0 %v3113
        %v3157 = vpop.f32.mrf.mxu0
        %v3158 = vadd.f32 0.0, %v3157
        %3159 = vmatmul.f32.gmra.mxu0 %v3115
        %v3160 = vpop.f32.mrf.mxu0
        %v3161 = vadd.f32 0.0, %v3160
        %3162 = vmatmul.f32.gmra.mxu0 %v3117
        %v3163 = vpop.f32.mrf.mxu0
        %v3164 = vadd.f32 0.0, %v3163
        %3165 = vmatmul.f32.gmra.mxu0 %v3119
        %v3166 = vpop.f32.mrf.mxu0
        %v3167 = vadd.f32 0.0, %v3166
        %3168 = vdwg.mxu0
        %v3169 = vadd.f32 %v3096, %v3155
        %v3170 = vadd.f32 %v3099, %v3158
        %v3171 = vadd.f32 %v3102, %v3161
        %v3172 = vadd.f32 %v3105, %v3164
        %v3173 = vadd.f32 %v3108, %v3167
        %s3174 = scalar_lea.vmem [#allocation3], 3
        %v3175 = vld [vmem:[%s3174] ss:$2 sm:$0xff]
        %s3176 = scalar_lea.vmem [#allocation3], 19
        %v3177 = vld [vmem:[%s3176] ss:$2 sm:$0xff]
        %s3178 = scalar_lea.vmem [#allocation3], 35
        %v3179 = vld [vmem:[%s3178] ss:$2 sm:$0xff]
        %s3180 = scalar_lea.vmem [#allocation3], 51
        %v3181 = vld [vmem:[%s3180] ss:$2 sm:$0xff]
        %s3182 = scalar_lea.vmem [#allocation3], 67
        %v3183 = vld [vmem:[%s3182] ss:$2 sm:$0xff]
        %s3184 = scalar_lea.vmem %s3, 384
        %v3185 = vld [vmem:[%s3184] sm:$0xff]
        %v3186 = vld [vmem:[%s3184 + $0x8] sm:$0xff]
        %v3187 = vld [vmem:[%s3184 + $0x10] sm:$0xff]
        %v3188 = vld [vmem:[%s3184 + $0x18] sm:$0xff]
        %v3189 = vld [vmem:[%s3184 + $0x20] sm:$0xff]
        %v3190 = vld [vmem:[%s3184 + $0x28] sm:$0xff]
        %v3191 = vld [vmem:[%s3184 + $0x30] sm:$0xff]
        %v3192 = vld [vmem:[%s3184 + $0x38] sm:$0xff]
        %v3193 = vld [vmem:[%s3184 + $0x40] sm:$0xff]
        %v3194 = vld [vmem:[%s3184 + $0x48] sm:$0xff]
        %v3195 = vld [vmem:[%s3184 + $0x50] sm:$0xff]
        %v3196 = vld [vmem:[%s3184 + $0x58] sm:$0xff]
        %v3197 = vld [vmem:[%s3184 + $0x60] sm:$0xff]
        %v3198 = vld [vmem:[%s3184 + $0x68] sm:$0xff]
        %v3199 = vld [vmem:[%s3184 + $0x70] sm:$0xff]
        %v3200 = vld [vmem:[%s3184 + $0x78] sm:$0xff]
        %3201 = vmatpush.msra.mxu0 %v3200
        %3202 = vmatpush.msra.mxu0 %v3199
        %3203 = vmatpush.msra.mxu0 %v3198
        %3204 = vmatpush.msra.mxu0 %v3197
        %3205 = vmatpush.msra.mxu0 %v3196
        %3206 = vmatpush.msra.mxu0 %v3195
        %3207 = vmatpush.msra.mxu0 %v3194
        %3208 = vmatpush.msra.mxu0 %v3193
        %3209 = vmatpush.msra.mxu0 %v3192
        %3210 = vmatpush.msra.mxu0 %v3191
        %3211 = vmatpush.msra.mxu0 %v3190
        %3212 = vmatpush.msra.mxu0 %v3189
        %3213 = vmatpush.msra.mxu0 %v3188
        %3214 = vmatpush.msra.mxu0 %v3187
        %3215 = vmatpush.msra.mxu0 %v3186
        %3216 = vmatpush.msra.mxu0 %v3185
        %3217 = vmatmul.f32.gmra.mxu0 %v3175
        %v3218 = vpop.f32.mrf.mxu0
        %v3219 = vadd.f32 0.0, %v3218
        %3220 = vmatmul.f32.gmra.mxu0 %v3177
        %v3221 = vpop.f32.mrf.mxu0
        %v3222 = vadd.f32 0.0, %v3221
        %3223 = vmatmul.f32.gmra.mxu0 %v3179
        %v3224 = vpop.f32.mrf.mxu0
        %v3225 = vadd.f32 0.0, %v3224
        %3226 = vmatmul.f32.gmra.mxu0 %v3181
        %v3227 = vpop.f32.mrf.mxu0
        %v3228 = vadd.f32 0.0, %v3227
        %3229 = vmatmul.f32.gmra.mxu0 %v3183
        %v3230 = vpop.f32.mrf.mxu0
        %v3231 = vadd.f32 0.0, %v3230
        %3232 = vdwg.mxu0
        %v3233 = vadd.f32 %v3169, %v3219
        %v3234 = vadd.f32 %v3170, %v3222
        %v3235 = vadd.f32 %v3171, %v3225
        %v3236 = vadd.f32 %v3172, %v3228
        %v3237 = vadd.f32 %v3173, %v3231
        %v3238 = vld [vmem:[%s6 + $0x2] sm:$0x1]
        %v3239 = vperm.slane %v3238, 0
        %v3240 = vadd.f32 %v3233, %v3239
        %v3241 = vadd.f32 %v3234, %v3239
        %v3242 = vadd.f32 %v3235, %v3239
        %v3243 = vadd.f32 %v3236, %v3239
        %v3244 = vadd.f32 %v3237, %v3239
        %v3245 = vld [vmem:[%s7 + $0x2] sm:$0x1]
        %v3246 = vld [vmem:[%s8 + $0x2] sm:$0x1]
        %3247 = vadd.xlane.f32.xlu0 %v3240
        %v3248 = vpop.xlane.xlu0 %3247
        %3249 = vadd.xlane.f32.xlu0 %v3241
        %v3250 = vpop.xlane.xlu0 %3249
        %3251 = vadd.xlane.f32.xlu0 %v3242
        %v3252 = vpop.xlane.xlu0 %3251
        %3253 = vadd.xlane.f32.xlu0 %v3243
        %v3254 = vpop.xlane.xlu0 %3253
        %3255 = vadd.xlane.f32.xlu0 %v3244
        %v3256 = vpop.xlane.xlu0 %3255
        %v3257 = vmul.f32 %v3248, %v1121
        %v3258 = vmul.f32 %v3250, %v1121
        %v3259 = vmul.f32 %v3252, %v1121
        %v3260 = vmul.f32 %v3254, %v1121
        %v3261 = vmul.f32 %v3256, %v1121
        %v3262 = vsub.f32 %v3240, %v3257
        %v3263 = vsub.f32 %v3241, %v3258
        %v3264 = vsub.f32 %v3242, %v3259
        %v3265 = vsub.f32 %v3243, %v3260
        %v3266 = vsub.f32 %v3244, %v3261
        %v3267 = vmul.f32 %v3262, %v3262
        %v3268 = vmul.f32 %v3263, %v3263
        %v3269 = vmul.f32 %v3264, %v3264
        %v3270 = vmul.f32 %v3265, %v3265
        %v3271 = vmul.f32 %v3266, %v3266
        %3272 = vadd.xlane.f32.xlu0 %v3267
        %v3273 = vpop.xlane.xlu0 %3272
        %3274 = vadd.xlane.f32.xlu0 %v3268
        %v3275 = vpop.xlane.xlu0 %3274
        %3276 = vadd.xlane.f32.xlu0 %v3269
        %v3277 = vpop.xlane.xlu0 %3276
        %3278 = vadd.xlane.f32.xlu0 %v3270
        %v3279 = vpop.xlane.xlu0 %3278
        %3280 = vadd.xlane.f32.xlu0 %v3271
        %v3281 = vpop.xlane.xlu0 %3280
        %v3282 = vmul.f32 %v3273, 0.007874016
        %v3283 = vmul.f32 %v3275, 0.007874016
        %v3284 = vmul.f32 %v3277, 0.007874016
        %v3285 = vmul.f32 %v3279, 0.007874016
        %v3286 = vmul.f32 %v3281, 0.007874016
        %v3287 = vadd.f32 %v3282, 1e-05
        %v3288 = vadd.f32 %v3283, 1e-05
        %v3289 = vadd.f32 %v3284, 1e-05
        %v3290 = vadd.f32 %v3285, 1e-05
        %v3291 = vadd.f32 %v3286, 1e-05
        %v3292 = vrsqrt.pop %v3287
        %v3293 = vmul.f32 %v3292, %v3287
        %v3294 = vmul.f32 %v3293, %v3292
        %v3295 = vmul.f32 0.5, %v3294
        %v3296 = vsub.f32 1.5, %v3295
        %v3297 = vmul.f32 %v3292, %v3296
        %vm3298 = vweird.f32 %v3287
        %vm3299 = vweird.f32 %v3292
        %vm3300 = vmor %vm3298, %vm3299
        %v3301 = vsel %vm3300, %v3292, %v3297
        %v3302 = vrsqrt.pop %v3288
        %v3303 = vmul.f32 %v3302, %v3288
        %v3304 = vmul.f32 %v3303, %v3302
        %v3305 = vmul.f32 0.5, %v3304
        %v3306 = vsub.f32 1.5, %v3305
        %v3307 = vmul.f32 %v3302, %v3306
        %vm3308 = vweird.f32 %v3288
        %vm3309 = vweird.f32 %v3302
        %vm3310 = vmor %vm3308, %vm3309
        %v3311 = vsel %vm3310, %v3302, %v3307
        %v3312 = vrsqrt.pop %v3289
        %v3313 = vmul.f32 %v3312, %v3289
        %v3314 = vmul.f32 %v3313, %v3312
        %v3315 = vmul.f32 0.5, %v3314
        %v3316 = vsub.f32 1.5, %v3315
        %v3317 = vmul.f32 %v3312, %v3316
        %vm3318 = vweird.f32 %v3289
        %vm3319 = vweird.f32 %v3312
        %vm3320 = vmor %vm3318, %vm3319
        %v3321 = vsel %vm3320, %v3312, %v3317
        %v3322 = vrsqrt.pop %v3290
        %v3323 = vmul.f32 %v3322, %v3290
        %v3324 = vmul.f32 %v3323, %v3322
        %v3325 = vmul.f32 0.5, %v3324
        %v3326 = vsub.f32 1.5, %v3325
        %v3327 = vmul.f32 %v3322, %v3326
        %vm3328 = vweird.f32 %v3290
        %vm3329 = vweird.f32 %v3322
        %vm3330 = vmor %vm3328, %vm3329
        %v3331 = vsel %vm3330, %v3322, %v3327
        %v3332 = vrsqrt.pop %v3291
        %v3333 = vmul.f32 %v3332, %v3291
        %v3334 = vmul.f32 %v3333, %v3332
        %v3335 = vmul.f32 0.5, %v3334
        %v3336 = vsub.f32 1.5, %v3335
        %v3337 = vmul.f32 %v3332, %v3336
        %vm3338 = vweird.f32 %v3291
        %vm3339 = vweird.f32 %v3332
        %vm3340 = vmor %vm3338, %vm3339
        %v3341 = vsel %vm3340, %v3332, %v3337
        %v3342 = vmul.f32 %v3262, %v3301
        %v3343 = vmul.f32 %v3263, %v3311
        %v3344 = vmul.f32 %v3264, %v3321
        %v3345 = vmul.f32 %v3265, %v3331
        %v3346 = vmul.f32 %v3266, %v3341
        %v3347 = vperm.slane %v3245, 0
        %v3348 = vmul.f32 %v3342, %v3347
        %v3349 = vmul.f32 %v3343, %v3347
        %v3350 = vmul.f32 %v3344, %v3347
        %v3351 = vmul.f32 %v3345, %v3347
        %v3352 = vmul.f32 %v3346, %v3347
        %v3353 = vperm.slane %v3246, 0
        %v3354 = vadd.f32 %v3348, %v3353
        %v3355 = vadd.f32 %v3349, %v3353
        %v3356 = vadd.f32 %v3350, %v3353
        %v3357 = vadd.f32 %v3351, %v3353
        %v3358 = vadd.f32 %v3352, %v3353
        %v3359 = vmax.f32 %v3354, 0.0
        %v3360 = vmax.f32 %v3355, 0.0
        %v3361 = vmax.f32 %v3356, 0.0
        %v3362 = vmax.f32 %v3357, 0.0
        %v3363 = vmax.f32 %v3358, 0.0
        %3364 = vst [vmem:[#allocation4] sm:$0x1] 0.0
        %3365 = vst [vmem:[#allocation4 + $0x1] sm:$0xff] %v3359
        %3366 = vst [vmem:[#allocation4 + $0x9] sm:$0xff] %v3360
        %3367 = vst [vmem:[#allocation4 + $0x11] sm:$0xff] %v3361
        %3368 = vst [vmem:[#allocation4 + $0x19] sm:$0xff] %v3362
        %3369 = vst [vmem:[#allocation4 + $0x21] sm:$0xff] %v3363
        %3370 = vst [vmem:[#allocation4 + $0x29] sm:$0x1] 0.0
        %v3371 = vld [vmem:[#allocation4] ss:$2 sm:$0xff]
        %s3372 = scalar_lea.vmem [#allocation4], 16
        %v3373 = vld [vmem:[%s3372] ss:$2 sm:$0xff]
        %s3374 = scalar_lea.vmem [#allocation4], 32
        %v3375 = vld [vmem:[%s3374] ss:$2 sm:$0xf]
        %v3376 = vld [vmem:[#allocation8] sm:$0xff]
        %v3377 = vld [vmem:[#allocation8 + $0x8] sm:$0xff]
        %v3378 = vld [vmem:[#allocation8 + $0x10] sm:$0xff]
        %v3379 = vld [vmem:[#allocation8 + $0x18] sm:$0xff]
        %v3380 = vld [vmem:[#allocation8 + $0x20] sm:$0xff]
        %v3381 = vld [vmem:[#allocation8 + $0x28] sm:$0xff]
        %v3382 = vld [vmem:[#allocation8 + $0x30] sm:$0xff]
        %v3383 = vld [vmem:[#allocation8 + $0x38] sm:$0xff]
        %v3384 = vld [vmem:[#allocation8 + $0x40] sm:$0xff]
        %v3385 = vld [vmem:[#allocation8 + $0x48] sm:$0xff]
        %v3386 = vld [vmem:[#allocation8 + $0x50] sm:$0xff]
        %v3387 = vld [vmem:[#allocation8 + $0x58] sm:$0xff]
        %v3388 = vld [vmem:[#allocation8 + $0x60] sm:$0xff]
        %v3389 = vld [vmem:[#allocation8 + $0x68] sm:$0xff]
        %v3390 = vld [vmem:[#allocation8 + $0x70] sm:$0xff]
        %v3391 = vld [vmem:[#allocation8 + $0x78] sm:$0xff]
        %s3392 = scalar_lea.vmem [#allocation4], 1
        %v3393 = vld [vmem:[%s3392] ss:$2 sm:$0xff]
        %s3394 = scalar_lea.vmem [#allocation4], 17
        %v3395 = vld [vmem:[%s3394] ss:$2 sm:$0xff]
        %s3396 = scalar_lea.vmem [#allocation4], 33
        %v3397 = vld [vmem:[%s3396] ss:$2 sm:$0xf]
        %s3398 = scalar_lea.vmem [#allocation8], 128
        %v3399 = vld [vmem:[%s3398] sm:$0xff]
        %v3400 = vld [vmem:[%s3398 + $0x8] sm:$0xff]
        %v3401 = vld [vmem:[%s3398 + $0x10] sm:$0xff]
        %v3402 = vld [vmem:[%s3398 + $0x18] sm:$0xff]
        %v3403 = vld [vmem:[%s3398 + $0x20] sm:$0xff]
        %v3404 = vld [vmem:[%s3398 + $0x28] sm:$0xff]
        %v3405 = vld [vmem:[%s3398 + $0x30] sm:$0xff]
        %v3406 = vld [vmem:[%s3398 + $0x38] sm:$0xff]
        %v3407 = vld [vmem:[%s3398 + $0x40] sm:$0xff]
        %v3408 = vld [vmem:[%s3398 + $0x48] sm:$0xff]
        %v3409 = vld [vmem:[%s3398 + $0x50] sm:$0xff]
        %v3410 = vld [vmem:[%s3398 + $0x58] sm:$0xff]
        %v3411 = vld [vmem:[%s3398 + $0x60] sm:$0xff]
        %v3412 = vld [vmem:[%s3398 + $0x68] sm:$0xff]
        %v3413 = vld [vmem:[%s3398 + $0x70] sm:$0xff]
        %v3414 = vld [vmem:[%s3398 + $0x78] sm:$0xff]
        %3415 = vmatpush.msra.mxu0 %v3414
        %3416 = vmatpush.msra.mxu0 %v3413
        %3417 = vmatpush.msra.mxu0 %v3412
        %3418 = vmatpush.msra.mxu0 %v3411
        %3419 = vmatpush.msra.mxu0 %v3410
        %3420 = vmatpush.msra.mxu0 %v3409
        %3421 = vmatpush.msra.mxu0 %v3408
        %3422 = vmatpush.msra.mxu0 %v3407
        %3423 = vmatpush.msra.mxu0 %v3406
        %3424 = vmatpush.msra.mxu0 %v3405
        %3425 = vmatpush.msra.mxu0 %v3404
        %3426 = vmatpush.msra.mxu0 %v3403
        %3427 = vmatpush.msra.mxu0 %v3402
        %3428 = vmatpush.msra.mxu0 %v3401
        %3429 = vmatpush.msra.mxu0 %v3400
        %3430 = vmatpush.msra.mxu0 %v3399
        %3431 = vmatmul.f32.gmra.mxu0 %v3393
        %v3432 = vpop.f32.mrf.mxu0
        %v3433 = vadd.f32 0.0, %v3432
        %3434 = vmatmul.f32.gmra.mxu0 %v3395
        %v3435 = vpop.f32.mrf.mxu0
        %v3436 = vadd.f32 0.0, %v3435
        %3437 = vmatmul.f32.gmra.mxu0 %v3397
        %v3438 = vpop.f32.mrf.mxu0
        %v3439 = vadd.f32 0.0, %v3438
        %3440 = vdwg.mxu0
        %3441 = vmatpush.msra.mxu0 %v3391
        %3442 = vmatpush.msra.mxu0 %v3390
        %3443 = vmatpush.msra.mxu0 %v3389
        %3444 = vmatpush.msra.mxu0 %v3388
        %3445 = vmatpush.msra.mxu0 %v3387
        %3446 = vmatpush.msra.mxu0 %v3386
        %3447 = vmatpush.msra.mxu0 %v3385
        %3448 = vmatpush.msra.mxu0 %v3384
        %3449 = vmatpush.msra.mxu0 %v3383
        %3450 = vmatpush.msra.mxu0 %v3382
        %3451 = vmatpush.msra.mxu0 %v3381
        %3452 = vmatpush.msra.mxu0 %v3380
        %3453 = vmatpush.msra.mxu0 %v3379
        %3454 = vmatpush.msra.mxu0 %v3378
        %3455 = vmatpush.msra.mxu0 %v3377
        %3456 = vmatpush.msra.mxu0 %v3376
        %3457 = vmatmul.f32.gmra.mxu0 %v3371
        %v3458 = vpop.f32.mrf.mxu0
        %v3459 = vadd.f32 %v3433, %v3458
        %3460 = vmatmul.f32.gmra.mxu0 %v3373
        %v3461 = vpop.f32.mrf.mxu0
        %v3462 = vadd.f32 %v3436, %v3461
        %3463 = vmatmul.f32.gmra.mxu0 %v3375
        %v3464 = vpop.f32.mrf.mxu0
        %v3465 = vadd.f32 %v3439, %v3464
        %3466 = vdwg.mxu0
        %s3467 = scalar_lea.vmem [#allocation4], 2
        %v3468 = vld [vmem:[%s3467] ss:$2 sm:$0xff]
        %s3469 = scalar_lea.vmem [#allocation4], 18
        %v3470 = vld [vmem:[%s3469] ss:$2 sm:$0xff]
        %s3471 = scalar_lea.vmem [#allocation4], 34
        %v3472 = vld [vmem:[%s3471] ss:$2 sm:$0xf]
        %s3473 = scalar_lea.vmem [#allocation8], 256
        %v3474 = vld [vmem:[%s3473] sm:$0xff]
        %v3475 = vld [vmem:[%s3473 + $0x8] sm:$0xff]
        %v3476 = vld [vmem:[%s3473 + $0x10] sm:$0xff]
        %v3477 = vld [vmem:[%s3473 + $0x18] sm:$0xff]
        %v3478 = vld [vmem:[%s3473 + $0x20] sm:$0xff]
        %v3479 = vld [vmem:[%s3473 + $0x28] sm:$0xff]
        %v3480 = vld [vmem:[%s3473 + $0x30] sm:$0xff]
        %v3481 = vld [vmem:[%s3473 + $0x38] sm:$0xff]
        %v3482 = vld [vmem:[%s3473 + $0x40] sm:$0xff]
        %v3483 = vld [vmem:[%s3473 + $0x48] sm:$0xff]
        %v3484 = vld [vmem:[%s3473 + $0x50] sm:$0xff]
        %v3485 = vld [vmem:[%s3473 + $0x58] sm:$0xff]
        %v3486 = vld [vmem:[%s3473 + $0x60] sm:$0xff]
        %v3487 = vld [vmem:[%s3473 + $0x68] sm:$0xff]
        %v3488 = vld [vmem:[%s3473 + $0x70] sm:$0xff]
        %v3489 = vld [vmem:[%s3473 + $0x78] sm:$0xff]
        %3490 = vmatpush.msra.mxu0 %v3489
        %3491 = vmatpush.msra.mxu0 %v3488
        %3492 = vmatpush.msra.mxu0 %v3487
        %3493 = vmatpush.msra.mxu0 %v3486
        %3494 = vmatpush.msra.mxu0 %v3485
        %3495 = vmatpush.msra.mxu0 %v3484
        %3496 = vmatpush.msra.mxu0 %v3483
        %3497 = vmatpush.msra.mxu0 %v3482
        %3498 = vmatpush.msra.mxu0 %v3481
        %3499 = vmatpush.msra.mxu0 %v3480
        %3500 = vmatpush.msra.mxu0 %v3479
        %3501 = vmatpush.msra.mxu0 %v3478
        %3502 = vmatpush.msra.mxu0 %v3477
        %3503 = vmatpush.msra.mxu0 %v3476
        %3504 = vmatpush.msra.mxu0 %v3475
        %3505 = vmatpush.msra.mxu0 %v3474
        %3506 = vmatmul.f32.gmra.mxu0 %v3468
        %v3507 = vpop.f32.mrf.mxu0
        %v3508 = vadd.f32 0.0, %v3507
        %3509 = vmatmul.f32.gmra.mxu0 %v3470
        %v3510 = vpop.f32.mrf.mxu0
        %v3511 = vadd.f32 0.0, %v3510
        %3512 = vmatmul.f32.gmra.mxu0 %v3472
        %v3513 = vpop.f32.mrf.mxu0
        %v3514 = vadd.f32 0.0, %v3513
        %3515 = vdwg.mxu0
        %v3516 = vadd.f32 %v3459, %v3508
        %v3517 = vadd.f32 %v3462, %v3511
        %v3518 = vadd.f32 %v3465, %v3514
        %s3519 = scalar_lea.vmem [#allocation4], 3
        %v3520 = vld [vmem:[%s3519] ss:$2 sm:$0xff]
        %s3521 = scalar_lea.vmem [#allocation4], 19
        %v3522 = vld [vmem:[%s3521] ss:$2 sm:$0xff]
        %s3523 = scalar_lea.vmem [#allocation4], 35
        %v3524 = vld [vmem:[%s3523] ss:$2 sm:$0xf]
        %s3525 = scalar_lea.vmem [#allocation8], 384
        %v3526 = vld [vmem:[%s3525] sm:$0xff]
        %v3527 = vld [vmem:[%s3525 + $0x8] sm:$0xff]
        %v3528 = vld [vmem:[%s3525 + $0x10] sm:$0xff]
        %v3529 = vld [vmem:[%s3525 + $0x18] sm:$0xff]
        %v3530 = vld [vmem:[%s3525 + $0x20] sm:$0xff]
        %v3531 = vld [vmem:[%s3525 + $0x28] sm:$0xff]
        %v3532 = vld [vmem:[%s3525 + $0x30] sm:$0xff]
        %v3533 = vld [vmem:[%s3525 + $0x38] sm:$0xff]
        %v3534 = vld [vmem:[%s3525 + $0x40] sm:$0xff]
        %v3535 = vld [vmem:[%s3525 + $0x48] sm:$0xff]
        %v3536 = vld [vmem:[%s3525 + $0x50] sm:$0xff]
        %v3537 = vld [vmem:[%s3525 + $0x58] sm:$0xff]
        %v3538 = vld [vmem:[%s3525 + $0x60] sm:$0xff]
        %v3539 = vld [vmem:[%s3525 + $0x68] sm:$0xff]
        %v3540 = vld [vmem:[%s3525 + $0x70] sm:$0xff]
        %v3541 = vld [vmem:[%s3525 + $0x78] sm:$0xff]
        %3542 = vmatpush.msra.mxu0 %v3541
        %3543 = vmatpush.msra.mxu0 %v3540
        %3544 = vmatpush.msra.mxu0 %v3539
        %3545 = vmatpush.msra.mxu0 %v3538
        %3546 = vmatpush.msra.mxu0 %v3537
        %3547 = vmatpush.msra.mxu0 %v3536
        %3548 = vmatpush.msra.mxu0 %v3535
        %3549 = vmatpush.msra.mxu0 %v3534
        %3550 = vmatpush.msra.mxu0 %v3533
        %3551 = vmatpush.msra.mxu0 %v3532
        %3552 = vmatpush.msra.mxu0 %v3531
        %3553 = vmatpush.msra.mxu0 %v3530
        %3554 = vmatpush.msra.mxu0 %v3529
        %3555 = vmatpush.msra.mxu0 %v3528
        %3556 = vmatpush.msra.mxu0 %v3527
        %3557 = vmatpush.msra.mxu0 %v3526
        %3558 = vmatmul.f32.gmra.mxu0 %v3520
        %v3559 = vpop.f32.mrf.mxu0
        %v3560 = vadd.f32 0.0, %v3559
        %3561 = vmatmul.f32.gmra.mxu0 %v3522
        %v3562 = vpop.f32.mrf.mxu0
        %v3563 = vadd.f32 0.0, %v3562
        %3564 = vmatmul.f32.gmra.mxu0 %v3524
        %v3565 = vpop.f32.mrf.mxu0
        %v3566 = vadd.f32 0.0, %v3565
        %3567 = vdwg.mxu0
        %v3568 = vadd.f32 %v3516, %v3560
        %v3569 = vadd.f32 %v3517, %v3563
        %v3570 = vadd.f32 %v3518, %v3566
        %v3571 = vld [vmem:[%s6 + $0x3] sm:$0x1]
        %v3572 = vperm.slane %v3571, 0
        %v3573 = vadd.f32 %v3568, %v3572
        %v3574 = vadd.f32 %v3569, %v3572
        %v3575 = vadd.f32 %v3570, %v3572
        %v3576 = vld [vmem:[%s7 + $0x3] sm:$0x1]
        %v3577 = vld [vmem:[%s8 + $0x3] sm:$0x1]
        %3578 = vadd.xlane.f32.xlu0 %v3573
        %v3579 = vpop.xlane.xlu0 %3578
        %3580 = vadd.xlane.f32.xlu0 %v3574
        %v3581 = vpop.xlane.xlu0 %3580
        %vm3582 = vcmask 1043456
        %v3583 = vsel %vm3582, %v3575, 0.0
        %3584 = vadd.xlane.f32.xlu0 %v3583
        %v3585 = vpop.xlane.xlu0 %3584
        %v3586 = vmul.f32 %v3579, %v1121
        %v3587 = vmul.f32 %v3581, %v1121
        %v3588 = vmul.f32 %v3585, %v1121
        %v3589 = vsub.f32 %v3573, %v3586
        %v3590 = vsub.f32 %v3574, %v3587
        %v3591 = vsub.f32 %v3575, %v3588
        %v3592 = vmul.f32 %v3589, %v3589
        %v3593 = vmul.f32 %v3590, %v3590
        %v3594 = vmul.f32 %v3591, %v3591
        %3595 = vadd.xlane.f32.xlu0 %v3592
        %v3596 = vpop.xlane.xlu0 %3595
        %3597 = vadd.xlane.f32.xlu0 %v3593
        %v3598 = vpop.xlane.xlu0 %3597
        %v3599 = vsel %vm3582, %v3594, 0.0
        %3600 = vadd.xlane.f32.xlu0 %v3599
        %v3601 = vpop.xlane.xlu0 %3600
        %v3602 = vmul.f32 %v3596, 0.007874016
        %v3603 = vmul.f32 %v3598, 0.007874016
        %v3604 = vmul.f32 %v3601, 0.007874016
        %v3605 = vadd.f32 %v3602, 1e-05
        %v3606 = vadd.f32 %v3603, 1e-05
        %v3607 = vadd.f32 %v3604, 1e-05
        %v3608 = vrsqrt.pop %v3605
        %v3609 = vmul.f32 %v3608, %v3605
        %v3610 = vmul.f32 %v3609, %v3608
        %v3611 = vmul.f32 0.5, %v3610
        %v3612 = vsub.f32 1.5, %v3611
        %v3613 = vmul.f32 %v3608, %v3612
        %vm3614 = vweird.f32 %v3605
        %vm3615 = vweird.f32 %v3608
        %vm3616 = vmor %vm3614, %vm3615
        %v3617 = vsel %vm3616, %v3608, %v3613
        %v3618 = vrsqrt.pop %v3606
        %v3619 = vmul.f32 %v3618, %v3606
        %v3620 = vmul.f32 %v3619, %v3618
        %v3621 = vmul.f32 0.5, %v3620
        %v3622 = vsub.f32 1.5, %v3621
        %v3623 = vmul.f32 %v3618, %v3622
        %vm3624 = vweird.f32 %v3606
        %vm3625 = vweird.f32 %v3618
        %vm3626 = vmor %vm3624, %vm3625
        %v3627 = vsel %vm3626, %v3618, %v3623
        %v3628 = vrsqrt.pop %v3607
        %v3629 = vmul.f32 %v3628, %v3607
        %v3630 = vmul.f32 %v3629, %v3628
        %v3631 = vmul.f32 0.5, %v3630
        %v3632 = vsub.f32 1.5, %v3631
        %v3633 = vmul.f32 %v3628, %v3632
        %vm3634 = vweird.f32 %v3607
        %vm3635 = vweird.f32 %v3628
        %vm3636 = vmor %vm3634, %vm3635
        %v3637 = vsel %vm3636, %v3628, %v3633
        %v3638 = vmul.f32 %v3589, %v3617
        %v3639 = vmul.f32 %v3590, %v3627
        %v3640 = vmul.f32 %v3591, %v3637
        %v3641 = vperm.slane %v3576, 0
        %v3642 = vmul.f32 %v3638, %v3641
        %v3643 = vmul.f32 %v3639, %v3641
        %v3644 = vmul.f32 %v3640, %v3641
        %v3645 = vperm.slane %v3577, 0
        %v3646 = vadd.f32 %v3642, %v3645
        %v3647 = vadd.f32 %v3643, %v3645
        %v3648 = vadd.f32 %v3644, %v3645
        %v3649 = vmax.f32 %v3646, 0.0
        %v3650 = vmax.f32 %v3647, 0.0
        %v3651 = vmax.f32 %v3648, 0.0
        %3652 = vst [vmem:[#allocation5] sm:$0x1] 0.0
        %3653 = vst [vmem:[#allocation5 + $0x1] sm:$0xff] %v3649
        %3654 = vst [vmem:[#allocation5 + $0x9] sm:$0xff] %v3650
        %3655 = vst [vmem:[#allocation5 + $0x11] sm:$0xf] %v3651
        %3656 = vst [vmem:[#allocation5 + $0x15] sm:$0x1] 0.0
        %v3657 = vld [vmem:[#allocation5] ss:$2 sm:$0xff]
        %s3658 = scalar_lea.vmem [#allocation5], 16
        %v3659 = vld [vmem:[%s3658] ss:$2 sm:$0x3]
        %v3660 = vld [vmem:[#allocation10] sm:$0xff]
        %v3661 = vld [vmem:[#allocation10 + $0x8] sm:$0xff]
        %v3662 = vld [vmem:[#allocation10 + $0x10] sm:$0xff]
        %v3663 = vld [vmem:[#allocation10 + $0x18] sm:$0xff]
        %v3664 = vld [vmem:[#allocation10 + $0x20] sm:$0xff]
        %v3665 = vld [vmem:[#allocation10 + $0x28] sm:$0xff]
        %v3666 = vld [vmem:[#allocation10 + $0x30] sm:$0xff]
        %v3667 = vld [vmem:[#allocation10 + $0x38] sm:$0xff]
        %v3668 = vld [vmem:[#allocation10 + $0x40] sm:$0xff]
        %v3669 = vld [vmem:[#allocation10 + $0x48] sm:$0xff]
        %v3670 = vld [vmem:[#allocation10 + $0x50] sm:$0xff]
        %v3671 = vld [vmem:[#allocation10 + $0x58] sm:$0xff]
        %v3672 = vld [vmem:[#allocation10 + $0x60] sm:$0xff]
        %v3673 = vld [vmem:[#allocation10 + $0x68] sm:$0xff]
        %v3674 = vld [vmem:[#allocation10 + $0x70] sm:$0xff]
        %v3675 = vld [vmem:[#allocation10 + $0x78] sm:$0xff]
        %s3676 = scalar_lea.vmem [#allocation5], 1
        %v3677 = vld [vmem:[%s3676] ss:$2 sm:$0xff]
        %s3678 = scalar_lea.vmem [#allocation5], 17
        %v3679 = vld [vmem:[%s3678] ss:$2 sm:$0x3]
        %s3680 = scalar_lea.vmem [#allocation10], 128
        %v3681 = vld [vmem:[%s3680] sm:$0xff]
        %v3682 = vld [vmem:[%s3680 + $0x8] sm:$0xff]
        %v3683 = vld [vmem:[%s3680 + $0x10] sm:$0xff]
        %v3684 = vld [vmem:[%s3680 + $0x18] sm:$0xff]
        %v3685 = vld [vmem:[%s3680 + $0x20] sm:$0xff]
        %v3686 = vld [vmem:[%s3680 + $0x28] sm:$0xff]
        %v3687 = vld [vmem:[%s3680 + $0x30] sm:$0xff]
        %v3688 = vld [vmem:[%s3680 + $0x38] sm:$0xff]
        %v3689 = vld [vmem:[%s3680 + $0x40] sm:$0xff]
        %v3690 = vld [vmem:[%s3680 + $0x48] sm:$0xff]
        %v3691 = vld [vmem:[%s3680 + $0x50] sm:$0xff]
        %v3692 = vld [vmem:[%s3680 + $0x58] sm:$0xff]
        %v3693 = vld [vmem:[%s3680 + $0x60] sm:$0xff]
        %v3694 = vld [vmem:[%s3680 + $0x68] sm:$0xff]
        %v3695 = vld [vmem:[%s3680 + $0x70] sm:$0xff]
        %v3696 = vld [vmem:[%s3680 + $0x78] sm:$0xff]
        %3697 = vmatpush.msra.mxu0 %v3696
        %3698 = vmatpush.msra.mxu0 %v3695
        %3699 = vmatpush.msra.mxu0 %v3694
        %3700 = vmatpush.msra.mxu0 %v3693
        %3701 = vmatpush.msra.mxu0 %v3692
        %3702 = vmatpush.msra.mxu0 %v3691
        %3703 = vmatpush.msra.mxu0 %v3690
        %3704 = vmatpush.msra.mxu0 %v3689
        %3705 = vmatpush.msra.mxu0 %v3688
        %3706 = vmatpush.msra.mxu0 %v3687
        %3707 = vmatpush.msra.mxu0 %v3686
        %3708 = vmatpush.msra.mxu0 %v3685
        %3709 = vmatpush.msra.mxu0 %v3684
        %3710 = vmatpush.msra.mxu0 %v3683
        %3711 = vmatpush.msra.mxu0 %v3682
        %3712 = vmatpush.msra.mxu0 %v3681
        %3713 = vmatmul.f32.gmra.mxu0 %v3677
        %v3714 = vpop.f32.mrf.mxu0
        %v3715 = vadd.f32 0.0, %v3714
        %3716 = vmatmul.f32.gmra.mxu0 %v3679
        %v3717 = vpop.f32.mrf.mxu0
        %v3718 = vadd.f32 0.0, %v3717
        %3719 = vdwg.mxu0
        %3720 = vmatpush.msra.mxu0 %v3675
        %3721 = vmatpush.msra.mxu0 %v3674
        %3722 = vmatpush.msra.mxu0 %v3673
        %3723 = vmatpush.msra.mxu0 %v3672
        %3724 = vmatpush.msra.mxu0 %v3671
        %3725 = vmatpush.msra.mxu0 %v3670
        %3726 = vmatpush.msra.mxu0 %v3669
        %3727 = vmatpush.msra.mxu0 %v3668
        %3728 = vmatpush.msra.mxu0 %v3667
        %3729 = vmatpush.msra.mxu0 %v3666
        %3730 = vmatpush.msra.mxu0 %v3665
        %3731 = vmatpush.msra.mxu0 %v3664
        %3732 = vmatpush.msra.mxu0 %v3663
        %3733 = vmatpush.msra.mxu0 %v3662
        %3734 = vmatpush.msra.mxu0 %v3661
        %3735 = vmatpush.msra.mxu0 %v3660
        %3736 = vmatmul.f32.gmra.mxu0 %v3657
        %v3737 = vpop.f32.mrf.mxu0
        %v3738 = vadd.f32 %v3715, %v3737
        %3739 = vmatmul.f32.gmra.mxu0 %v3659
        %v3740 = vpop.f32.mrf.mxu0
        %v3741 = vadd.f32 %v3718, %v3740
        %3742 = vdwg.mxu0
        %s3743 = scalar_lea.vmem [#allocation5], 2
        %v3744 = vld [vmem:[%s3743] ss:$2 sm:$0xff]
        %s3745 = scalar_lea.vmem [#allocation5], 18
        %v3746 = vld [vmem:[%s3745] ss:$2 sm:$0x3]
        %s3747 = scalar_lea.vmem [#allocation10], 256
        %v3748 = vld [vmem:[%s3747] sm:$0xff]
        %v3749 = vld [vmem:[%s3747 + $0x8] sm:$0xff]
        %v3750 = vld [vmem:[%s3747 + $0x10] sm:$0xff]
        %v3751 = vld [vmem:[%s3747 + $0x18] sm:$0xff]
        %v3752 = vld [vmem:[%s3747 + $0x20] sm:$0xff]
        %v3753 = vld [vmem:[%s3747 + $0x28] sm:$0xff]
        %v3754 = vld [vmem:[%s3747 + $0x30] sm:$0xff]
        %v3755 = vld [vmem:[%s3747 + $0x38] sm:$0xff]
        %v3756 = vld [vmem:[%s3747 + $0x40] sm:$0xff]
        %v3757 = vld [vmem:[%s3747 + $0x48] sm:$0xff]
        %v3758 = vld [vmem:[%s3747 + $0x50] sm:$0xff]
        %v3759 = vld [vmem:[%s3747 + $0x58] sm:$0xff]
        %v3760 = vld [vmem:[%s3747 + $0x60] sm:$0xff]
        %v3761 = vld [vmem:[%s3747 + $0x68] sm:$0xff]
        %v3762 = vld [vmem:[%s3747 + $0x70] sm:$0xff]
        %v3763 = vld [vmem:[%s3747 + $0x78] sm:$0xff]
        %3764 = vmatpush.msra.mxu0 %v3763
        %3765 = vmatpush.msra.mxu0 %v3762
        %3766 = vmatpush.msra.mxu0 %v3761
        %3767 = vmatpush.msra.mxu0 %v3760
        %3768 = vmatpush.msra.mxu0 %v3759
        %3769 = vmatpush.msra.mxu0 %v3758
        %3770 = vmatpush.msra.mxu0 %v3757
        %3771 = vmatpush.msra.mxu0 %v3756
        %3772 = vmatpush.msra.mxu0 %v3755
        %3773 = vmatpush.msra.mxu0 %v3754
        %3774 = vmatpush.msra.mxu0 %v3753
        %3775 = vmatpush.msra.mxu0 %v3752
        %3776 = vmatpush.msra.mxu0 %v3751
        %3777 = vmatpush.msra.mxu0 %v3750
        %3778 = vmatpush.msra.mxu0 %v3749
        %3779 = vmatpush.msra.mxu0 %v3748
        %3780 = vmatmul.f32.gmra.mxu0 %v3744
        %v3781 = vpop.f32.mrf.mxu0
        %v3782 = vadd.f32 0.0, %v3781
        %3783 = vmatmul.f32.gmra.mxu0 %v3746
        %v3784 = vpop.f32.mrf.mxu0
        %v3785 = vadd.f32 0.0, %v3784
        %3786 = vdwg.mxu0
        %v3787 = vadd.f32 %v3738, %v3782
        %v3788 = vadd.f32 %v3741, %v3785
        %s3789 = scalar_lea.vmem [#allocation5], 3
        %v3790 = vld [vmem:[%s3789] ss:$2 sm:$0xff]
        %s3791 = scalar_lea.vmem [#allocation5], 19
        %v3792 = vld [vmem:[%s3791] ss:$2 sm:$0x3]
        %s3793 = scalar_lea.vmem [#allocation10], 384
        %v3794 = vld [vmem:[%s3793] sm:$0xff]
        %v3795 = vld [vmem:[%s3793 + $0x8] sm:$0xff]
        %v3796 = vld [vmem:[%s3793 + $0x10] sm:$0xff]
        %v3797 = vld [vmem:[%s3793 + $0x18] sm:$0xff]
        %v3798 = vld [vmem:[%s3793 + $0x20] sm:$0xff]
        %v3799 = vld [vmem:[%s3793 + $0x28] sm:$0xff]
        %v3800 = vld [vmem:[%s3793 + $0x30] sm:$0xff]
        %v3801 = vld [vmem:[%s3793 + $0x38] sm:$0xff]
        %v3802 = vld [vmem:[%s3793 + $0x40] sm:$0xff]
        %v3803 = vld [vmem:[%s3793 + $0x48] sm:$0xff]
        %v3804 = vld [vmem:[%s3793 + $0x50] sm:$0xff]
        %v3805 = vld [vmem:[%s3793 + $0x58] sm:$0xff]
        %v3806 = vld [vmem:[%s3793 + $0x60] sm:$0xff]
        %v3807 = vld [vmem:[%s3793 + $0x68] sm:$0xff]
        %v3808 = vld [vmem:[%s3793 + $0x70] sm:$0xff]
        %v3809 = vld [vmem:[%s3793 + $0x78] sm:$0xff]
        %3810 = vmatpush.msra.mxu0 %v3809
        %3811 = vmatpush.msra.mxu0 %v3808
        %3812 = vmatpush.msra.mxu0 %v3807
        %3813 = vmatpush.msra.mxu0 %v3806
        %3814 = vmatpush.msra.mxu0 %v3805
        %3815 = vmatpush.msra.mxu0 %v3804
        %3816 = vmatpush.msra.mxu0 %v3803
        %3817 = vmatpush.msra.mxu0 %v3802
        %3818 = vmatpush.msra.mxu0 %v3801
        %3819 = vmatpush.msra.mxu0 %v3800
        %3820 = vmatpush.msra.mxu0 %v3799
        %3821 = vmatpush.msra.mxu0 %v3798
        %3822 = vmatpush.msra.mxu0 %v3797
        %3823 = vmatpush.msra.mxu0 %v3796
        %3824 = vmatpush.msra.mxu0 %v3795
        %3825 = vmatpush.msra.mxu0 %v3794
        %3826 = vmatmul.f32.gmra.mxu0 %v3790
        %v3827 = vpop.f32.mrf.mxu0
        %v3828 = vadd.f32 0.0, %v3827
        %3829 = vmatmul.f32.gmra.mxu0 %v3792
        %v3830 = vpop.f32.mrf.mxu0
        %v3831 = vadd.f32 0.0, %v3830
        %3832 = vdwg.mxu0
        %v3833 = vadd.f32 %v3787, %v3828
        %v3834 = vadd.f32 %v3788, %v3831
        %v3835 = vld [vmem:[%s6 + $0x4] sm:$0x1]
        %v3836 = vperm.slane %v3835, 0
        %v3837 = vadd.f32 %v3833, %v3836
        %v3838 = vadd.f32 %v3834, %v3836
        %v3839 = vld [vmem:[%s7 + $0x4] sm:$0x1]
        %v3840 = vld [vmem:[%s8 + $0x4] sm:$0x1]
        %3841 = vadd.xlane.f32.xlu0 %v3837
        %v3842 = vpop.xlane.xlu0 %3841
        %vm3843 = vcmask 1041408
        %v3844 = vsel %vm3843, %v3838, 0.0
        %3845 = vadd.xlane.f32.xlu0 %v3844
        %v3846 = vpop.xlane.xlu0 %3845
        %v3847 = vmul.f32 %v3842, %v1121
        %v3848 = vmul.f32 %v3846, %v1121
        %v3849 = vsub.f32 %v3837, %v3847
        %v3850 = vsub.f32 %v3838, %v3848
        %v3851 = vmul.f32 %v3849, %v3849
        %v3852 = vmul.f32 %v3850, %v3850
        %3853 = vadd.xlane.f32.xlu0 %v3851
        %v3854 = vpop.xlane.xlu0 %3853
        %v3855 = vsel %vm3843, %v3852, 0.0
        %3856 = vadd.xlane.f32.xlu0 %v3855
        %v3857 = vpop.xlane.xlu0 %3856
        %v3858 = vmul.f32 %v3854, 0.007874016
        %v3859 = vmul.f32 %v3857, 0.007874016
        %v3860 = vadd.f32 %v3858, 1e-05
        %v3861 = vadd.f32 %v3859, 1e-05
        %v3862 = vrsqrt.pop %v3860
        %v3863 = vmul.f32 %v3862, %v3860
        %v3864 = vmul.f32 %v3863, %v3862
        %v3865 = vmul.f32 0.5, %v3864
        %v3866 = vsub.f32 1.5, %v3865
        %v3867 = vmul.f32 %v3862, %v3866
        %vm3868 = vweird.f32 %v3860
        %vm3869 = vweird.f32 %v3862
        %vm3870 = vmor %vm3868, %vm3869
        %v3871 = vsel %vm3870, %v3862, %v3867
        %v3872 = vrsqrt.pop %v3861
        %v3873 = vmul.f32 %v3872, %v3861
        %v3874 = vmul.f32 %v3873, %v3872
        %v3875 = vmul.f32 0.5, %v3874
        %v3876 = vsub.f32 1.5, %v3875
        %v3877 = vmul.f32 %v3872, %v3876
        %vm3878 = vweird.f32 %v3861
        %vm3879 = vweird.f32 %v3872
        %vm3880 = vmor %vm3878, %vm3879
        %v3881 = vsel %vm3880, %v3872, %v3877
        %v3882 = vmul.f32 %v3849, %v3871
        %v3883 = vmul.f32 %v3850, %v3881
        %v3884 = vperm.slane %v3839, 0
        %v3885 = vmul.f32 %v3882, %v3884
        %v3886 = vmul.f32 %v3883, %v3884
        %v3887 = vperm.slane %v3840, 0
        %v3888 = vadd.f32 %v3885, %v3887
        %v3889 = vadd.f32 %v3886, %v3887
        %v3890 = vmax.f32 %v3888, 0.0
        %v3891 = vmax.f32 %v3889, 0.0
        %3892 = vst [vmem:[%s382] sm:$0xff] %v3890
        %3893 = vst [vmem:[%s382 + $0x8] sm:$0x3] %v3891
        %p3894 = scmp.lt.s32.totalorder %s22, 1
        %s3895 = scalar_select %p3894, %s22, 1
        %s3896 = smul.addr %s3895, 2
        %s3897 = smul.addr %s3896, 8
        %s3898 = scalar_lea.vmem %s9, %s3897
        // Predicated region
        $region69: #{tpu_custom_call.1} parent=55 // pred_check
          %p3899 = pneg %p234
        $region70: #{tpu_custom_call.1} parent=55 // pred_check_branch
          %3901 = sbr.rel (%p3899) target = $region72
        $region71: #{tpu_custom_call.1} parent=55 // pred_region
          _
        $region72: #{tpu_custom_call.1} parent=55 // pred_fallthru
          _
      $region56: #{tpu_custom_call.1} parent=5 // pred_fallthru
        _
      %p3902 = scmp.le.s32.totalorder 2, %s17
      // Predicated region
      $region73: #{tpu_custom_call.1} parent=5 // pred_check
        %p3903 = pneg %p3902
      $region74: #{tpu_custom_call.1} parent=5 // pred_check_branch
        %3905 = sbr.rel (%p3903) target = $region76
      $region75: #{tpu_custom_call.1} parent=5 // pred_region
        %s3906 = ssub.s32 %s17, 2
        // Predicated region
        $region77: #{tpu_custom_call.1} parent=75 // pred_check
          %p3907 = pneg %p240
        $region78: #{tpu_custom_call.1} parent=75 // pred_check_branch
          %3909 = sbr.rel (%p3907) target = $region80
        $region79: #{tpu_custom_call.1} parent=75 // pred_region
          %p3910 = scmp.lt.s32.totalorder %s23, 1
          %s3911 = scalar_select %p3910, %s23, 1
          %s3912 = smul.addr %s3911, 2
          %s3913 = smul.addr %s3912, 8
          %s3914 = scalar_lea.vmem %s9, %s3913
        $region80: #{tpu_custom_call.1} parent=75 // pred_fallthru
          _
      $region76: #{tpu_custom_call.1} parent=5 // pred_fallthru
        _
    $region6: #{tpu_custom_call.1} parent=1 // loop_footer
      %s21 = sadd.s32 1, %s17
    $region7: #{tpu_custom_call.1} parent=1 // loop_footer_branch
      %16 = sbr.rel target = $region3
    $region8: #{tpu_custom_call.1} parent=1 // loop_exit
      _
    %3915 = vsyncpa [#allocation7], 1
    %s3916 = scalar_lea.sflag [#allocation7], 1
    %3917 = vsyncpa %s3916, 1
    %3918 = vsyncpa [#allocation9], 1

</llo_original>
